<compile_context>
chip_gen: v7x
topology: tpu7x:2x2x1
jax: 0.10.0
libtpu: 0.0.40
codegen_flags: <defaults>
</compile_context>

<pallas_src>
from functools import lru_cache, partial

import jax
import jax.numpy as jnp
import numpy as np
from jax.experimental import pallas as pl
from jax.experimental.pallas import tpu as pltpu


# Layout constants (sublane index = 28*h + w for the input slab).
_N1 = 28 * 25 + 25 + 1    # 726: conv1 output rows (s = 28*h + w, h,w in [0,26))
_M1 = 56 * 12 + 2 * 12 + 1  # 697: pool1 pre-max rows (t = 56*i + 2*j, i,j in [0,13))
_N2 = 13 * 10 + 10 + 1    # 141: conv2 output rows (s = 13*h + w, h,w in [0,11))
_M2 = 26 * 4 + 2 * 4 + 1  # 113: pool2 pre-max rows (t = 26*i + 2*j, i,j in [0,5))


@lru_cache(maxsize=None)
def _selectors():
    """Fixed (batch-independent) 0/1 row-gather matrices, built once.

    S1[13*i + j, 56*i + 2*j] = 1   (pool1: gather 13x13 grid into dense rows)
    S2[ 5*i + j, 26*i + 2*j] = 1   (pool2: gather 5x5 grid into dense rows)
    """
    s1 = np.zeros((169, _M1), np.float32)
    for i in range(13):
        for j in range(13):
            s1[13 * i + j, 56 * i + 2 * j] = 1.0
    s2 = np.zeros((25, _M2), np.float32)
    for i in range(5):
        for j in range(5):
            s2[5 * i + j, 26 * i + 2 * j] = 1.0
    return jnp.asarray(s1), jnp.asarray(s2)


def net_kernel(x_ref, s1_ref, s2_ref, w1_ref, b1_ref, w2_ref, b2_ref,
               wfc1_ref, bfc1_ref, wfc2_ref, bfc2_ref, out_ref):
    f32 = jnp.float32
    x = x_ref[...]                                  # (784, tb): row 28*h + w

    # ---- conv1 (1->1, k3, 'valid'): 9 sublane-offset multiply-adds.
    # Output row s = 28*h + w (h,w in [0,26)); rows with w in {26,27} are
    # garbage but are never selected by the pool gather below.
    w1 = [[w1_ref[di, dj] for dj in range(3)] for di in range(3)]
    c1 = w1[0][0] * x[0:_N1, :]
    for di in range(3):
        for dj in range(3):
            if di == 0 and dj == 0:
                continue
            off = 28 * di + dj
            c1 = c1 + w1[di][dj] * x[off:off + _N1, :]
    c1 = c1 + b1_ref[0]

    # ---- maxpool 2x2/2: 4-way shifted max (VPU) + fixed row-gather (MXU) + ReLU.
    m1 = jnp.maximum(jnp.maximum(c1[0:_M1, :], c1[1:_M1 + 1, :]),
                     jnp.maximum(c1[28:_M1 + 28, :], c1[29:_M1 + 29, :]))
    a1 = jnp.maximum(jnp.dot(s1_ref[...], m1, preferred_element_type=f32),
                     0.0)                           # (169, tb): row 13*i + j

    # ---- conv2 (conv2_drop / Dropout2d is identity in eval mode).
    w2 = [[w2_ref[di, dj] for dj in range(3)] for di in range(3)]
    c2 = w2[0][0] * a1[0:_N2, :]
    for di in range(3):
        for dj in range(3):
            if di == 0 and dj == 0:
                continue
            off = 13 * di + dj
            c2 = c2 + w2[di][dj] * a1[off:off + _N2, :]
    c2 = c2 + b2_ref[0]

    m2 = jnp.maximum(jnp.maximum(c2[0:_M2, :], c2[1:_M2 + 1, :]),
                     jnp.maximum(c2[13:_M2 + 13, :], c2[14:_M2 + 14, :]))
    a2 = jnp.maximum(jnp.dot(s2_ref[...], m2, preferred_element_type=f32),
                     0.0)                           # (25, tb): row 5*i + j (= view(-1,25) order)

    # ---- fc1: single (5,25)@(25,tb) matmul (lane-dense N=tb) + ReLU.
    y = jnp.maximum(jnp.dot(wfc1_ref[...], a2, preferred_element_type=f32)
                    + bfc1_ref[...], 0.0)           # (5, tb)
    # TODO(synk): F.dropout / Dropout2d are eval-mode identities (no RNG masking).

    # ---- fc2 + log_softmax over the class (sublane) axis.
    z = jnp.dot(wfc2_ref[...], y, preferred_element_type=f32) + bfc2_ref[...]  # (10, tb)
    m = jnp.max(z, axis=0, keepdims=True)
    lse = jnp.log(jnp.sum(jnp.exp(z - m), axis=0, keepdims=True)) + m
    out_ref[...] = z - lse


@partial(jax.jit, static_argnames=("tb",))
def _net_forward_impl(x_nchw, s1, s2, w1, b1, w2, b2,
                      wfc1, bfc1, wfc2, bfc2, tb):
    f32 = jnp.float32
    B = x_nchw.shape[0]
    bp = ((B + tb - 1) // tb) * tb                  # pad batch to tile multiple

    # Batch-on-lanes input slab: (784 sublanes, bp lanes), row index = 28*h + w.
    xt = x_nchw.reshape(B, 784).astype(f32).T
    xf = jnp.pad(xt, ((0, 0), (0, bp - B)))

    w1_2d = w1.reshape(3, 3).astype(f32)
    w2_2d = w2.reshape(3, 3).astype(f32)
    b1_1 = b1.reshape(1).astype(f32)
    b2_1 = b2.reshape(1).astype(f32)
    wfc1_f = wfc1.astype(f32)                       # (5, 25)
    bfc1_c = bfc1.reshape(5, 1).astype(f32)
    wfc2_f = wfc2.astype(f32)                       # (10, 5)
    bfc2_c = bfc2.reshape(10, 1).astype(f32)

    smem = pl.BlockSpec(memory_space=pltpu.MemorySpace.SMEM)

    def full2d(shape):
        return pl.BlockSpec(shape, lambda i: (0, 0))

    out = pl.pallas_call(
        net_kernel,
        out_shape=jax.ShapeDtypeStruct((10, bp), f32),
        grid=(bp // tb,),
        in_specs=[
            pl.BlockSpec((784, tb), lambda i: (0, i)),   # x: batch on lanes
            full2d(s1.shape),                            # pool1 gather (169, 697)
            full2d(s2.shape),                            # pool2 gather (25, 113)
            smem,                                        # conv1 weight (3,3)
            smem,                                        # conv1 bias (1,)
            smem,                                        # conv2 weight (3,3)
            smem,                                        # conv2 bias (1,)
            full2d((5, 25)),                             # fc1 weight
            full2d((5, 1)),                              # fc1 bias (column)
            full2d((10, 5)),                             # fc2 weight
            full2d((10, 1)),                             # fc2 bias (column)
        ],
        out_specs=pl.BlockSpec((10, tb), lambda i: (0, i)),
        compiler_params=pltpu.CompilerParams(
            dimension_semantics=("parallel",)),
    )(xf, s1, s2, w1_2d, b1_1, w2_2d, b2_1, wfc1_f, bfc1_c, wfc2_f, bfc2_c)

    return out[:, :B].T                              # (B, 10) log-probs


def net_forward(x_nchw, params, tb=256):
    """x_nchw: (B, 1, 28, 28) float32. Returns (B, 10) log-probs."""
    B = x_nchw.shape[0]
    assert x_nchw.shape[1:] == (1, 28, 28), "Net requires (B,1,28,28) input"
    tb = max(128, (tb // 128) * 128)                 # lane-dense batch tile
    tb = min(tb, ((B + 127) // 128) * 128)           # don't over-pad tiny batches
    s1, s2 = _selectors()
    return _net_forward_impl(x_nchw, s1, s2, *params, tb=tb)


def ref_forward(x_nchw, params):
    """Pure-JAX reference (eval mode) for correctness check."""
    w1, b1, w2, b2, wfc1, bfc1, wfc2, bfc2 = params
    dn = ('NCHW', 'OIHW', 'NCHW')
    y = jax.lax.conv_general_dilated(x_nchw, w1, (1, 1), 'VALID',
                                     dimension_numbers=dn) + b1.reshape(1, 1, 1, 1)
    y = jax.lax.reduce_window(y, -jnp.inf, jax.lax.max,
                              (1, 1, 2, 2), (1, 1, 2, 2), 'VALID')
    y = jnp.maximum(y, 0.0)
    y = jax.lax.conv_general_dilated(y, w2, (1, 1), 'VALID',
                                     dimension_numbers=dn) + b2.reshape(1, 1, 1, 1)
    y = jax.lax.reduce_window(y, -jnp.inf, jax.lax.max,
                              (1, 1, 2, 2), (1, 1, 2, 2), 'VALID')
    y = jnp.maximum(y, 0.0)
    y = y.reshape(-1, 25)
    y = jnp.maximum(y @ wfc1.T + bfc1, 0.0)
    y = y @ wfc2.T + bfc2
    return jax.nn.log_softmax(y, axis=1)


def make_params(key):
    ks = jax.random.split(key, 8)
    w1 = 0.3 * jax.random.normal(ks[0], (1, 1, 3, 3), jnp.float32)
    b1 = 0.1 * jax.random.normal(ks[1], (1,), jnp.float32)
    w2 = 0.3 * jax.random.normal(ks[2], (1, 1, 3, 3), jnp.float32)
    b2 = 0.1 * jax.random.normal(ks[3], (1,), jnp.float32)
    wfc1 = 0.2 * jax.random.normal(ks[4], (5, 25), jnp.float32)
    bfc1 = 0.1 * jax.random.normal(ks[5], (5,), jnp.float32)
    wfc2 = 0.2 * jax.random.normal(ks[6], (10, 5), jnp.float32)
    bfc2 = 0.1 * jax.random.normal(ks[7], (10,), jnp.float32)
    return (w1, b1, w2, b2, wfc1, bfc1, wfc2, bfc2)


if __name__ == "__main__":
    key = jax.random.PRNGKey(0)
    kx, kp, kx2 = jax.random.split(key, 3)
    params = make_params(kp)

    # Small-shape check (B=2): single grid step, single (padded) batch tile.
    x = jax.random.normal(kx, (2, 1, 28, 28), jnp.float32)
    out = jax.block_until_ready(net_forward(x, params))
    ref = jax.block_until_ready(ref_forward(x, params))
    assert out.shape == (2, 10)
    assert jnp.allclose(out, ref, atol=1e-3, rtol=1e-3), (out, ref)

    # Multi-tile check (B=130 > tb=128): two grid steps + batch-padding path.
    xb = jax.random.normal(kx2, (130, 1, 28, 28), jnp.float32)
    outb = jax.block_until_ready(net_forward(xb, params, tb=128))
    refb = jax.block_until_ready(ref_forward(xb, params))
    assert outb.shape == (130, 10)
    assert jnp.allclose(outb, refb, atol=1e-3, rtol=1e-3)

    print("KERNEL_OK")
</pallas_src>

<mosaic_0001>
module attributes {stable_mosaic.version = 11 : i64} {
  func.func @net_kernel(%arg0: i32, %arg1: memref<784x128xf32, #tpu.memory_space<vmem>>, %arg2: memref<169x697xf32, #tpu.memory_space<vmem>>, %arg3: memref<25x113xf32, #tpu.memory_space<vmem>>, %arg4: memref<3x3xf32, #tpu.memory_space<smem>>, %arg5: memref<1xf32, #tpu.memory_space<smem>>, %arg6: memref<3x3xf32, #tpu.memory_space<smem>>, %arg7: memref<1xf32, #tpu.memory_space<smem>>, %arg8: memref<5x25xf32, #tpu.memory_space<vmem>>, %arg9: memref<5x1xf32, #tpu.memory_space<vmem>>, %arg10: memref<10x5xf32, #tpu.memory_space<vmem>>, %arg11: memref<10x1xf32, #tpu.memory_space<vmem>>, %arg12: memref<10x128xf32, #tpu.memory_space<vmem>>) attributes {dimension_semantics = [#tpu.dimension_semantics<parallel>], iteration_bounds = array<i64: 1>, scalar_prefetch = 0 : i64, scratch_operands = 0 : i64, tpu.core_type = #tpu.core_type<tc>, window_params = [{transform_indices = @transform_0, window_bounds = array<i64: 784, 128>}, {pipeline_mode = #tpu.pipeline_mode<synchronous>, transform_indices = @transform_1, window_bounds = array<i64: 169, 697>}, {pipeline_mode = #tpu.pipeline_mode<synchronous>, transform_indices = @transform_2, window_bounds = array<i64: 25, 113>}, {transform_indices = @transform_3, window_bounds = array<i64: 3, 3>}, {transform_indices = @transform_4, window_bounds = array<i64: 1>}, {transform_indices = @transform_5, window_bounds = array<i64: 3, 3>}, {transform_indices = @transform_6, window_bounds = array<i64: 1>}, {pipeline_mode = #tpu.pipeline_mode<synchronous>, transform_indices = @transform_7, window_bounds = array<i64: 5, 25>}, {pipeline_mode = #tpu.pipeline_mode<synchronous>, transform_indices = @transform_8, window_bounds = array<i64: 5, 1>}, {pipeline_mode = #tpu.pipeline_mode<synchronous>, transform_indices = @transform_9, window_bounds = array<i64: 10, 5>}, {pipeline_mode = #tpu.pipeline_mode<synchronous>, transform_indices = @transform_10, window_bounds = array<i64: 10, 1>}, {transform_indices = @transform_11, window_bounds = array<i64: 10, 128>}]} {
    %c0 = arith.constant 0 : index
    %c0_0 = arith.constant 0 : index
    %0 = vector.load %arg1[%c0, %c0_0] : memref<784x128xf32, #tpu.memory_space<vmem>>, vector<784x128xf32>
    %c0_1 = arith.constant 0 : index
    %c0_2 = arith.constant 0 : index
    %1 = memref.load %arg4[%c0_1, %c0_2] : memref<3x3xf32, #tpu.memory_space<smem>>
    %c0_3 = arith.constant 0 : index
    %c1 = arith.constant 1 : index
    %2 = memref.load %arg4[%c0_3, %c1] : memref<3x3xf32, #tpu.memory_space<smem>>
    %c0_4 = arith.constant 0 : index
    %c2 = arith.constant 2 : index
    %3 = memref.load %arg4[%c0_4, %c2] : memref<3x3xf32, #tpu.memory_space<smem>>
    %c1_5 = arith.constant 1 : index
    %c0_6 = arith.constant 0 : index
    %4 = memref.load %arg4[%c1_5, %c0_6] : memref<3x3xf32, #tpu.memory_space<smem>>
    %c1_7 = arith.constant 1 : index
    %c1_8 = arith.constant 1 : index
    %5 = memref.load %arg4[%c1_7, %c1_8] : memref<3x3xf32, #tpu.memory_space<smem>>
    %c1_9 = arith.constant 1 : index
    %c2_10 = arith.constant 2 : index
    %6 = memref.load %arg4[%c1_9, %c2_10] : memref<3x3xf32, #tpu.memory_space<smem>>
    %c2_11 = arith.constant 2 : index
    %c0_12 = arith.constant 0 : index
    %7 = memref.load %arg4[%c2_11, %c0_12] : memref<3x3xf32, #tpu.memory_space<smem>>
    %c2_13 = arith.constant 2 : index
    %c1_14 = arith.constant 1 : index
    %8 = memref.load %arg4[%c2_13, %c1_14] : memref<3x3xf32, #tpu.memory_space<smem>>
    %c2_15 = arith.constant 2 : index
    %c2_16 = arith.constant 2 : index
    %9 = memref.load %arg4[%c2_15, %c2_16] : memref<3x3xf32, #tpu.memory_space<smem>>
    %10 = vector.extract_strided_slice %0 {offsets = [0, 0], sizes = [726, 128], strides = [1, 1]} : vector<784x128xf32> to vector<726x128xf32>
    %11 = vector.broadcast %1 : f32 to vector<726x128xf32>
    %12 = arith.mulf %11, %10 : vector<726x128xf32>
    %13 = vector.extract_strided_slice %0 {offsets = [1, 0], sizes = [726, 128], strides = [1, 1]} : vector<784x128xf32> to vector<726x128xf32>
    %14 = vector.broadcast %2 : f32 to vector<726x128xf32>
    %15 = arith.mulf %14, %13 : vector<726x128xf32>
    %16 = arith.addf %12, %15 : vector<726x128xf32>
    %17 = vector.extract_strided_slice %0 {offsets = [2, 0], sizes = [726, 128], strides = [1, 1]} : vector<784x128xf32> to vector<726x128xf32>
    %18 = vector.broadcast %3 : f32 to vector<726x128xf32>
    %19 = arith.mulf %18, %17 : vector<726x128xf32>
    %20 = arith.addf %16, %19 : vector<726x128xf32>
    %21 = vector.extract_strided_slice %0 {offsets = [28, 0], sizes = [726, 128], strides = [1, 1]} : vector<784x128xf32> to vector<726x128xf32>
    %22 = vector.broadcast %4 : f32 to vector<726x128xf32>
    %23 = arith.mulf %22, %21 : vector<726x128xf32>
    %24 = arith.addf %20, %23 : vector<726x128xf32>
    %25 = vector.extract_strided_slice %0 {offsets = [29, 0], sizes = [726, 128], strides = [1, 1]} : vector<784x128xf32> to vector<726x128xf32>
    %26 = vector.broadcast %5 : f32 to vector<726x128xf32>
    %27 = arith.mulf %26, %25 : vector<726x128xf32>
    %28 = arith.addf %24, %27 : vector<726x128xf32>
    %29 = vector.extract_strided_slice %0 {offsets = [30, 0], sizes = [726, 128], strides = [1, 1]} : vector<784x128xf32> to vector<726x128xf32>
    %30 = vector.broadcast %6 : f32 to vector<726x128xf32>
    %31 = arith.mulf %30, %29 : vector<726x128xf32>
    %32 = arith.addf %28, %31 : vector<726x128xf32>
    %33 = vector.extract_strided_slice %0 {offsets = [56, 0], sizes = [726, 128], strides = [1, 1]} : vector<784x128xf32> to vector<726x128xf32>
    %34 = vector.broadcast %7 : f32 to vector<726x128xf32>
    %35 = arith.mulf %34, %33 : vector<726x128xf32>
    %36 = arith.addf %32, %35 : vector<726x128xf32>
    %37 = vector.extract_strided_slice %0 {offsets = [57, 0], sizes = [726, 128], strides = [1, 1]} : vector<784x128xf32> to vector<726x128xf32>
    %38 = vector.broadcast %8 : f32 to vector<726x128xf32>
    %39 = arith.mulf %38, %37 : vector<726x128xf32>
    %40 = arith.addf %36, %39 : vector<726x128xf32>
    %41 = vector.extract_strided_slice %0 {offsets = [58, 0], sizes = [726, 128], strides = [1, 1]} : vector<784x128xf32> to vector<726x128xf32>
    %42 = vector.broadcast %9 : f32 to vector<726x128xf32>
    %43 = arith.mulf %42, %41 : vector<726x128xf32>
    %44 = arith.addf %40, %43 : vector<726x128xf32>
    %c0_17 = arith.constant 0 : index
    %45 = memref.load %arg5[%c0_17] : memref<1xf32, #tpu.memory_space<smem>>
    %46 = vector.broadcast %45 : f32 to vector<726x128xf32>
    %47 = arith.addf %44, %46 : vector<726x128xf32>
    %48 = vector.extract_strided_slice %47 {offsets = [0, 0], sizes = [697, 128], strides = [1, 1]} : vector<726x128xf32> to vector<697x128xf32>
    %49 = vector.extract_strided_slice %47 {offsets = [1, 0], sizes = [697, 128], strides = [1, 1]} : vector<726x128xf32> to vector<697x128xf32>
    %50 = arith.maximumf %48, %49 : vector<697x128xf32>
    %51 = vector.extract_strided_slice %47 {offsets = [28, 0], sizes = [697, 128], strides = [1, 1]} : vector<726x128xf32> to vector<697x128xf32>
    %52 = vector.extract_strided_slice %47 {offsets = [29, 0], sizes = [697, 128], strides = [1, 1]} : vector<726x128xf32> to vector<697x128xf32>
    %53 = arith.maximumf %51, %52 : vector<697x128xf32>
    %54 = arith.maximumf %50, %53 : vector<697x128xf32>
    %c0_18 = arith.constant 0 : index
    %c0_19 = arith.constant 0 : index
    %55 = vector.load %arg2[%c0_18, %c0_19] : memref<169x697xf32, #tpu.memory_space<vmem>>, vector<169x697xf32>
    %cst = arith.constant dense<0.000000e+00> : vector<169x128xf32>
    %56 = tpu.matmul %55, %54, %cst {dimension_numbers = #tpu.dot_dimension_numbers<[1], [0], [0], [1], [0, 0, 1, 1], [], []>} : vector<169x697xf32>, vector<697x128xf32>, vector<169x128xf32> -> vector<169x128xf32>
    %cst_20 = arith.constant 0.000000e+00 : f32
    %57 = vector.broadcast %cst_20 : f32 to vector<169x128xf32>
    %58 = arith.maximumf %56, %57 : vector<169x128xf32>
    %c0_21 = arith.constant 0 : index
    %c0_22 = arith.constant 0 : index
    %59 = memref.load %arg6[%c0_21, %c0_22] : memref<3x3xf32, #tpu.memory_space<smem>>
    %c0_23 = arith.constant 0 : index
    %c1_24 = arith.constant 1 : index
    %60 = memref.load %arg6[%c0_23, %c1_24] : memref<3x3xf32, #tpu.memory_space<smem>>
    %c0_25 = arith.constant 0 : index
    %c2_26 = arith.constant 2 : index
    %61 = memref.load %arg6[%c0_25, %c2_26] : memref<3x3xf32, #tpu.memory_space<smem>>
    %c1_27 = arith.constant 1 : index
    %c0_28 = arith.constant 0 : index
    %62 = memref.load %arg6[%c1_27, %c0_28] : memref<3x3xf32, #tpu.memory_space<smem>>
    %c1_29 = arith.constant 1 : index
    %c1_30 = arith.constant 1 : index
    %63 = memref.load %arg6[%c1_29, %c1_30] : memref<3x3xf32, #tpu.memory_space<smem>>
    %c1_31 = arith.constant 1 : index
    %c2_32 = arith.constant 2 : index
    %64 = memref.load %arg6[%c1_31, %c2_32] : memref<3x3xf32, #tpu.memory_space<smem>>
    %c2_33 = arith.constant 2 : index
    %c0_34 = arith.constant 0 : index
    %65 = memref.load %arg6[%c2_33, %c0_34] : memref<3x3xf32, #tpu.memory_space<smem>>
    %c2_35 = arith.constant 2 : index
    %c1_36 = arith.constant 1 : index
    %66 = memref.load %arg6[%c2_35, %c1_36] : memref<3x3xf32, #tpu.memory_space<smem>>
    %c2_37 = arith.constant 2 : index
    %c2_38 = arith.constant 2 : index
    %67 = memref.load %arg6[%c2_37, %c2_38] : memref<3x3xf32, #tpu.memory_space<smem>>
    %68 = vector.extract_strided_slice %58 {offsets = [0, 0], sizes = [141, 128], strides = [1, 1]} : vector<169x128xf32> to vector<141x128xf32>
    %69 = vector.broadcast %59 : f32 to vector<141x128xf32>
    %70 = arith.mulf %69, %68 : vector<141x128xf32>
    %71 = vector.extract_strided_slice %58 {offsets = [1, 0], sizes = [141, 128], strides = [1, 1]} : vector<169x128xf32> to vector<141x128xf32>
    %72 = vector.broadcast %60 : f32 to vector<141x128xf32>
    %73 = arith.mulf %72, %71 : vector<141x128xf32>
    %74 = arith.addf %70, %73 : vector<141x128xf32>
    %75 = vector.extract_strided_slice %58 {offsets = [2, 0], sizes = [141, 128], strides = [1, 1]} : vector<169x128xf32> to vector<141x128xf32>
    %76 = vector.broadcast %61 : f32 to vector<141x128xf32>
    %77 = arith.mulf %76, %75 : vector<141x128xf32>
    %78 = arith.addf %74, %77 : vector<141x128xf32>
    %79 = vector.extract_strided_slice %58 {offsets = [13, 0], sizes = [141, 128], strides = [1, 1]} : vector<169x128xf32> to vector<141x128xf32>
    %80 = vector.broadcast %62 : f32 to vector<141x128xf32>
    %81 = arith.mulf %80, %79 : vector<141x128xf32>
    %82 = arith.addf %78, %81 : vector<141x128xf32>
    %83 = vector.extract_strided_slice %58 {offsets = [14, 0], sizes = [141, 128], strides = [1, 1]} : vector<169x128xf32> to vector<141x128xf32>
    %84 = vector.broadcast %63 : f32 to vector<141x128xf32>
    %85 = arith.mulf %84, %83 : vector<141x128xf32>
    %86 = arith.addf %82, %85 : vector<141x128xf32>
    %87 = vector.extract_strided_slice %58 {offsets = [15, 0], sizes = [141, 128], strides = [1, 1]} : vector<169x128xf32> to vector<141x128xf32>
    %88 = vector.broadcast %64 : f32 to vector<141x128xf32>
    %89 = arith.mulf %88, %87 : vector<141x128xf32>
    %90 = arith.addf %86, %89 : vector<141x128xf32>
    %91 = vector.extract_strided_slice %58 {offsets = [26, 0], sizes = [141, 128], strides = [1, 1]} : vector<169x128xf32> to vector<141x128xf32>
    %92 = vector.broadcast %65 : f32 to vector<141x128xf32>
    %93 = arith.mulf %92, %91 : vector<141x128xf32>
    %94 = arith.addf %90, %93 : vector<141x128xf32>
    %95 = vector.extract_strided_slice %58 {offsets = [27, 0], sizes = [141, 128], strides = [1, 1]} : vector<169x128xf32> to vector<141x128xf32>
    %96 = vector.broadcast %66 : f32 to vector<141x128xf32>
    %97 = arith.mulf %96, %95 : vector<141x128xf32>
    %98 = arith.addf %94, %97 : vector<141x128xf32>
    %99 = vector.extract_strided_slice %58 {offsets = [28, 0], sizes = [141, 128], strides = [1, 1]} : vector<169x128xf32> to vector<141x128xf32>
    %100 = vector.broadcast %67 : f32 to vector<141x128xf32>
    %101 = arith.mulf %100, %99 : vector<141x128xf32>
    %102 = arith.addf %98, %101 : vector<141x128xf32>
    %c0_39 = arith.constant 0 : index
    %103 = memref.load %arg7[%c0_39] : memref<1xf32, #tpu.memory_space<smem>>
    %104 = vector.broadcast %103 : f32 to vector<141x128xf32>
    %105 = arith.addf %102, %104 : vector<141x128xf32>
    %106 = vector.extract_strided_slice %105 {offsets = [0, 0], sizes = [113, 128], strides = [1, 1]} : vector<141x128xf32> to vector<113x128xf32>
    %107 = vector.extract_strided_slice %105 {offsets = [1, 0], sizes = [113, 128], strides = [1, 1]} : vector<141x128xf32> to vector<113x128xf32>
    %108 = arith.maximumf %106, %107 : vector<113x128xf32>
    %109 = vector.extract_strided_slice %105 {offsets = [13, 0], sizes = [113, 128], strides = [1, 1]} : vector<141x128xf32> to vector<113x128xf32>
    %110 = vector.extract_strided_slice %105 {offsets = [14, 0], sizes = [113, 128], strides = [1, 1]} : vector<141x128xf32> to vector<113x128xf32>
    %111 = arith.maximumf %109, %110 : vector<113x128xf32>
    %112 = arith.maximumf %108, %111 : vector<113x128xf32>
    %c0_40 = arith.constant 0 : index
    %c0_41 = arith.constant 0 : index
    %113 = vector.load %arg3[%c0_40, %c0_41] : memref<25x113xf32, #tpu.memory_space<vmem>>, vector<25x113xf32>
    %cst_42 = arith.constant dense<0.000000e+00> : vector<25x128xf32>
    %114 = tpu.matmul %113, %112, %cst_42 {dimension_numbers = #tpu.dot_dimension_numbers<[1], [0], [0], [1], [0, 0, 1, 1], [], []>} : vector<25x113xf32>, vector<113x128xf32>, vector<25x128xf32> -> vector<25x128xf32>
    %cst_43 = arith.constant 0.000000e+00 : f32
    %115 = vector.broadcast %cst_43 : f32 to vector<25x128xf32>
    %116 = arith.maximumf %114, %115 : vector<25x128xf32>
    %c0_44 = arith.constant 0 : index
    %c0_45 = arith.constant 0 : index
    %117 = vector.load %arg8[%c0_44, %c0_45] : memref<5x25xf32, #tpu.memory_space<vmem>>, vector<5x25xf32>
    %cst_46 = arith.constant dense<0.000000e+00> : vector<5x128xf32>
    %118 = tpu.matmul %117, %116, %cst_46 {dimension_numbers = #tpu.dot_dimension_numbers<[1], [0], [0], [1], [0, 0, 1, 1], [], []>} : vector<5x25xf32>, vector<25x128xf32>, vector<5x128xf32> -> vector<5x128xf32>
    %c0_47 = arith.constant 0 : index
    %c0_48 = arith.constant 0 : index
    %119 = vector.load %arg9[%c0_47, %c0_48] : memref<5x1xf32, #tpu.memory_space<vmem>>, vector<5x1xf32>
    %120 = vector.broadcast %119 : vector<5x1xf32> to vector<5x128xf32>
    %121 = arith.addf %118, %120 : vector<5x128xf32>
    %cst_49 = arith.constant 0.000000e+00 : f32
    %122 = vector.broadcast %cst_49 : f32 to vector<5x128xf32>
    %123 = arith.maximumf %121, %122 : vector<5x128xf32>
    %c0_50 = arith.constant 0 : index
    %c0_51 = arith.constant 0 : index
    %124 = vector.load %arg10[%c0_50, %c0_51] : memref<10x5xf32, #tpu.memory_space<vmem>>, vector<10x5xf32>
    %cst_52 = arith.constant dense<0.000000e+00> : vector<10x128xf32>
    %125 = tpu.matmul %124, %123, %cst_52 {dimension_numbers = #tpu.dot_dimension_numbers<[1], [0], [0], [1], [0, 0, 1, 1], [], []>} : vector<10x5xf32>, vector<5x128xf32>, vector<10x128xf32> -> vector<10x128xf32>
    %c0_53 = arith.constant 0 : index
    %c0_54 = arith.constant 0 : index
    %126 = vector.load %arg11[%c0_53, %c0_54] : memref<10x1xf32, #tpu.memory_space<vmem>>, vector<10x1xf32>
    %127 = vector.broadcast %126 : vector<10x1xf32> to vector<10x128xf32>
    %128 = arith.addf %125, %127 : vector<10x128xf32>
    %cst_55 = arith.constant dense<0xFF800000> : vector<128xf32>
    %129 = vector.multi_reduction <maximumf>, %128, %cst_55 [0] : vector<10x128xf32> to vector<128xf32>
    %130 = vector.shape_cast %129 : vector<128xf32> to vector<1x128xf32>
    %131 = vector.broadcast %130 : vector<1x128xf32> to vector<10x128xf32>
    %132 = arith.subf %128, %131 : vector<10x128xf32>
    %133 = math.exp %132 : vector<10x128xf32>
    %cst_56 = arith.constant dense<0.000000e+00> : vector<128xf32>
    %134 = vector.multi_reduction <add>, %133, %cst_56 [0] : vector<10x128xf32> to vector<128xf32>
    %135 = vector.shape_cast %134 : vector<128xf32> to vector<1x128xf32>
    %136 = math.log %135 : vector<1x128xf32>
    %137 = arith.addf %136, %130 : vector<1x128xf32>
    %138 = vector.broadcast %137 : vector<1x128xf32> to vector<10x128xf32>
    %139 = arith.subf %128, %138 : vector<10x128xf32>
    %c0_57 = arith.constant 0 : index
    %c0_58 = arith.constant 0 : index
    %140 = vector.load %arg12[%c0_57, %c0_58] : memref<10x128xf32, #tpu.memory_space<vmem>>, vector<10x128xf32>
    tpu.vector_store %arg12[%c0_57, %c0_58], %139 {strides = array<i32>} : memref<10x128xf32, #tpu.memory_space<vmem>>, vector<10x128xf32>,
    return
  }
  func.func @transform_0(%arg0: i32) -> (i32, i32) {
    %c0_i32 = arith.constant 0 : i32
    %c0_i32_0 = arith.constant 0 : i32
    return %c0_i32, %arg0 : i32, i32
  }
  func.func @transform_1(%arg0: i32) -> (i32, i32) {
    %c0_i32 = arith.constant 0 : i32
    %c0_i32_0 = arith.constant 0 : i32
    %c0_i32_1 = arith.constant 0 : i32
    return %c0_i32, %c0_i32_0 : i32, i32
  }
  func.func @transform_2(%arg0: i32) -> (i32, i32) {
    %c0_i32 = arith.constant 0 : i32
    %c0_i32_0 = arith.constant 0 : i32
    %c0_i32_1 = arith.constant 0 : i32
    return %c0_i32, %c0_i32_0 : i32, i32
  }
  func.func @transform_3(%arg0: i32) -> (i32, i32) {
    %c0_i32 = arith.constant 0 : i32
    %c0_i32_0 = arith.constant 0 : i32
    %c0_i32_1 = arith.constant 0 : i32
    return %c0_i32, %c0_i32_0 : i32, i32
  }
  func.func @transform_4(%arg0: i32) -> i32 {
    %c0_i32 = arith.constant 0 : i32
    %c0_i32_0 = arith.constant 0 : i32
    return %c0_i32 : i32
  }
  func.func @transform_5(%arg0: i32) -> (i32, i32) {
    %c0_i32 = arith.constant 0 : i32
    %c0_i32_0 = arith.constant 0 : i32
    %c0_i32_1 = arith.constant 0 : i32
    return %c0_i32, %c0_i32_0 : i32, i32
  }
  func.func @transform_6(%arg0: i32) -> i32 {
    %c0_i32 = arith.constant 0 : i32
    %c0_i32_0 = arith.constant 0 : i32
    return %c0_i32 : i32
  }
  func.func @transform_7(%arg0: i32) -> (i32, i32) {
    %c0_i32 = arith.constant 0 : i32
    %c0_i32_0 = arith.constant 0 : i32
    %c0_i32_1 = arith.constant 0 : i32
    return %c0_i32, %c0_i32_0 : i32, i32
  }
  func.func @transform_8(%arg0: i32) -> (i32, i32) {
    %c0_i32 = arith.constant 0 : i32
    %c0_i32_0 = arith.constant 0 : i32
    %c0_i32_1 = arith.constant 0 : i32
    return %c0_i32, %c0_i32_0 : i32, i32
  }
  func.func @transform_9(%arg0: i32) -> (i32, i32) {
    %c0_i32 = arith.constant 0 : i32
    %c0_i32_0 = arith.constant 0 : i32
    %c0_i32_1 = arith.constant 0 : i32
    return %c0_i32, %c0_i32_0 : i32, i32
  }
  func.func @transform_10(%arg0: i32) -> (i32, i32) {
    %c0_i32 = arith.constant 0 : i32
    %c0_i32_0 = arith.constant 0 : i32
    %c0_i32_1 = arith.constant 0 : i32
    return %c0_i32, %c0_i32_0 : i32, i32
  }
  func.func @transform_11(%arg0: i32) -> (i32, i32) {
    %c0_i32 = arith.constant 0 : i32
    %c0_i32_0 = arith.constant 0 : i32
    return %c0_i32, %arg0 : i32, i32
  }
}

</mosaic_0001>

<llo_original>
// kernel: _net_forward_impl.1
$region0: #{_net_forward_impl.1}
  #allocation0 [shape = 'u32[]', space=smem, size = 0x4, offset = 0x4, fixed_abs, tag = 'smem constant byte address 0x4 - core index']
  #allocation1 [shape = 'u32[144,128]{1,0:T(1,128)}', space=vmem, size = 0x12000, scoped, tag = 'internal scratch']
  #allocation2 [shape = 'f32[1]{0:T(128)S(6)}', space=smem, size = 0x200, scoped, tag = 'scoped memory for _net_forward_impl.1']
  #allocation3 [shape = 'f32[1]{0:T(128)S(6)}', space=smem, size = 0x200, scoped, tag = 'scoped memory for _net_forward_impl.1']
  %s0 = inlined_call_operand.vmem [shape: f32[784,128], index: 0, kind: input, shape index: {}]
  %s1 = inlined_call_operand.vmem [shape: f32[169,697], index: 1, kind: input, shape index: {}]
  %s2 = inlined_call_operand.vmem [shape: f32[25,113], index: 2, kind: input, shape index: {}]
  %s3 = inlined_call_operand.vmem [shape: f32[3,3], index: 3, kind: input, shape index: {}]
  %s4 = inlined_call_operand.<no memory space> [shape: f32[1], index: 4, kind: input, shape index: {}]
  %s5 = inlined_call_operand.vmem [shape: f32[3,3], index: 5, kind: input, shape index: {}]
  %s6 = inlined_call_operand.<no memory space> [shape: f32[1], index: 6, kind: input, shape index: {}]
  %s7 = inlined_call_operand.vmem [shape: f32[5,25], index: 7, kind: input, shape index: {}]
  %s8 = inlined_call_operand.vmem [shape: f32[5,1], index: 8, kind: input, shape index: {}]
  %s9 = inlined_call_operand.vmem [shape: f32[10,5], index: 9, kind: input, shape index: {}]
  %s10 = inlined_call_operand.vmem [shape: f32[10,1], index: 10, kind: input, shape index: {}]
  %s11 = inlined_call_operand.vmem [shape: f32[10,128], index: 11, kind: output, shape index: {}]
  %s12 = sld [smem:[#allocation0]]
  $region62: #{_net_forward_impl.1} parent=0
    _
  %s14 = ssub.s32 1, %s12
  %s15 = scalar_select 0, %s14, %s12
  %16 = sst [smem:[#allocation2]] %s4
  %17 = sst [smem:[#allocation3]] %s6
  $region1: #{_net_forward_impl.1} parent=0
    #allocation4 [shape = 'u8[2048]{0}', space=smem, size = 0x800, scoped, tag = 'input window, operand 3, single buffered']
    #allocation5 [shape = 's32[1]{0}', space=sflag, size = 0x4, scoped, tag = 'scoped memory for _net_forward_impl.1']
    #allocation6 [shape = 'u8[2048]{0}', space=smem, size = 0x800, scoped, tag = 'input window, operand 5, single buffered']
    #allocation7 [shape = 's32[1]{0}', space=sflag, size = 0x4, scoped, tag = 'scoped memory for _net_forward_impl.1']
    %18 = vsyncpa [#allocation5], 0
    %19 = vsyncpa [#allocation7], 0
    // Predicated region
    $region2: #{_net_forward_impl.1} parent=1 // pred_check
      _
    $region3: #{_net_forward_impl.1} parent=1 // pred_check_branch
      %21 = sbr.rel (0) target = $region5
    $region4: #{_net_forward_impl.1} parent=1 // pred_region
      _
    $region5: #{_net_forward_impl.1} parent=1 // pred_fallthru
      _
    // Predicated region
    $region6: #{_net_forward_impl.1} parent=1 // pred_check
      _
    $region7: #{_net_forward_impl.1} parent=1 // pred_check_branch
      %23 = sbr.rel (0) target = $region9
    $region8: #{_net_forward_impl.1} parent=1 // pred_region
      _
    $region9: #{_net_forward_impl.1} parent=1 // pred_fallthru
      _
    // Predicated region
    $region10: #{_net_forward_impl.1} parent=1 // pred_check
      _
    $region11: #{_net_forward_impl.1} parent=1 // pred_check_branch
      %25 = sbr.rel (0) target = $region13
    $region12: #{_net_forward_impl.1} parent=1 // pred_region
      _
    $region13: #{_net_forward_impl.1} parent=1 // pred_fallthru
      _
    // Predicated region
    $region14: #{_net_forward_impl.1} parent=1 // pred_check
      _
    $region15: #{_net_forward_impl.1} parent=1 // pred_check_branch
      %27 = sbr.rel (0) target = $region17
    $region16: #{_net_forward_impl.1} parent=1 // pred_region
      %s29 = ssub.s32 64, 64
      %30 = vsyncadd [#allocation5], %s29
      %s32 = sshll.u32 %s3, 4
      %s33 = int_to_ptr.vmem [resolvable:$true] %s32
      %35 = dma.vmem_to_smem %s33, 64, [#allocation4], [#allocation5]
    $region17: #{_net_forward_impl.1} parent=1 // pred_fallthru
      _
    // Predicated region
    $region18: #{_net_forward_impl.1} parent=1 // pred_check
      _
    $region19: #{_net_forward_impl.1} parent=1 // pred_check_branch
      %37 = sbr.rel (0) target = $region21
    $region20: #{_net_forward_impl.1} parent=1 // pred_region
      _
    $region21: #{_net_forward_impl.1} parent=1 // pred_fallthru
      _
    // Predicated region
    $region22: #{_net_forward_impl.1} parent=1 // pred_check
      _
    $region23: #{_net_forward_impl.1} parent=1 // pred_check_branch
      %39 = sbr.rel (0) target = $region25
    $region24: #{_net_forward_impl.1} parent=1 // pred_region
      %s41 = ssub.s32 64, 64
      %42 = vsyncadd [#allocation7], %s41
      %s44 = sshll.u32 %s5, 4
      %s45 = int_to_ptr.vmem [resolvable:$true] %s44
      %47 = dma.vmem_to_smem %s45, 64, [#allocation6], [#allocation7]
    $region25: #{_net_forward_impl.1} parent=1 // pred_fallthru
      _
    // Predicated region
    $region26: #{_net_forward_impl.1} parent=1 // pred_check
      _
    $region27: #{_net_forward_impl.1} parent=1 // pred_check_branch
      %49 = sbr.rel (0) target = $region29
    $region28: #{_net_forward_impl.1} parent=1 // pred_region
      _
    $region29: #{_net_forward_impl.1} parent=1 // pred_fallthru
      _
    // Predicated region
    $region30: #{_net_forward_impl.1} parent=1 // pred_check
      _
    $region31: #{_net_forward_impl.1} parent=1 // pred_check_branch
      %51 = sbr.rel (0) target = $region33
    $region32: #{_net_forward_impl.1} parent=1 // pred_region
      _
    $region33: #{_net_forward_impl.1} parent=1 // pred_fallthru
      _
    // Predicated region
    $region34: #{_net_forward_impl.1} parent=1 // pred_check
      _
    $region35: #{_net_forward_impl.1} parent=1 // pred_check_branch
      %53 = sbr.rel (0) target = $region37
    $region36: #{_net_forward_impl.1} parent=1 // pred_region
      _
    $region37: #{_net_forward_impl.1} parent=1 // pred_fallthru
      _
    // Predicated region
    $region38: #{_net_forward_impl.1} parent=1 // pred_check
      _
    $region39: #{_net_forward_impl.1} parent=1 // pred_check_branch
      %55 = sbr.rel (0) target = $region41
    $region40: #{_net_forward_impl.1} parent=1 // pred_region
      _
    $region41: #{_net_forward_impl.1} parent=1 // pred_fallthru
      _
    // Predicated region
    $region42: #{_net_forward_impl.1} parent=1 // pred_check
      _
    $region43: #{_net_forward_impl.1} parent=1 // pred_check_branch
      %57 = sbr.rel (0) target = $region45
    $region44: #{_net_forward_impl.1} parent=1 // pred_region
      _
    $region45: #{_net_forward_impl.1} parent=1 // pred_fallthru
      _
    // Predicated region
    $region46: #{_net_forward_impl.1} parent=1 // pred_check
      _
    $region47: #{_net_forward_impl.1} parent=1 // pred_check_branch
      %59 = sbr.rel (0) target = $region49
    $region48: #{_net_forward_impl.1} parent=1 // pred_region
      %60 = dma.done [#allocation5], 64
    $region49: #{_net_forward_impl.1} parent=1 // pred_fallthru
      _
    // Predicated region
    $region50: #{_net_forward_impl.1} parent=1 // pred_check
      _
    $region51: #{_net_forward_impl.1} parent=1 // pred_check_branch
      %62 = sbr.rel (0) target = $region53
    $region52: #{_net_forward_impl.1} parent=1 // pred_region
      %63 = dma.done [#allocation7], 64
    $region53: #{_net_forward_impl.1} parent=1 // pred_fallthru
      _
    %64 = sfence
    %v65 = vld [vmem:[%s0] sm:$0xff]
    %v66 = vld [vmem:[%s0 + $0x8] sm:$0xff]
    %v67 = vld [vmem:[%s0 + $0x10] sm:$0xff]
    %v68 = vld [vmem:[%s0 + $0x18] sm:$0xff]
    %v69 = vld [vmem:[%s0 + $0x20] sm:$0xff]
    %v70 = vld [vmem:[%s0 + $0x28] sm:$0xff]
    %v71 = vld [vmem:[%s0 + $0x30] sm:$0xff]
    %v72 = vld [vmem:[%s0 + $0x38] sm:$0xff]
    %v73 = vld [vmem:[%s0 + $0x40] sm:$0xff]
    %v74 = vld [vmem:[%s0 + $0x48] sm:$0xff]
    %v75 = vld [vmem:[%s0 + $0x50] sm:$0xff]
    %v76 = vld [vmem:[%s0 + $0x58] sm:$0xff]
    %v77 = vld [vmem:[%s0 + $0x60] sm:$0xff]
    %v78 = vld [vmem:[%s0 + $0x68] sm:$0xff]
    %v79 = vld [vmem:[%s0 + $0x70] sm:$0xff]
    %v80 = vld [vmem:[%s0 + $0x78] sm:$0xff]
    %v81 = vld [vmem:[%s0 + $0x80] sm:$0xff]
    %v82 = vld [vmem:[%s0 + $0x88] sm:$0xff]
    %v83 = vld [vmem:[%s0 + $0x90] sm:$0xff]
    %v84 = vld [vmem:[%s0 + $0x98] sm:$0xff]
    %v85 = vld [vmem:[%s0 + $0xa0] sm:$0xff]
    %v86 = vld [vmem:[%s0 + $0xa8] sm:$0xff]
    %v87 = vld [vmem:[%s0 + $0xb0] sm:$0xff]
    %v88 = vld [vmem:[%s0 + $0xb8] sm:$0xff]
    %v89 = vld [vmem:[%s0 + $0xc0] sm:$0xff]
    %v90 = vld [vmem:[%s0 + $0xc8] sm:$0xff]
    %v91 = vld [vmem:[%s0 + $0xd0] sm:$0xff]
    %v92 = vld [vmem:[%s0 + $0xd8] sm:$0xff]
    %v93 = vld [vmem:[%s0 + $0xe0] sm:$0xff]
    %v94 = vld [vmem:[%s0 + $0xe8] sm:$0xff]
    %v95 = vld [vmem:[%s0 + $0xf0] sm:$0xff]
    %v96 = vld [vmem:[%s0 + $0xf8] sm:$0xff]
    %v97 = vld [vmem:[%s0 + $0x100] sm:$0xff]
    %v98 = vld [vmem:[%s0 + $0x108] sm:$0xff]
    %v99 = vld [vmem:[%s0 + $0x110] sm:$0xff]
    %v100 = vld [vmem:[%s0 + $0x118] sm:$0xff]
    %v101 = vld [vmem:[%s0 + $0x120] sm:$0xff]
    %v102 = vld [vmem:[%s0 + $0x128] sm:$0xff]
    %v103 = vld [vmem:[%s0 + $0x130] sm:$0xff]
    %v104 = vld [vmem:[%s0 + $0x138] sm:$0xff]
    %v105 = vld [vmem:[%s0 + $0x140] sm:$0xff]
    %v106 = vld [vmem:[%s0 + $0x148] sm:$0xff]
    %v107 = vld [vmem:[%s0 + $0x150] sm:$0xff]
    %v108 = vld [vmem:[%s0 + $0x158] sm:$0xff]
    %v109 = vld [vmem:[%s0 + $0x160] sm:$0xff]
    %v110 = vld [vmem:[%s0 + $0x168] sm:$0xff]
    %v111 = vld [vmem:[%s0 + $0x170] sm:$0xff]
    %v112 = vld [vmem:[%s0 + $0x178] sm:$0xff]
    %v113 = vld [vmem:[%s0 + $0x180] sm:$0xff]
    %v114 = vld [vmem:[%s0 + $0x188] sm:$0xff]
    %v115 = vld [vmem:[%s0 + $0x190] sm:$0xff]
    %v116 = vld [vmem:[%s0 + $0x198] sm:$0xff]
    %v117 = vld [vmem:[%s0 + $0x1a0] sm:$0xff]
    %v118 = vld [vmem:[%s0 + $0x1a8] sm:$0xff]
    %v119 = vld [vmem:[%s0 + $0x1b0] sm:$0xff]
    %v120 = vld [vmem:[%s0 + $0x1b8] sm:$0xff]
    %v121 = vld [vmem:[%s0 + $0x1c0] sm:$0xff]
    %v122 = vld [vmem:[%s0 + $0x1c8] sm:$0xff]
    %v123 = vld [vmem:[%s0 + $0x1d0] sm:$0xff]
    %v124 = vld [vmem:[%s0 + $0x1d8] sm:$0xff]
    %v125 = vld [vmem:[%s0 + $0x1e0] sm:$0xff]
    %v126 = vld [vmem:[%s0 + $0x1e8] sm:$0xff]
    %v127 = vld [vmem:[%s0 + $0x1f0] sm:$0xff]
    %v128 = vld [vmem:[%s0 + $0x1f8] sm:$0xff]
    %v129 = vld [vmem:[%s0 + $0x200] sm:$0xff]
    %v130 = vld [vmem:[%s0 + $0x208] sm:$0xff]
    %v131 = vld [vmem:[%s0 + $0x210] sm:$0xff]
    %v132 = vld [vmem:[%s0 + $0x218] sm:$0xff]
    %v133 = vld [vmem:[%s0 + $0x220] sm:$0xff]
    %v134 = vld [vmem:[%s0 + $0x228] sm:$0xff]
    %v135 = vld [vmem:[%s0 + $0x230] sm:$0xff]
    %v136 = vld [vmem:[%s0 + $0x238] sm:$0xff]
    %v137 = vld [vmem:[%s0 + $0x240] sm:$0xff]
    %v138 = vld [vmem:[%s0 + $0x248] sm:$0xff]
    %v139 = vld [vmem:[%s0 + $0x250] sm:$0xff]
    %v140 = vld [vmem:[%s0 + $0x258] sm:$0xff]
    %v141 = vld [vmem:[%s0 + $0x260] sm:$0xff]
    %v142 = vld [vmem:[%s0 + $0x268] sm:$0xff]
    %v143 = vld [vmem:[%s0 + $0x270] sm:$0xff]
    %v144 = vld [vmem:[%s0 + $0x278] sm:$0xff]
    %v145 = vld [vmem:[%s0 + $0x280] sm:$0xff]
    %v146 = vld [vmem:[%s0 + $0x288] sm:$0xff]
    %v147 = vld [vmem:[%s0 + $0x290] sm:$0xff]
    %v148 = vld [vmem:[%s0 + $0x298] sm:$0xff]
    %v149 = vld [vmem:[%s0 + $0x2a0] sm:$0xff]
    %v150 = vld [vmem:[%s0 + $0x2a8] sm:$0xff]
    %v151 = vld [vmem:[%s0 + $0x2b0] sm:$0xff]
    %v152 = vld [vmem:[%s0 + $0x2b8] sm:$0xff]
    %v153 = vld [vmem:[%s0 + $0x2c0] sm:$0xff]
    %v154 = vld [vmem:[%s0 + $0x2c8] sm:$0xff]
    %v155 = vld [vmem:[%s0 + $0x2d0] sm:$0xff]
    %v156 = vld [vmem:[%s0 + $0x2d8] sm:$0xff]
    %v157 = vld [vmem:[%s0 + $0x2e0] sm:$0xff]
    %v158 = vld [vmem:[%s0 + $0x2e8] sm:$0xff]
    %v159 = vld [vmem:[%s0 + $0x2f0] sm:$0xff]
    %v160 = vld [vmem:[%s0 + $0x2f8] sm:$0xff]
    %v161 = vld [vmem:[%s0 + $0x300] sm:$0xff]
    %v162 = vld [vmem:[%s0 + $0x308] sm:$0xff]
    %s163 = sld [smem:[#allocation4]]
    %s164 = sld [smem:[#allocation4 + $0x1]]
    %s165 = sld [smem:[#allocation4 + $0x2]]
    %s166 = sld [smem:[#allocation4 + $0x80]]
    %s167 = sld [smem:[#allocation4 + $0x81]]
    %s168 = sld [smem:[#allocation4 + $0x82]]
    %s169 = sld [smem:[#allocation4 + $0x100]]
    %s170 = sld [smem:[#allocation4 + $0x101]]
    %s171 = sld [smem:[#allocation4 + $0x102]]
    %v172 = vstv %s163
    %v173 = vmul.f32 %v172, %v65
    %v174 = vmul.f32 %v172, %v66
    %v175 = vmul.f32 %v172, %v67
    %v176 = vmul.f32 %v172, %v68
    %v177 = vmul.f32 %v172, %v69
    %v178 = vmul.f32 %v172, %v70
    %v179 = vmul.f32 %v172, %v71
    %v180 = vmul.f32 %v172, %v72
    %v181 = vmul.f32 %v172, %v73
    %v182 = vmul.f32 %v172, %v74
    %v183 = vmul.f32 %v172, %v75
    %v184 = vmul.f32 %v172, %v76
    %v185 = vmul.f32 %v172, %v77
    %v186 = vmul.f32 %v172, %v78
    %v187 = vmul.f32 %v172, %v79
    %v188 = vmul.f32 %v172, %v80
    %v189 = vmul.f32 %v172, %v81
    %v190 = vmul.f32 %v172, %v82
    %v191 = vmul.f32 %v172, %v83
    %v192 = vmul.f32 %v172, %v84
    %v193 = vmul.f32 %v172, %v85
    %v194 = vmul.f32 %v172, %v86
    %v195 = vmul.f32 %v172, %v87
    %v196 = vmul.f32 %v172, %v88
    %v197 = vmul.f32 %v172, %v89
    %v198 = vmul.f32 %v172, %v90
    %v199 = vmul.f32 %v172, %v91
    %v200 = vmul.f32 %v172, %v92
    %v201 = vmul.f32 %v172, %v93
    %v202 = vmul.f32 %v172, %v94
    %v203 = vmul.f32 %v172, %v95
    %v204 = vmul.f32 %v172, %v96
    %v205 = vmul.f32 %v172, %v97
    %v206 = vmul.f32 %v172, %v98
    %v207 = vmul.f32 %v172, %v99
    %v208 = vmul.f32 %v172, %v100
    %v209 = vmul.f32 %v172, %v101
    %v210 = vmul.f32 %v172, %v102
    %v211 = vmul.f32 %v172, %v103
    %v212 = vmul.f32 %v172, %v104
    %v213 = vmul.f32 %v172, %v105
    %v214 = vmul.f32 %v172, %v106
    %v215 = vmul.f32 %v172, %v107
    %v216 = vmul.f32 %v172, %v108
    %v217 = vmul.f32 %v172, %v109
    %v218 = vmul.f32 %v172, %v110
    %v219 = vmul.f32 %v172, %v111
    %v220 = vmul.f32 %v172, %v112
    %v221 = vmul.f32 %v172, %v113
    %v222 = vmul.f32 %v172, %v114
    %v223 = vmul.f32 %v172, %v115
    %v224 = vmul.f32 %v172, %v116
    %v225 = vmul.f32 %v172, %v117
    %v226 = vmul.f32 %v172, %v118
    %v227 = vmul.f32 %v172, %v119
    %v228 = vmul.f32 %v172, %v120
    %v229 = vmul.f32 %v172, %v121
    %v230 = vmul.f32 %v172, %v122
    %v231 = vmul.f32 %v172, %v123
    %v232 = vmul.f32 %v172, %v124
    %v233 = vmul.f32 %v172, %v125
    %v234 = vmul.f32 %v172, %v126
    %v235 = vmul.f32 %v172, %v127
    %v236 = vmul.f32 %v172, %v128
    %v237 = vmul.f32 %v172, %v129
    %v238 = vmul.f32 %v172, %v130
    %v239 = vmul.f32 %v172, %v131
    %v240 = vmul.f32 %v172, %v132
    %v241 = vmul.f32 %v172, %v133
    %v242 = vmul.f32 %v172, %v134
    %v243 = vmul.f32 %v172, %v135
    %v244 = vmul.f32 %v172, %v136
    %v245 = vmul.f32 %v172, %v137
    %v246 = vmul.f32 %v172, %v138
    %v247 = vmul.f32 %v172, %v139
    %v248 = vmul.f32 %v172, %v140
    %v249 = vmul.f32 %v172, %v141
    %v250 = vmul.f32 %v172, %v142
    %v251 = vmul.f32 %v172, %v143
    %v252 = vmul.f32 %v172, %v144
    %v253 = vmul.f32 %v172, %v145
    %v254 = vmul.f32 %v172, %v146
    %v255 = vmul.f32 %v172, %v147
    %v256 = vmul.f32 %v172, %v148
    %v257 = vmul.f32 %v172, %v149
    %v258 = vmul.f32 %v172, %v150
    %v259 = vmul.f32 %v172, %v151
    %v260 = vmul.f32 %v172, %v152
    %v261 = vmul.f32 %v172, %v153
    %v262 = vmul.f32 %v172, %v154
    %v263 = vmul.f32 %v172, %v155
    %v264 = vstv %s164
    %v265 = vmul.f32 %v264, %v65
    %v266 = vmul.f32 %v264, %v66
    %v267 = vmul.f32 %v264, %v67
    %v268 = vmul.f32 %v264, %v68
    %v269 = vmul.f32 %v264, %v69
    %v270 = vmul.f32 %v264, %v70
    %v271 = vmul.f32 %v264, %v71
    %v272 = vmul.f32 %v264, %v72
    %v273 = vmul.f32 %v264, %v73
    %v274 = vmul.f32 %v264, %v74
    %v275 = vmul.f32 %v264, %v75
    %v276 = vmul.f32 %v264, %v76
    %v277 = vmul.f32 %v264, %v77
    %v278 = vmul.f32 %v264, %v78
    %v279 = vmul.f32 %v264, %v79
    %v280 = vmul.f32 %v264, %v80
    %v281 = vmul.f32 %v264, %v81
    %v282 = vmul.f32 %v264, %v82
    %v283 = vmul.f32 %v264, %v83
    %v284 = vmul.f32 %v264, %v84
    %v285 = vmul.f32 %v264, %v85
    %v286 = vmul.f32 %v264, %v86
    %v287 = vmul.f32 %v264, %v87
    %v288 = vmul.f32 %v264, %v88
    %v289 = vmul.f32 %v264, %v89
    %v290 = vmul.f32 %v264, %v90
    %v291 = vmul.f32 %v264, %v91
    %v292 = vmul.f32 %v264, %v92
    %v293 = vmul.f32 %v264, %v93
    %v294 = vmul.f32 %v264, %v94
    %v295 = vmul.f32 %v264, %v95
    %v296 = vmul.f32 %v264, %v96
    %v297 = vmul.f32 %v264, %v97
    %v298 = vmul.f32 %v264, %v98
    %v299 = vmul.f32 %v264, %v99
    %v300 = vmul.f32 %v264, %v100
    %v301 = vmul.f32 %v264, %v101
    %v302 = vmul.f32 %v264, %v102
    %v303 = vmul.f32 %v264, %v103
    %v304 = vmul.f32 %v264, %v104
    %v305 = vmul.f32 %v264, %v105
    %v306 = vmul.f32 %v264, %v106
    %v307 = vmul.f32 %v264, %v107
    %v308 = vmul.f32 %v264, %v108
    %v309 = vmul.f32 %v264, %v109
    %v310 = vmul.f32 %v264, %v110
    %v311 = vmul.f32 %v264, %v111
    %v312 = vmul.f32 %v264, %v112
    %v313 = vmul.f32 %v264, %v113
    %v314 = vmul.f32 %v264, %v114
    %v315 = vmul.f32 %v264, %v115
    %v316 = vmul.f32 %v264, %v116
    %v317 = vmul.f32 %v264, %v117
    %v318 = vmul.f32 %v264, %v118
    %v319 = vmul.f32 %v264, %v119
    %v320 = vmul.f32 %v264, %v120
    %v321 = vmul.f32 %v264, %v121
    %v322 = vmul.f32 %v264, %v122
    %v323 = vmul.f32 %v264, %v123
    %v324 = vmul.f32 %v264, %v124
    %v325 = vmul.f32 %v264, %v125
    %v326 = vmul.f32 %v264, %v126
    %v327 = vmul.f32 %v264, %v127
    %v328 = vmul.f32 %v264, %v128
    %v329 = vmul.f32 %v264, %v129
    %v330 = vmul.f32 %v264, %v130
    %v331 = vmul.f32 %v264, %v131
    %v332 = vmul.f32 %v264, %v132
    %v333 = vmul.f32 %v264, %v133
    %v334 = vmul.f32 %v264, %v134
    %v335 = vmul.f32 %v264, %v135
    %v336 = vmul.f32 %v264, %v136
    %v337 = vmul.f32 %v264, %v137
    %v338 = vmul.f32 %v264, %v138
    %v339 = vmul.f32 %v264, %v139
    %v340 = vmul.f32 %v264, %v140
    %v341 = vmul.f32 %v264, %v141
    %v342 = vmul.f32 %v264, %v142
    %v343 = vmul.f32 %v264, %v143
    %v344 = vmul.f32 %v264, %v144
    %v345 = vmul.f32 %v264, %v145
    %v346 = vmul.f32 %v264, %v146
    %v347 = vmul.f32 %v264, %v147
    %v348 = vmul.f32 %v264, %v148
    %v349 = vmul.f32 %v264, %v149
    %v350 = vmul.f32 %v264, %v150
    %v351 = vmul.f32 %v264, %v151
    %v352 = vmul.f32 %v264, %v152
    %v353 = vmul.f32 %v264, %v153
    %v354 = vmul.f32 %v264, %v154
    %v355 = vmul.f32 %v264, %v155
    %vm447 = vcmask 1046528
    %v448 = vrot.slane %v265, 1
    %v449 = vrot.slane %v266, 1
    %v450 = vsel %vm447, %v448, %v449
    %v451 = vrot.slane %v267, 1
    %v452 = vsel %vm447, %v449, %v451
    %v453 = vrot.slane %v268, 1
    %v454 = vsel %vm447, %v451, %v453
    %v455 = vrot.slane %v269, 1
    %v456 = vsel %vm447, %v453, %v455
    %v457 = vrot.slane %v270, 1
    %v458 = vsel %vm447, %v455, %v457
    %v459 = vrot.slane %v271, 1
    %v460 = vsel %vm447, %v457, %v459
    %v461 = vrot.slane %v272, 1
    %v462 = vsel %vm447, %v459, %v461
    %v463 = vrot.slane %v273, 1
    %v464 = vsel %vm447, %v461, %v463
    %v465 = vrot.slane %v274, 1
    %v466 = vsel %vm447, %v463, %v465
    %v467 = vrot.slane %v275, 1
    %v468 = vsel %vm447, %v465, %v467
    %v469 = vrot.slane %v276, 1
    %v470 = vsel %vm447, %v467, %v469
    %v471 = vrot.slane %v277, 1
    %v472 = vsel %vm447, %v469, %v471
    %v473 = vrot.slane %v278, 1
    %v474 = vsel %vm447, %v471, %v473
    %v475 = vrot.slane %v279, 1
    %v476 = vsel %vm447, %v473, %v475
    %v477 = vrot.slane %v280, 1
    %v478 = vsel %vm447, %v475, %v477
    %v479 = vrot.slane %v281, 1
    %v480 = vsel %vm447, %v477, %v479
    %v481 = vrot.slane %v282, 1
    %v482 = vsel %vm447, %v479, %v481
    %v483 = vrot.slane %v283, 1
    %v484 = vsel %vm447, %v481, %v483
    %v485 = vrot.slane %v284, 1
    %v486 = vsel %vm447, %v483, %v485
    %v487 = vrot.slane %v285, 1
    %v488 = vsel %vm447, %v485, %v487
    %v489 = vrot.slane %v286, 1
    %v490 = vsel %vm447, %v487, %v489
    %v491 = vrot.slane %v287, 1
    %v492 = vsel %vm447, %v489, %v491
    %v493 = vrot.slane %v288, 1
    %v494 = vsel %vm447, %v491, %v493
    %v495 = vrot.slane %v289, 1
    %v496 = vsel %vm447, %v493, %v495
    %v497 = vrot.slane %v290, 1
    %v498 = vsel %vm447, %v495, %v497
    %v499 = vrot.slane %v291, 1
    %v500 = vsel %vm447, %v497, %v499
    %v501 = vrot.slane %v292, 1
    %v502 = vsel %vm447, %v499, %v501
    %v503 = vrot.slane %v293, 1
    %v504 = vsel %vm447, %v501, %v503
    %v505 = vrot.slane %v294, 1
    %v506 = vsel %vm447, %v503, %v505
    %v507 = vrot.slane %v295, 1
    %v508 = vsel %vm447, %v505, %v507
    %v509 = vrot.slane %v296, 1
    %v510 = vsel %vm447, %v507, %v509
    %v511 = vrot.slane %v297, 1
    %v512 = vsel %vm447, %v509, %v511
    %v513 = vrot.slane %v298, 1
    %v514 = vsel %vm447, %v511, %v513
    %v515 = vrot.slane %v299, 1
    %v516 = vsel %vm447, %v513, %v515
    %v517 = vrot.slane %v300, 1
    %v518 = vsel %vm447, %v515, %v517
    %v519 = vrot.slane %v301, 1
    %v520 = vsel %vm447, %v517, %v519
    %v521 = vrot.slane %v302, 1
    %v522 = vsel %vm447, %v519, %v521
    %v523 = vrot.slane %v303, 1
    %v524 = vsel %vm447, %v521, %v523
    %v525 = vrot.slane %v304, 1
    %v526 = vsel %vm447, %v523, %v525
    %v527 = vrot.slane %v305, 1
    %v528 = vsel %vm447, %v525, %v527
    %v529 = vrot.slane %v306, 1
    %v530 = vsel %vm447, %v527, %v529
    %v531 = vrot.slane %v307, 1
    %v532 = vsel %vm447, %v529, %v531
    %v533 = vrot.slane %v308, 1
    %v534 = vsel %vm447, %v531, %v533
    %v535 = vrot.slane %v309, 1
    %v536 = vsel %vm447, %v533, %v535
    %v537 = vrot.slane %v310, 1
    %v538 = vsel %vm447, %v535, %v537
    %v539 = vrot.slane %v311, 1
    %v540 = vsel %vm447, %v537, %v539
    %v541 = vrot.slane %v312, 1
    %v542 = vsel %vm447, %v539, %v541
    %v543 = vrot.slane %v313, 1
    %v544 = vsel %vm447, %v541, %v543
    %v545 = vrot.slane %v314, 1
    %v546 = vsel %vm447, %v543, %v545
    %v547 = vrot.slane %v315, 1
    %v548 = vsel %vm447, %v545, %v547
    %v549 = vrot.slane %v316, 1
    %v550 = vsel %vm447, %v547, %v549
    %v551 = vrot.slane %v317, 1
    %v552 = vsel %vm447, %v549, %v551
    %v553 = vrot.slane %v318, 1
    %v554 = vsel %vm447, %v551, %v553
    %v555 = vrot.slane %v319, 1
    %v556 = vsel %vm447, %v553, %v555
    %v557 = vrot.slane %v320, 1
    %v558 = vsel %vm447, %v555, %v557
    %v559 = vrot.slane %v321, 1
    %v560 = vsel %vm447, %v557, %v559
    %v561 = vrot.slane %v322, 1
    %v562 = vsel %vm447, %v559, %v561
    %v563 = vrot.slane %v323, 1
    %v564 = vsel %vm447, %v561, %v563
    %v565 = vrot.slane %v324, 1
    %v566 = vsel %vm447, %v563, %v565
    %v567 = vrot.slane %v325, 1
    %v568 = vsel %vm447, %v565, %v567
    %v569 = vrot.slane %v326, 1
    %v570 = vsel %vm447, %v567, %v569
    %v571 = vrot.slane %v327, 1
    %v572 = vsel %vm447, %v569, %v571
    %v573 = vrot.slane %v328, 1
    %v574 = vsel %vm447, %v571, %v573
    %v575 = vrot.slane %v329, 1
    %v576 = vsel %vm447, %v573, %v575
    %v577 = vrot.slane %v330, 1
    %v578 = vsel %vm447, %v575, %v577
    %v579 = vrot.slane %v331, 1
    %v580 = vsel %vm447, %v577, %v579
    %v581 = vrot.slane %v332, 1
    %v582 = vsel %vm447, %v579, %v581
    %v583 = vrot.slane %v333, 1
    %v584 = vsel %vm447, %v581, %v583
    %v585 = vrot.slane %v334, 1
    %v586 = vsel %vm447, %v583, %v585
    %v587 = vrot.slane %v335, 1
    %v588 = vsel %vm447, %v585, %v587
    %v589 = vrot.slane %v336, 1
    %v590 = vsel %vm447, %v587, %v589
    %v591 = vrot.slane %v337, 1
    %v592 = vsel %vm447, %v589, %v591
    %v593 = vrot.slane %v338, 1
    %v594 = vsel %vm447, %v591, %v593
    %v595 = vrot.slane %v339, 1
    %v596 = vsel %vm447, %v593, %v595
    %v597 = vrot.slane %v340, 1
    %v598 = vsel %vm447, %v595, %v597
    %v599 = vrot.slane %v341, 1
    %v600 = vsel %vm447, %v597, %v599
    %v601 = vrot.slane %v342, 1
    %v602 = vsel %vm447, %v599, %v601
    %v603 = vrot.slane %v343, 1
    %v604 = vsel %vm447, %v601, %v603
    %v605 = vrot.slane %v344, 1
    %v606 = vsel %vm447, %v603, %v605
    %v607 = vrot.slane %v345, 1
    %v608 = vsel %vm447, %v605, %v607
    %v609 = vrot.slane %v346, 1
    %v610 = vsel %vm447, %v607, %v609
    %v611 = vrot.slane %v347, 1
    %v612 = vsel %vm447, %v609, %v611
    %v613 = vrot.slane %v348, 1
    %v614 = vsel %vm447, %v611, %v613
    %v615 = vrot.slane %v349, 1
    %v616 = vsel %vm447, %v613, %v615
    %v617 = vrot.slane %v350, 1
    %v618 = vsel %vm447, %v615, %v617
    %v619 = vrot.slane %v351, 1
    %v620 = vsel %vm447, %v617, %v619
    %v621 = vrot.slane %v352, 1
    %v622 = vsel %vm447, %v619, %v621
    %v623 = vrot.slane %v353, 1
    %v624 = vsel %vm447, %v621, %v623
    %v625 = vrot.slane %v354, 1
    %v626 = vsel %vm447, %v623, %v625
    %v627 = vrot.slane %v355, 1
    %v628 = vsel %vm447, %v625, %v627
    %v720 = vadd.f32 %v173, %v450
    %v721 = vadd.f32 %v174, %v452
    %v722 = vadd.f32 %v175, %v454
    %v723 = vadd.f32 %v176, %v456
    %v724 = vadd.f32 %v177, %v458
    %v725 = vadd.f32 %v178, %v460
    %v726 = vadd.f32 %v179, %v462
    %v727 = vadd.f32 %v180, %v464
    %v728 = vadd.f32 %v181, %v466
    %v729 = vadd.f32 %v182, %v468
    %v730 = vadd.f32 %v183, %v470
    %v731 = vadd.f32 %v184, %v472
    %v732 = vadd.f32 %v185, %v474
    %v733 = vadd.f32 %v186, %v476
    %v734 = vadd.f32 %v187, %v478
    %v735 = vadd.f32 %v188, %v480
    %v736 = vadd.f32 %v189, %v482
    %v737 = vadd.f32 %v190, %v484
    %v738 = vadd.f32 %v191, %v486
    %v739 = vadd.f32 %v192, %v488
    %v740 = vadd.f32 %v193, %v490
    %v741 = vadd.f32 %v194, %v492
    %v742 = vadd.f32 %v195, %v494
    %v743 = vadd.f32 %v196, %v496
    %v744 = vadd.f32 %v197, %v498
    %v745 = vadd.f32 %v198, %v500
    %v746 = vadd.f32 %v199, %v502
    %v747 = vadd.f32 %v200, %v504
    %v748 = vadd.f32 %v201, %v506
    %v749 = vadd.f32 %v202, %v508
    %v750 = vadd.f32 %v203, %v510
    %v751 = vadd.f32 %v204, %v512
    %v752 = vadd.f32 %v205, %v514
    %v753 = vadd.f32 %v206, %v516
    %v754 = vadd.f32 %v207, %v518
    %v755 = vadd.f32 %v208, %v520
    %v756 = vadd.f32 %v209, %v522
    %v757 = vadd.f32 %v210, %v524
    %v758 = vadd.f32 %v211, %v526
    %v759 = vadd.f32 %v212, %v528
    %v760 = vadd.f32 %v213, %v530
    %v761 = vadd.f32 %v214, %v532
    %v762 = vadd.f32 %v215, %v534
    %v763 = vadd.f32 %v216, %v536
    %v764 = vadd.f32 %v217, %v538
    %v765 = vadd.f32 %v218, %v540
    %v766 = vadd.f32 %v219, %v542
    %v767 = vadd.f32 %v220, %v544
    %v768 = vadd.f32 %v221, %v546
    %v769 = vadd.f32 %v222, %v548
    %v770 = vadd.f32 %v223, %v550
    %v771 = vadd.f32 %v224, %v552
    %v772 = vadd.f32 %v225, %v554
    %v773 = vadd.f32 %v226, %v556
    %v774 = vadd.f32 %v227, %v558
    %v775 = vadd.f32 %v228, %v560
    %v776 = vadd.f32 %v229, %v562
    %v777 = vadd.f32 %v230, %v564
    %v778 = vadd.f32 %v231, %v566
    %v779 = vadd.f32 %v232, %v568
    %v780 = vadd.f32 %v233, %v570
    %v781 = vadd.f32 %v234, %v572
    %v782 = vadd.f32 %v235, %v574
    %v783 = vadd.f32 %v236, %v576
    %v784 = vadd.f32 %v237, %v578
    %v785 = vadd.f32 %v238, %v580
    %v786 = vadd.f32 %v239, %v582
    %v787 = vadd.f32 %v240, %v584
    %v788 = vadd.f32 %v241, %v586
    %v789 = vadd.f32 %v242, %v588
    %v790 = vadd.f32 %v243, %v590
    %v791 = vadd.f32 %v244, %v592
    %v792 = vadd.f32 %v245, %v594
    %v793 = vadd.f32 %v246, %v596
    %v794 = vadd.f32 %v247, %v598
    %v795 = vadd.f32 %v248, %v600
    %v796 = vadd.f32 %v249, %v602
    %v797 = vadd.f32 %v250, %v604
    %v798 = vadd.f32 %v251, %v606
    %v799 = vadd.f32 %v252, %v608
    %v800 = vadd.f32 %v253, %v610
    %v801 = vadd.f32 %v254, %v612
    %v802 = vadd.f32 %v255, %v614
    %v803 = vadd.f32 %v256, %v616
    %v804 = vadd.f32 %v257, %v618
    %v805 = vadd.f32 %v258, %v620
    %v806 = vadd.f32 %v259, %v622
    %v807 = vadd.f32 %v260, %v624
    %v808 = vadd.f32 %v261, %v626
    %v809 = vadd.f32 %v262, %v628
    %v810 = vadd.f32 %v263, %v627
    %v811 = vstv %s165
    %v812 = vmul.f32 %v811, %v65
    %v813 = vmul.f32 %v811, %v66
    %v814 = vmul.f32 %v811, %v67
    %v815 = vmul.f32 %v811, %v68
    %v816 = vmul.f32 %v811, %v69
    %v817 = vmul.f32 %v811, %v70
    %v818 = vmul.f32 %v811, %v71
    %v819 = vmul.f32 %v811, %v72
    %v820 = vmul.f32 %v811, %v73
    %v821 = vmul.f32 %v811, %v74
    %v822 = vmul.f32 %v811, %v75
    %v823 = vmul.f32 %v811, %v76
    %v824 = vmul.f32 %v811, %v77
    %v825 = vmul.f32 %v811, %v78
    %v826 = vmul.f32 %v811, %v79
    %v827 = vmul.f32 %v811, %v80
    %v828 = vmul.f32 %v811, %v81
    %v829 = vmul.f32 %v811, %v82
    %v830 = vmul.f32 %v811, %v83
    %v831 = vmul.f32 %v811, %v84
    %v832 = vmul.f32 %v811, %v85
    %v833 = vmul.f32 %v811, %v86
    %v834 = vmul.f32 %v811, %v87
    %v835 = vmul.f32 %v811, %v88
    %v836 = vmul.f32 %v811, %v89
    %v837 = vmul.f32 %v811, %v90
    %v838 = vmul.f32 %v811, %v91
    %v839 = vmul.f32 %v811, %v92
    %v840 = vmul.f32 %v811, %v93
    %v841 = vmul.f32 %v811, %v94
    %v842 = vmul.f32 %v811, %v95
    %v843 = vmul.f32 %v811, %v96
    %v844 = vmul.f32 %v811, %v97
    %v845 = vmul.f32 %v811, %v98
    %v846 = vmul.f32 %v811, %v99
    %v847 = vmul.f32 %v811, %v100
    %v848 = vmul.f32 %v811, %v101
    %v849 = vmul.f32 %v811, %v102
    %v850 = vmul.f32 %v811, %v103
    %v851 = vmul.f32 %v811, %v104
    %v852 = vmul.f32 %v811, %v105
    %v853 = vmul.f32 %v811, %v106
    %v854 = vmul.f32 %v811, %v107
    %v855 = vmul.f32 %v811, %v108
    %v856 = vmul.f32 %v811, %v109
    %v857 = vmul.f32 %v811, %v110
    %v858 = vmul.f32 %v811, %v111
    %v859 = vmul.f32 %v811, %v112
    %v860 = vmul.f32 %v811, %v113
    %v861 = vmul.f32 %v811, %v114
    %v862 = vmul.f32 %v811, %v115
    %v863 = vmul.f32 %v811, %v116
    %v864 = vmul.f32 %v811, %v117
    %v865 = vmul.f32 %v811, %v118
    %v866 = vmul.f32 %v811, %v119
    %v867 = vmul.f32 %v811, %v120
    %v868 = vmul.f32 %v811, %v121
    %v869 = vmul.f32 %v811, %v122
    %v870 = vmul.f32 %v811, %v123
    %v871 = vmul.f32 %v811, %v124
    %v872 = vmul.f32 %v811, %v125
    %v873 = vmul.f32 %v811, %v126
    %v874 = vmul.f32 %v811, %v127
    %v875 = vmul.f32 %v811, %v128
    %v876 = vmul.f32 %v811, %v129
    %v877 = vmul.f32 %v811, %v130
    %v878 = vmul.f32 %v811, %v131
    %v879 = vmul.f32 %v811, %v132
    %v880 = vmul.f32 %v811, %v133
    %v881 = vmul.f32 %v811, %v134
    %v882 = vmul.f32 %v811, %v135
    %v883 = vmul.f32 %v811, %v136
    %v884 = vmul.f32 %v811, %v137
    %v885 = vmul.f32 %v811, %v138
    %v886 = vmul.f32 %v811, %v139
    %v887 = vmul.f32 %v811, %v140
    %v888 = vmul.f32 %v811, %v141
    %v889 = vmul.f32 %v811, %v142
    %v890 = vmul.f32 %v811, %v143
    %v891 = vmul.f32 %v811, %v144
    %v892 = vmul.f32 %v811, %v145
    %v893 = vmul.f32 %v811, %v146
    %v894 = vmul.f32 %v811, %v147
    %v895 = vmul.f32 %v811, %v148
    %v896 = vmul.f32 %v811, %v149
    %v897 = vmul.f32 %v811, %v150
    %v898 = vmul.f32 %v811, %v151
    %v899 = vmul.f32 %v811, %v152
    %v900 = vmul.f32 %v811, %v153
    %v901 = vmul.f32 %v811, %v154
    %v902 = vmul.f32 %v811, %v155
    %vm994 = vcmask 1045504
    %v995 = vrot.slane %v812, 2
    %v996 = vrot.slane %v813, 2
    %v997 = vsel %vm994, %v995, %v996
    %v998 = vrot.slane %v814, 2
    %v999 = vsel %vm994, %v996, %v998
    %v1000 = vrot.slane %v815, 2
    %v1001 = vsel %vm994, %v998, %v1000
    %v1002 = vrot.slane %v816, 2
    %v1003 = vsel %vm994, %v1000, %v1002
    %v1004 = vrot.slane %v817, 2
    %v1005 = vsel %vm994, %v1002, %v1004
    %v1006 = vrot.slane %v818, 2
    %v1007 = vsel %vm994, %v1004, %v1006
    %v1008 = vrot.slane %v819, 2
    %v1009 = vsel %vm994, %v1006, %v1008
    %v1010 = vrot.slane %v820, 2
    %v1011 = vsel %vm994, %v1008, %v1010
    %v1012 = vrot.slane %v821, 2
    %v1013 = vsel %vm994, %v1010, %v1012
    %v1014 = vrot.slane %v822, 2
    %v1015 = vsel %vm994, %v1012, %v1014
    %v1016 = vrot.slane %v823, 2
    %v1017 = vsel %vm994, %v1014, %v1016
    %v1018 = vrot.slane %v824, 2
    %v1019 = vsel %vm994, %v1016, %v1018
    %v1020 = vrot.slane %v825, 2
    %v1021 = vsel %vm994, %v1018, %v1020
    %v1022 = vrot.slane %v826, 2
    %v1023 = vsel %vm994, %v1020, %v1022
    %v1024 = vrot.slane %v827, 2
    %v1025 = vsel %vm994, %v1022, %v1024
    %v1026 = vrot.slane %v828, 2
    %v1027 = vsel %vm994, %v1024, %v1026
    %v1028 = vrot.slane %v829, 2
    %v1029 = vsel %vm994, %v1026, %v1028
    %v1030 = vrot.slane %v830, 2
    %v1031 = vsel %vm994, %v1028, %v1030
    %v1032 = vrot.slane %v831, 2
    %v1033 = vsel %vm994, %v1030, %v1032
    %v1034 = vrot.slane %v832, 2
    %v1035 = vsel %vm994, %v1032, %v1034
    %v1036 = vrot.slane %v833, 2
    %v1037 = vsel %vm994, %v1034, %v1036
    %v1038 = vrot.slane %v834, 2
    %v1039 = vsel %vm994, %v1036, %v1038
    %v1040 = vrot.slane %v835, 2
    %v1041 = vsel %vm994, %v1038, %v1040
    %v1042 = vrot.slane %v836, 2
    %v1043 = vsel %vm994, %v1040, %v1042
    %v1044 = vrot.slane %v837, 2
    %v1045 = vsel %vm994, %v1042, %v1044
    %v1046 = vrot.slane %v838, 2
    %v1047 = vsel %vm994, %v1044, %v1046
    %v1048 = vrot.slane %v839, 2
    %v1049 = vsel %vm994, %v1046, %v1048
    %v1050 = vrot.slane %v840, 2
    %v1051 = vsel %vm994, %v1048, %v1050
    %v1052 = vrot.slane %v841, 2
    %v1053 = vsel %vm994, %v1050, %v1052
    %v1054 = vrot.slane %v842, 2
    %v1055 = vsel %vm994, %v1052, %v1054
    %v1056 = vrot.slane %v843, 2
    %v1057 = vsel %vm994, %v1054, %v1056
    %v1058 = vrot.slane %v844, 2
    %v1059 = vsel %vm994, %v1056, %v1058
    %v1060 = vrot.slane %v845, 2
    %v1061 = vsel %vm994, %v1058, %v1060
    %v1062 = vrot.slane %v846, 2
    %v1063 = vsel %vm994, %v1060, %v1062
    %v1064 = vrot.slane %v847, 2
    %v1065 = vsel %vm994, %v1062, %v1064
    %v1066 = vrot.slane %v848, 2
    %v1067 = vsel %vm994, %v1064, %v1066
    %v1068 = vrot.slane %v849, 2
    %v1069 = vsel %vm994, %v1066, %v1068
    %v1070 = vrot.slane %v850, 2
    %v1071 = vsel %vm994, %v1068, %v1070
    %v1072 = vrot.slane %v851, 2
    %v1073 = vsel %vm994, %v1070, %v1072
    %v1074 = vrot.slane %v852, 2
    %v1075 = vsel %vm994, %v1072, %v1074
    %v1076 = vrot.slane %v853, 2
    %v1077 = vsel %vm994, %v1074, %v1076
    %v1078 = vrot.slane %v854, 2
    %v1079 = vsel %vm994, %v1076, %v1078
    %v1080 = vrot.slane %v855, 2
    %v1081 = vsel %vm994, %v1078, %v1080
    %v1082 = vrot.slane %v856, 2
    %v1083 = vsel %vm994, %v1080, %v1082
    %v1084 = vrot.slane %v857, 2
    %v1085 = vsel %vm994, %v1082, %v1084
    %v1086 = vrot.slane %v858, 2
    %v1087 = vsel %vm994, %v1084, %v1086
    %v1088 = vrot.slane %v859, 2
    %v1089 = vsel %vm994, %v1086, %v1088
    %v1090 = vrot.slane %v860, 2
    %v1091 = vsel %vm994, %v1088, %v1090
    %v1092 = vrot.slane %v861, 2
    %v1093 = vsel %vm994, %v1090, %v1092
    %v1094 = vrot.slane %v862, 2
    %v1095 = vsel %vm994, %v1092, %v1094
    %v1096 = vrot.slane %v863, 2
    %v1097 = vsel %vm994, %v1094, %v1096
    %v1098 = vrot.slane %v864, 2
    %v1099 = vsel %vm994, %v1096, %v1098
    %v1100 = vrot.slane %v865, 2
    %v1101 = vsel %vm994, %v1098, %v1100
    %v1102 = vrot.slane %v866, 2
    %v1103 = vsel %vm994, %v1100, %v1102
    %v1104 = vrot.slane %v867, 2
    %v1105 = vsel %vm994, %v1102, %v1104
    %v1106 = vrot.slane %v868, 2
    %v1107 = vsel %vm994, %v1104, %v1106
    %v1108 = vrot.slane %v869, 2
    %v1109 = vsel %vm994, %v1106, %v1108
    %v1110 = vrot.slane %v870, 2
    %v1111 = vsel %vm994, %v1108, %v1110
    %v1112 = vrot.slane %v871, 2
    %v1113 = vsel %vm994, %v1110, %v1112
    %v1114 = vrot.slane %v872, 2
    %v1115 = vsel %vm994, %v1112, %v1114
    %v1116 = vrot.slane %v873, 2
    %v1117 = vsel %vm994, %v1114, %v1116
    %v1118 = vrot.slane %v874, 2
    %v1119 = vsel %vm994, %v1116, %v1118
    %v1120 = vrot.slane %v875, 2
    %v1121 = vsel %vm994, %v1118, %v1120
    %v1122 = vrot.slane %v876, 2
    %v1123 = vsel %vm994, %v1120, %v1122
    %v1124 = vrot.slane %v877, 2
    %v1125 = vsel %vm994, %v1122, %v1124
    %v1126 = vrot.slane %v878, 2
    %v1127 = vsel %vm994, %v1124, %v1126
    %v1128 = vrot.slane %v879, 2
    %v1129 = vsel %vm994, %v1126, %v1128
    %v1130 = vrot.slane %v880, 2
    %v1131 = vsel %vm994, %v1128, %v1130
    %v1132 = vrot.slane %v881, 2
    %v1133 = vsel %vm994, %v1130, %v1132
    %v1134 = vrot.slane %v882, 2
    %v1135 = vsel %vm994, %v1132, %v1134
    %v1136 = vrot.slane %v883, 2
    %v1137 = vsel %vm994, %v1134, %v1136
    %v1138 = vrot.slane %v884, 2
    %v1139 = vsel %vm994, %v1136, %v1138
    %v1140 = vrot.slane %v885, 2
    %v1141 = vsel %vm994, %v1138, %v1140
    %v1142 = vrot.slane %v886, 2
    %v1143 = vsel %vm994, %v1140, %v1142
    %v1144 = vrot.slane %v887, 2
    %v1145 = vsel %vm994, %v1142, %v1144
    %v1146 = vrot.slane %v888, 2
    %v1147 = vsel %vm994, %v1144, %v1146
    %v1148 = vrot.slane %v889, 2
    %v1149 = vsel %vm994, %v1146, %v1148
    %v1150 = vrot.slane %v890, 2
    %v1151 = vsel %vm994, %v1148, %v1150
    %v1152 = vrot.slane %v891, 2
    %v1153 = vsel %vm994, %v1150, %v1152
    %v1154 = vrot.slane %v892, 2
    %v1155 = vsel %vm994, %v1152, %v1154
    %v1156 = vrot.slane %v893, 2
    %v1157 = vsel %vm994, %v1154, %v1156
    %v1158 = vrot.slane %v894, 2
    %v1159 = vsel %vm994, %v1156, %v1158
    %v1160 = vrot.slane %v895, 2
    %v1161 = vsel %vm994, %v1158, %v1160
    %v1162 = vrot.slane %v896, 2
    %v1163 = vsel %vm994, %v1160, %v1162
    %v1164 = vrot.slane %v897, 2
    %v1165 = vsel %vm994, %v1162, %v1164
    %v1166 = vrot.slane %v898, 2
    %v1167 = vsel %vm994, %v1164, %v1166
    %v1168 = vrot.slane %v899, 2
    %v1169 = vsel %vm994, %v1166, %v1168
    %v1170 = vrot.slane %v900, 2
    %v1171 = vsel %vm994, %v1168, %v1170
    %v1172 = vrot.slane %v901, 2
    %v1173 = vsel %vm994, %v1170, %v1172
    %v1174 = vrot.slane %v902, 2
    %v1175 = vsel %vm994, %v1172, %v1174
    %v1267 = vadd.f32 %v720, %v997
    %v1268 = vadd.f32 %v721, %v999
    %v1269 = vadd.f32 %v722, %v1001
    %v1270 = vadd.f32 %v723, %v1003
    %v1271 = vadd.f32 %v724, %v1005
    %v1272 = vadd.f32 %v725, %v1007
    %v1273 = vadd.f32 %v726, %v1009
    %v1274 = vadd.f32 %v727, %v1011
    %v1275 = vadd.f32 %v728, %v1013
    %v1276 = vadd.f32 %v729, %v1015
    %v1277 = vadd.f32 %v730, %v1017
    %v1278 = vadd.f32 %v731, %v1019
    %v1279 = vadd.f32 %v732, %v1021
    %v1280 = vadd.f32 %v733, %v1023
    %v1281 = vadd.f32 %v734, %v1025
    %v1282 = vadd.f32 %v735, %v1027
    %v1283 = vadd.f32 %v736, %v1029
    %v1284 = vadd.f32 %v737, %v1031
    %v1285 = vadd.f32 %v738, %v1033
    %v1286 = vadd.f32 %v739, %v1035
    %v1287 = vadd.f32 %v740, %v1037
    %v1288 = vadd.f32 %v741, %v1039
    %v1289 = vadd.f32 %v742, %v1041
    %v1290 = vadd.f32 %v743, %v1043
    %v1291 = vadd.f32 %v744, %v1045
    %v1292 = vadd.f32 %v745, %v1047
    %v1293 = vadd.f32 %v746, %v1049
    %v1294 = vadd.f32 %v747, %v1051
    %v1295 = vadd.f32 %v748, %v1053
    %v1296 = vadd.f32 %v749, %v1055
    %v1297 = vadd.f32 %v750, %v1057
    %v1298 = vadd.f32 %v751, %v1059
    %v1299 = vadd.f32 %v752, %v1061
    %v1300 = vadd.f32 %v753, %v1063
    %v1301 = vadd.f32 %v754, %v1065
    %v1302 = vadd.f32 %v755, %v1067
    %v1303 = vadd.f32 %v756, %v1069
    %v1304 = vadd.f32 %v757, %v1071
    %v1305 = vadd.f32 %v758, %v1073
    %v1306 = vadd.f32 %v759, %v1075
    %v1307 = vadd.f32 %v760, %v1077
    %v1308 = vadd.f32 %v761, %v1079
    %v1309 = vadd.f32 %v762, %v1081
    %v1310 = vadd.f32 %v763, %v1083
    %v1311 = vadd.f32 %v764, %v1085
    %v1312 = vadd.f32 %v765, %v1087
    %v1313 = vadd.f32 %v766, %v1089
    %v1314 = vadd.f32 %v767, %v1091
    %v1315 = vadd.f32 %v768, %v1093
    %v1316 = vadd.f32 %v769, %v1095
    %v1317 = vadd.f32 %v770, %v1097
    %v1318 = vadd.f32 %v771, %v1099
    %v1319 = vadd.f32 %v772, %v1101
    %v1320 = vadd.f32 %v773, %v1103
    %v1321 = vadd.f32 %v774, %v1105
    %v1322 = vadd.f32 %v775, %v1107
    %v1323 = vadd.f32 %v776, %v1109
    %v1324 = vadd.f32 %v777, %v1111
    %v1325 = vadd.f32 %v778, %v1113
    %v1326 = vadd.f32 %v779, %v1115
    %v1327 = vadd.f32 %v780, %v1117
    %v1328 = vadd.f32 %v781, %v1119
    %v1329 = vadd.f32 %v782, %v1121
    %v1330 = vadd.f32 %v783, %v1123
    %v1331 = vadd.f32 %v784, %v1125
    %v1332 = vadd.f32 %v785, %v1127
    %v1333 = vadd.f32 %v786, %v1129
    %v1334 = vadd.f32 %v787, %v1131
    %v1335 = vadd.f32 %v788, %v1133
    %v1336 = vadd.f32 %v789, %v1135
    %v1337 = vadd.f32 %v790, %v1137
    %v1338 = vadd.f32 %v791, %v1139
    %v1339 = vadd.f32 %v792, %v1141
    %v1340 = vadd.f32 %v793, %v1143
    %v1341 = vadd.f32 %v794, %v1145
    %v1342 = vadd.f32 %v795, %v1147
    %v1343 = vadd.f32 %v796, %v1149
    %v1344 = vadd.f32 %v797, %v1151
    %v1345 = vadd.f32 %v798, %v1153
    %v1346 = vadd.f32 %v799, %v1155
    %v1347 = vadd.f32 %v800, %v1157
    %v1348 = vadd.f32 %v801, %v1159
    %v1349 = vadd.f32 %v802, %v1161
    %v1350 = vadd.f32 %v803, %v1163
    %v1351 = vadd.f32 %v804, %v1165
    %v1352 = vadd.f32 %v805, %v1167
    %v1353 = vadd.f32 %v806, %v1169
    %v1354 = vadd.f32 %v807, %v1171
    %v1355 = vadd.f32 %v808, %v1173
    %v1356 = vadd.f32 %v809, %v1175
    %v1357 = vadd.f32 %v810, %v1174
    %v1358 = vstv %s166
    %v1359 = vmul.f32 %v1358, %v68
    %v1360 = vmul.f32 %v1358, %v69
    %v1361 = vmul.f32 %v1358, %v70
    %v1362 = vmul.f32 %v1358, %v71
    %v1363 = vmul.f32 %v1358, %v72
    %v1364 = vmul.f32 %v1358, %v73
    %v1365 = vmul.f32 %v1358, %v74
    %v1366 = vmul.f32 %v1358, %v75
    %v1367 = vmul.f32 %v1358, %v76
    %v1368 = vmul.f32 %v1358, %v77
    %v1369 = vmul.f32 %v1358, %v78
    %v1370 = vmul.f32 %v1358, %v79
    %v1371 = vmul.f32 %v1358, %v80
    %v1372 = vmul.f32 %v1358, %v81
    %v1373 = vmul.f32 %v1358, %v82
    %v1374 = vmul.f32 %v1358, %v83
    %v1375 = vmul.f32 %v1358, %v84
    %v1376 = vmul.f32 %v1358, %v85
    %v1377 = vmul.f32 %v1358, %v86
    %v1378 = vmul.f32 %v1358, %v87
    %v1379 = vmul.f32 %v1358, %v88
    %v1380 = vmul.f32 %v1358, %v89
    %v1381 = vmul.f32 %v1358, %v90
    %v1382 = vmul.f32 %v1358, %v91
    %v1383 = vmul.f32 %v1358, %v92
    %v1384 = vmul.f32 %v1358, %v93
    %v1385 = vmul.f32 %v1358, %v94
    %v1386 = vmul.f32 %v1358, %v95
    %v1387 = vmul.f32 %v1358, %v96
    %v1388 = vmul.f32 %v1358, %v97
    %v1389 = vmul.f32 %v1358, %v98
    %v1390 = vmul.f32 %v1358, %v99
    %v1391 = vmul.f32 %v1358, %v100
    %v1392 = vmul.f32 %v1358, %v101
    %v1393 = vmul.f32 %v1358, %v102
    %v1394 = vmul.f32 %v1358, %v103
    %v1395 = vmul.f32 %v1358, %v104
    %v1396 = vmul.f32 %v1358, %v105
    %v1397 = vmul.f32 %v1358, %v106
    %v1398 = vmul.f32 %v1358, %v107
    %v1399 = vmul.f32 %v1358, %v108
    %v1400 = vmul.f32 %v1358, %v109
    %v1401 = vmul.f32 %v1358, %v110
    %v1402 = vmul.f32 %v1358, %v111
    %v1403 = vmul.f32 %v1358, %v112
    %v1404 = vmul.f32 %v1358, %v113
    %v1405 = vmul.f32 %v1358, %v114
    %v1406 = vmul.f32 %v1358, %v115
    %v1407 = vmul.f32 %v1358, %v116
    %v1408 = vmul.f32 %v1358, %v117
    %v1409 = vmul.f32 %v1358, %v118
    %v1410 = vmul.f32 %v1358, %v119
    %v1411 = vmul.f32 %v1358, %v120
    %v1412 = vmul.f32 %v1358, %v121
    %v1413 = vmul.f32 %v1358, %v122
    %v1414 = vmul.f32 %v1358, %v123
    %v1415 = vmul.f32 %v1358, %v124
    %v1416 = vmul.f32 %v1358, %v125
    %v1417 = vmul.f32 %v1358, %v126
    %v1418 = vmul.f32 %v1358, %v127
    %v1419 = vmul.f32 %v1358, %v128
    %v1420 = vmul.f32 %v1358, %v129
    %v1421 = vmul.f32 %v1358, %v130
    %v1422 = vmul.f32 %v1358, %v131
    %v1423 = vmul.f32 %v1358, %v132
    %v1424 = vmul.f32 %v1358, %v133
    %v1425 = vmul.f32 %v1358, %v134
    %v1426 = vmul.f32 %v1358, %v135
    %v1427 = vmul.f32 %v1358, %v136
    %v1428 = vmul.f32 %v1358, %v137
    %v1429 = vmul.f32 %v1358, %v138
    %v1430 = vmul.f32 %v1358, %v139
    %v1431 = vmul.f32 %v1358, %v140
    %v1432 = vmul.f32 %v1358, %v141
    %v1433 = vmul.f32 %v1358, %v142
    %v1434 = vmul.f32 %v1358, %v143
    %v1435 = vmul.f32 %v1358, %v144
    %v1436 = vmul.f32 %v1358, %v145
    %v1437 = vmul.f32 %v1358, %v146
    %v1438 = vmul.f32 %v1358, %v147
    %v1439 = vmul.f32 %v1358, %v148
    %v1440 = vmul.f32 %v1358, %v149
    %v1441 = vmul.f32 %v1358, %v150
    %v1442 = vmul.f32 %v1358, %v151
    %v1443 = vmul.f32 %v1358, %v152
    %v1444 = vmul.f32 %v1358, %v153
    %v1445 = vmul.f32 %v1358, %v154
    %v1446 = vmul.f32 %v1358, %v155
    %v1447 = vmul.f32 %v1358, %v156
    %v1448 = vmul.f32 %v1358, %v157
    %v1449 = vmul.f32 %v1358, %v158
    %v1450 = vmul.f32 %v1358, %v159
    %vm1543 = vcmask 1043456
    %v1544 = vrot.slane %v1359, 4
    %v1545 = vrot.slane %v1360, 4
    %v1546 = vsel %vm1543, %v1544, %v1545
    %v1547 = vrot.slane %v1361, 4
    %v1548 = vsel %vm1543, %v1545, %v1547
    %v1549 = vrot.slane %v1362, 4
    %v1550 = vsel %vm1543, %v1547, %v1549
    %v1551 = vrot.slane %v1363, 4
    %v1552 = vsel %vm1543, %v1549, %v1551
    %v1553 = vrot.slane %v1364, 4
    %v1554 = vsel %vm1543, %v1551, %v1553
    %v1555 = vrot.slane %v1365, 4
    %v1556 = vsel %vm1543, %v1553, %v1555
    %v1557 = vrot.slane %v1366, 4
    %v1558 = vsel %vm1543, %v1555, %v1557
    %v1559 = vrot.slane %v1367, 4
    %v1560 = vsel %vm1543, %v1557, %v1559
    %v1561 = vrot.slane %v1368, 4
    %v1562 = vsel %vm1543, %v1559, %v1561
    %v1563 = vrot.slane %v1369, 4
    %v1564 = vsel %vm1543, %v1561, %v1563
    %v1565 = vrot.slane %v1370, 4
    %v1566 = vsel %vm1543, %v1563, %v1565
    %v1567 = vrot.slane %v1371, 4
    %v1568 = vsel %vm1543, %v1565, %v1567
    %v1569 = vrot.slane %v1372, 4
    %v1570 = vsel %vm1543, %v1567, %v1569
    %v1571 = vrot.slane %v1373, 4
    %v1572 = vsel %vm1543, %v1569, %v1571
    %v1573 = vrot.slane %v1374, 4
    %v1574 = vsel %vm1543, %v1571, %v1573
    %v1575 = vrot.slane %v1375, 4
    %v1576 = vsel %vm1543, %v1573, %v1575
    %v1577 = vrot.slane %v1376, 4
    %v1578 = vsel %vm1543, %v1575, %v1577
    %v1579 = vrot.slane %v1377, 4
    %v1580 = vsel %vm1543, %v1577, %v1579
    %v1581 = vrot.slane %v1378, 4
    %v1582 = vsel %vm1543, %v1579, %v1581
    %v1583 = vrot.slane %v1379, 4
    %v1584 = vsel %vm1543, %v1581, %v1583
    %v1585 = vrot.slane %v1380, 4
    %v1586 = vsel %vm1543, %v1583, %v1585
    %v1587 = vrot.slane %v1381, 4
    %v1588 = vsel %vm1543, %v1585, %v1587
    %v1589 = vrot.slane %v1382, 4
    %v1590 = vsel %vm1543, %v1587, %v1589
    %v1591 = vrot.slane %v1383, 4
    %v1592 = vsel %vm1543, %v1589, %v1591
    %v1593 = vrot.slane %v1384, 4
    %v1594 = vsel %vm1543, %v1591, %v1593
    %v1595 = vrot.slane %v1385, 4
    %v1596 = vsel %vm1543, %v1593, %v1595
    %v1597 = vrot.slane %v1386, 4
    %v1598 = vsel %vm1543, %v1595, %v1597
    %v1599 = vrot.slane %v1387, 4
    %v1600 = vsel %vm1543, %v1597, %v1599
    %v1601 = vrot.slane %v1388, 4
    %v1602 = vsel %vm1543, %v1599, %v1601
    %v1603 = vrot.slane %v1389, 4
    %v1604 = vsel %vm1543, %v1601, %v1603
    %v1605 = vrot.slane %v1390, 4
    %v1606 = vsel %vm1543, %v1603, %v1605
    %v1607 = vrot.slane %v1391, 4
    %v1608 = vsel %vm1543, %v1605, %v1607
    %v1609 = vrot.slane %v1392, 4
    %v1610 = vsel %vm1543, %v1607, %v1609
    %v1611 = vrot.slane %v1393, 4
    %v1612 = vsel %vm1543, %v1609, %v1611
    %v1613 = vrot.slane %v1394, 4
    %v1614 = vsel %vm1543, %v1611, %v1613
    %v1615 = vrot.slane %v1395, 4
    %v1616 = vsel %vm1543, %v1613, %v1615
    %v1617 = vrot.slane %v1396, 4
    %v1618 = vsel %vm1543, %v1615, %v1617
    %v1619 = vrot.slane %v1397, 4
    %v1620 = vsel %vm1543, %v1617, %v1619
    %v1621 = vrot.slane %v1398, 4
    %v1622 = vsel %vm1543, %v1619, %v1621
    %v1623 = vrot.slane %v1399, 4
    %v1624 = vsel %vm1543, %v1621, %v1623
    %v1625 = vrot.slane %v1400, 4
    %v1626 = vsel %vm1543, %v1623, %v1625
    %v1627 = vrot.slane %v1401, 4
    %v1628 = vsel %vm1543, %v1625, %v1627
    %v1629 = vrot.slane %v1402, 4
    %v1630 = vsel %vm1543, %v1627, %v1629
    %v1631 = vrot.slane %v1403, 4
    %v1632 = vsel %vm1543, %v1629, %v1631
    %v1633 = vrot.slane %v1404, 4
    %v1634 = vsel %vm1543, %v1631, %v1633
    %v1635 = vrot.slane %v1405, 4
    %v1636 = vsel %vm1543, %v1633, %v1635
    %v1637 = vrot.slane %v1406, 4
    %v1638 = vsel %vm1543, %v1635, %v1637
    %v1639 = vrot.slane %v1407, 4
    %v1640 = vsel %vm1543, %v1637, %v1639
    %v1641 = vrot.slane %v1408, 4
    %v1642 = vsel %vm1543, %v1639, %v1641
    %v1643 = vrot.slane %v1409, 4
    %v1644 = vsel %vm1543, %v1641, %v1643
    %v1645 = vrot.slane %v1410, 4
    %v1646 = vsel %vm1543, %v1643, %v1645
    %v1647 = vrot.slane %v1411, 4
    %v1648 = vsel %vm1543, %v1645, %v1647
    %v1649 = vrot.slane %v1412, 4
    %v1650 = vsel %vm1543, %v1647, %v1649
    %v1651 = vrot.slane %v1413, 4
    %v1652 = vsel %vm1543, %v1649, %v1651
    %v1653 = vrot.slane %v1414, 4
    %v1654 = vsel %vm1543, %v1651, %v1653
    %v1655 = vrot.slane %v1415, 4
    %v1656 = vsel %vm1543, %v1653, %v1655
    %v1657 = vrot.slane %v1416, 4
    %v1658 = vsel %vm1543, %v1655, %v1657
    %v1659 = vrot.slane %v1417, 4
    %v1660 = vsel %vm1543, %v1657, %v1659
    %v1661 = vrot.slane %v1418, 4
    %v1662 = vsel %vm1543, %v1659, %v1661
    %v1663 = vrot.slane %v1419, 4
    %v1664 = vsel %vm1543, %v1661, %v1663
    %v1665 = vrot.slane %v1420, 4
    %v1666 = vsel %vm1543, %v1663, %v1665
    %v1667 = vrot.slane %v1421, 4
    %v1668 = vsel %vm1543, %v1665, %v1667
    %v1669 = vrot.slane %v1422, 4
    %v1670 = vsel %vm1543, %v1667, %v1669
    %v1671 = vrot.slane %v1423, 4
    %v1672 = vsel %vm1543, %v1669, %v1671
    %v1673 = vrot.slane %v1424, 4
    %v1674 = vsel %vm1543, %v1671, %v1673
    %v1675 = vrot.slane %v1425, 4
    %v1676 = vsel %vm1543, %v1673, %v1675
    %v1677 = vrot.slane %v1426, 4
    %v1678 = vsel %vm1543, %v1675, %v1677
    %v1679 = vrot.slane %v1427, 4
    %v1680 = vsel %vm1543, %v1677, %v1679
    %v1681 = vrot.slane %v1428, 4
    %v1682 = vsel %vm1543, %v1679, %v1681
    %v1683 = vrot.slane %v1429, 4
    %v1684 = vsel %vm1543, %v1681, %v1683
    %v1685 = vrot.slane %v1430, 4
    %v1686 = vsel %vm1543, %v1683, %v1685
    %v1687 = vrot.slane %v1431, 4
    %v1688 = vsel %vm1543, %v1685, %v1687
    %v1689 = vrot.slane %v1432, 4
    %v1690 = vsel %vm1543, %v1687, %v1689
    %v1691 = vrot.slane %v1433, 4
    %v1692 = vsel %vm1543, %v1689, %v1691
    %v1693 = vrot.slane %v1434, 4
    %v1694 = vsel %vm1543, %v1691, %v1693
    %v1695 = vrot.slane %v1435, 4
    %v1696 = vsel %vm1543, %v1693, %v1695
    %v1697 = vrot.slane %v1436, 4
    %v1698 = vsel %vm1543, %v1695, %v1697
    %v1699 = vrot.slane %v1437, 4
    %v1700 = vsel %vm1543, %v1697, %v1699
    %v1701 = vrot.slane %v1438, 4
    %v1702 = vsel %vm1543, %v1699, %v1701
    %v1703 = vrot.slane %v1439, 4
    %v1704 = vsel %vm1543, %v1701, %v1703
    %v1705 = vrot.slane %v1440, 4
    %v1706 = vsel %vm1543, %v1703, %v1705
    %v1707 = vrot.slane %v1441, 4
    %v1708 = vsel %vm1543, %v1705, %v1707
    %v1709 = vrot.slane %v1442, 4
    %v1710 = vsel %vm1543, %v1707, %v1709
    %v1711 = vrot.slane %v1443, 4
    %v1712 = vsel %vm1543, %v1709, %v1711
    %v1713 = vrot.slane %v1444, 4
    %v1714 = vsel %vm1543, %v1711, %v1713
    %v1715 = vrot.slane %v1445, 4
    %v1716 = vsel %vm1543, %v1713, %v1715
    %v1717 = vrot.slane %v1446, 4
    %v1718 = vsel %vm1543, %v1715, %v1717
    %v1719 = vrot.slane %v1447, 4
    %v1720 = vsel %vm1543, %v1717, %v1719
    %v1721 = vrot.slane %v1448, 4
    %v1722 = vsel %vm1543, %v1719, %v1721
    %v1723 = vrot.slane %v1449, 4
    %v1724 = vsel %vm1543, %v1721, %v1723
    %v1725 = vrot.slane %v1450, 4
    %v1726 = vsel %vm1543, %v1723, %v1725
    %v1818 = vadd.f32 %v1267, %v1546
    %v1819 = vadd.f32 %v1268, %v1548
    %v1820 = vadd.f32 %v1269, %v1550
    %v1821 = vadd.f32 %v1270, %v1552
    %v1822 = vadd.f32 %v1271, %v1554
    %v1823 = vadd.f32 %v1272, %v1556
    %v1824 = vadd.f32 %v1273, %v1558
    %v1825 = vadd.f32 %v1274, %v1560
    %v1826 = vadd.f32 %v1275, %v1562
    %v1827 = vadd.f32 %v1276, %v1564
    %v1828 = vadd.f32 %v1277, %v1566
    %v1829 = vadd.f32 %v1278, %v1568
    %v1830 = vadd.f32 %v1279, %v1570
    %v1831 = vadd.f32 %v1280, %v1572
    %v1832 = vadd.f32 %v1281, %v1574
    %v1833 = vadd.f32 %v1282, %v1576
    %v1834 = vadd.f32 %v1283, %v1578
    %v1835 = vadd.f32 %v1284, %v1580
    %v1836 = vadd.f32 %v1285, %v1582
    %v1837 = vadd.f32 %v1286, %v1584
    %v1838 = vadd.f32 %v1287, %v1586
    %v1839 = vadd.f32 %v1288, %v1588
    %v1840 = vadd.f32 %v1289, %v1590
    %v1841 = vadd.f32 %v1290, %v1592
    %v1842 = vadd.f32 %v1291, %v1594
    %v1843 = vadd.f32 %v1292, %v1596
    %v1844 = vadd.f32 %v1293, %v1598
    %v1845 = vadd.f32 %v1294, %v1600
    %v1846 = vadd.f32 %v1295, %v1602
    %v1847 = vadd.f32 %v1296, %v1604
    %v1848 = vadd.f32 %v1297, %v1606
    %v1849 = vadd.f32 %v1298, %v1608
    %v1850 = vadd.f32 %v1299, %v1610
    %v1851 = vadd.f32 %v1300, %v1612
    %v1852 = vadd.f32 %v1301, %v1614
    %v1853 = vadd.f32 %v1302, %v1616
    %v1854 = vadd.f32 %v1303, %v1618
    %v1855 = vadd.f32 %v1304, %v1620
    %v1856 = vadd.f32 %v1305, %v1622
    %v1857 = vadd.f32 %v1306, %v1624
    %v1858 = vadd.f32 %v1307, %v1626
    %v1859 = vadd.f32 %v1308, %v1628
    %v1860 = vadd.f32 %v1309, %v1630
    %v1861 = vadd.f32 %v1310, %v1632
    %v1862 = vadd.f32 %v1311, %v1634
    %v1863 = vadd.f32 %v1312, %v1636
    %v1864 = vadd.f32 %v1313, %v1638
    %v1865 = vadd.f32 %v1314, %v1640
    %v1866 = vadd.f32 %v1315, %v1642
    %v1867 = vadd.f32 %v1316, %v1644
    %v1868 = vadd.f32 %v1317, %v1646
    %v1869 = vadd.f32 %v1318, %v1648
    %v1870 = vadd.f32 %v1319, %v1650
    %v1871 = vadd.f32 %v1320, %v1652
    %v1872 = vadd.f32 %v1321, %v1654
    %v1873 = vadd.f32 %v1322, %v1656
    %v1874 = vadd.f32 %v1323, %v1658
    %v1875 = vadd.f32 %v1324, %v1660
    %v1876 = vadd.f32 %v1325, %v1662
    %v1877 = vadd.f32 %v1326, %v1664
    %v1878 = vadd.f32 %v1327, %v1666
    %v1879 = vadd.f32 %v1328, %v1668
    %v1880 = vadd.f32 %v1329, %v1670
    %v1881 = vadd.f32 %v1330, %v1672
    %v1882 = vadd.f32 %v1331, %v1674
    %v1883 = vadd.f32 %v1332, %v1676
    %v1884 = vadd.f32 %v1333, %v1678
    %v1885 = vadd.f32 %v1334, %v1680
    %v1886 = vadd.f32 %v1335, %v1682
    %v1887 = vadd.f32 %v1336, %v1684
    %v1888 = vadd.f32 %v1337, %v1686
    %v1889 = vadd.f32 %v1338, %v1688
    %v1890 = vadd.f32 %v1339, %v1690
    %v1891 = vadd.f32 %v1340, %v1692
    %v1892 = vadd.f32 %v1341, %v1694
    %v1893 = vadd.f32 %v1342, %v1696
    %v1894 = vadd.f32 %v1343, %v1698
    %v1895 = vadd.f32 %v1344, %v1700
    %v1896 = vadd.f32 %v1345, %v1702
    %v1897 = vadd.f32 %v1346, %v1704
    %v1898 = vadd.f32 %v1347, %v1706
    %v1899 = vadd.f32 %v1348, %v1708
    %v1900 = vadd.f32 %v1349, %v1710
    %v1901 = vadd.f32 %v1350, %v1712
    %v1902 = vadd.f32 %v1351, %v1714
    %v1903 = vadd.f32 %v1352, %v1716
    %v1904 = vadd.f32 %v1353, %v1718
    %v1905 = vadd.f32 %v1354, %v1720
    %v1906 = vadd.f32 %v1355, %v1722
    %v1907 = vadd.f32 %v1356, %v1724
    %v1908 = vadd.f32 %v1357, %v1726
    %v1909 = vstv %s167
    %v1910 = vmul.f32 %v1909, %v68
    %v1911 = vmul.f32 %v1909, %v69
    %v1912 = vmul.f32 %v1909, %v70
    %v1913 = vmul.f32 %v1909, %v71
    %v1914 = vmul.f32 %v1909, %v72
    %v1915 = vmul.f32 %v1909, %v73
    %v1916 = vmul.f32 %v1909, %v74
    %v1917 = vmul.f32 %v1909, %v75
    %v1918 = vmul.f32 %v1909, %v76
    %v1919 = vmul.f32 %v1909, %v77
    %v1920 = vmul.f32 %v1909, %v78
    %v1921 = vmul.f32 %v1909, %v79
    %v1922 = vmul.f32 %v1909, %v80
    %v1923 = vmul.f32 %v1909, %v81
    %v1924 = vmul.f32 %v1909, %v82
    %v1925 = vmul.f32 %v1909, %v83
    %v1926 = vmul.f32 %v1909, %v84
    %v1927 = vmul.f32 %v1909, %v85
    %v1928 = vmul.f32 %v1909, %v86
    %v1929 = vmul.f32 %v1909, %v87
    %v1930 = vmul.f32 %v1909, %v88
    %v1931 = vmul.f32 %v1909, %v89
    %v1932 = vmul.f32 %v1909, %v90
    %v1933 = vmul.f32 %v1909, %v91
    %v1934 = vmul.f32 %v1909, %v92
    %v1935 = vmul.f32 %v1909, %v93
    %v1936 = vmul.f32 %v1909, %v94
    %v1937 = vmul.f32 %v1909, %v95
    %v1938 = vmul.f32 %v1909, %v96
    %v1939 = vmul.f32 %v1909, %v97
    %v1940 = vmul.f32 %v1909, %v98
    %v1941 = vmul.f32 %v1909, %v99
    %v1942 = vmul.f32 %v1909, %v100
    %v1943 = vmul.f32 %v1909, %v101
    %v1944 = vmul.f32 %v1909, %v102
    %v1945 = vmul.f32 %v1909, %v103
    %v1946 = vmul.f32 %v1909, %v104
    %v1947 = vmul.f32 %v1909, %v105
    %v1948 = vmul.f32 %v1909, %v106
    %v1949 = vmul.f32 %v1909, %v107
    %v1950 = vmul.f32 %v1909, %v108
    %v1951 = vmul.f32 %v1909, %v109
    %v1952 = vmul.f32 %v1909, %v110
    %v1953 = vmul.f32 %v1909, %v111
    %v1954 = vmul.f32 %v1909, %v112
    %v1955 = vmul.f32 %v1909, %v113
    %v1956 = vmul.f32 %v1909, %v114
    %v1957 = vmul.f32 %v1909, %v115
    %v1958 = vmul.f32 %v1909, %v116
    %v1959 = vmul.f32 %v1909, %v117
    %v1960 = vmul.f32 %v1909, %v118
    %v1961 = vmul.f32 %v1909, %v119
    %v1962 = vmul.f32 %v1909, %v120
    %v1963 = vmul.f32 %v1909, %v121
    %v1964 = vmul.f32 %v1909, %v122
    %v1965 = vmul.f32 %v1909, %v123
    %v1966 = vmul.f32 %v1909, %v124
    %v1967 = vmul.f32 %v1909, %v125
    %v1968 = vmul.f32 %v1909, %v126
    %v1969 = vmul.f32 %v1909, %v127
    %v1970 = vmul.f32 %v1909, %v128
    %v1971 = vmul.f32 %v1909, %v129
    %v1972 = vmul.f32 %v1909, %v130
    %v1973 = vmul.f32 %v1909, %v131
    %v1974 = vmul.f32 %v1909, %v132
    %v1975 = vmul.f32 %v1909, %v133
    %v1976 = vmul.f32 %v1909, %v134
    %v1977 = vmul.f32 %v1909, %v135
    %v1978 = vmul.f32 %v1909, %v136
    %v1979 = vmul.f32 %v1909, %v137
    %v1980 = vmul.f32 %v1909, %v138
    %v1981 = vmul.f32 %v1909, %v139
    %v1982 = vmul.f32 %v1909, %v140
    %v1983 = vmul.f32 %v1909, %v141
    %v1984 = vmul.f32 %v1909, %v142
    %v1985 = vmul.f32 %v1909, %v143
    %v1986 = vmul.f32 %v1909, %v144
    %v1987 = vmul.f32 %v1909, %v145
    %v1988 = vmul.f32 %v1909, %v146
    %v1989 = vmul.f32 %v1909, %v147
    %v1990 = vmul.f32 %v1909, %v148
    %v1991 = vmul.f32 %v1909, %v149
    %v1992 = vmul.f32 %v1909, %v150
    %v1993 = vmul.f32 %v1909, %v151
    %v1994 = vmul.f32 %v1909, %v152
    %v1995 = vmul.f32 %v1909, %v153
    %v1996 = vmul.f32 %v1909, %v154
    %v1997 = vmul.f32 %v1909, %v155
    %v1998 = vmul.f32 %v1909, %v156
    %v1999 = vmul.f32 %v1909, %v157
    %v2000 = vmul.f32 %v1909, %v158
    %v2001 = vmul.f32 %v1909, %v159
    %vm2094 = vcmask 1042432
    %v2095 = vrot.slane %v1910, 5
    %v2096 = vrot.slane %v1911, 5
    %v2097 = vsel %vm2094, %v2095, %v2096
    %v2098 = vrot.slane %v1912, 5
    %v2099 = vsel %vm2094, %v2096, %v2098
    %v2100 = vrot.slane %v1913, 5
    %v2101 = vsel %vm2094, %v2098, %v2100
    %v2102 = vrot.slane %v1914, 5
    %v2103 = vsel %vm2094, %v2100, %v2102
    %v2104 = vrot.slane %v1915, 5
    %v2105 = vsel %vm2094, %v2102, %v2104
    %v2106 = vrot.slane %v1916, 5
    %v2107 = vsel %vm2094, %v2104, %v2106
    %v2108 = vrot.slane %v1917, 5
    %v2109 = vsel %vm2094, %v2106, %v2108
    %v2110 = vrot.slane %v1918, 5
    %v2111 = vsel %vm2094, %v2108, %v2110
    %v2112 = vrot.slane %v1919, 5
    %v2113 = vsel %vm2094, %v2110, %v2112
    %v2114 = vrot.slane %v1920, 5
    %v2115 = vsel %vm2094, %v2112, %v2114
    %v2116 = vrot.slane %v1921, 5
    %v2117 = vsel %vm2094, %v2114, %v2116
    %v2118 = vrot.slane %v1922, 5
    %v2119 = vsel %vm2094, %v2116, %v2118
    %v2120 = vrot.slane %v1923, 5
    %v2121 = vsel %vm2094, %v2118, %v2120
    %v2122 = vrot.slane %v1924, 5
    %v2123 = vsel %vm2094, %v2120, %v2122
    %v2124 = vrot.slane %v1925, 5
    %v2125 = vsel %vm2094, %v2122, %v2124
    %v2126 = vrot.slane %v1926, 5
    %v2127 = vsel %vm2094, %v2124, %v2126
    %v2128 = vrot.slane %v1927, 5
    %v2129 = vsel %vm2094, %v2126, %v2128
    %v2130 = vrot.slane %v1928, 5
    %v2131 = vsel %vm2094, %v2128, %v2130
    %v2132 = vrot.slane %v1929, 5
    %v2133 = vsel %vm2094, %v2130, %v2132
    %v2134 = vrot.slane %v1930, 5
    %v2135 = vsel %vm2094, %v2132, %v2134
    %v2136 = vrot.slane %v1931, 5
    %v2137 = vsel %vm2094, %v2134, %v2136
    %v2138 = vrot.slane %v1932, 5
    %v2139 = vsel %vm2094, %v2136, %v2138
    %v2140 = vrot.slane %v1933, 5
    %v2141 = vsel %vm2094, %v2138, %v2140
    %v2142 = vrot.slane %v1934, 5
    %v2143 = vsel %vm2094, %v2140, %v2142
    %v2144 = vrot.slane %v1935, 5
    %v2145 = vsel %vm2094, %v2142, %v2144
    %v2146 = vrot.slane %v1936, 5
    %v2147 = vsel %vm2094, %v2144, %v2146
    %v2148 = vrot.slane %v1937, 5
    %v2149 = vsel %vm2094, %v2146, %v2148
    %v2150 = vrot.slane %v1938, 5
    %v2151 = vsel %vm2094, %v2148, %v2150
    %v2152 = vrot.slane %v1939, 5
    %v2153 = vsel %vm2094, %v2150, %v2152
    %v2154 = vrot.slane %v1940, 5
    %v2155 = vsel %vm2094, %v2152, %v2154
    %v2156 = vrot.slane %v1941, 5
    %v2157 = vsel %vm2094, %v2154, %v2156
    %v2158 = vrot.slane %v1942, 5
    %v2159 = vsel %vm2094, %v2156, %v2158
    %v2160 = vrot.slane %v1943, 5
    %v2161 = vsel %vm2094, %v2158, %v2160
    %v2162 = vrot.slane %v1944, 5
    %v2163 = vsel %vm2094, %v2160, %v2162
    %v2164 = vrot.slane %v1945, 5
    %v2165 = vsel %vm2094, %v2162, %v2164
    %v2166 = vrot.slane %v1946, 5
    %v2167 = vsel %vm2094, %v2164, %v2166
    %v2168 = vrot.slane %v1947, 5
    %v2169 = vsel %vm2094, %v2166, %v2168
    %v2170 = vrot.slane %v1948, 5
    %v2171 = vsel %vm2094, %v2168, %v2170
    %v2172 = vrot.slane %v1949, 5
    %v2173 = vsel %vm2094, %v2170, %v2172
    %v2174 = vrot.slane %v1950, 5
    %v2175 = vsel %vm2094, %v2172, %v2174
    %v2176 = vrot.slane %v1951, 5
    %v2177 = vsel %vm2094, %v2174, %v2176
    %v2178 = vrot.slane %v1952, 5
    %v2179 = vsel %vm2094, %v2176, %v2178
    %v2180 = vrot.slane %v1953, 5
    %v2181 = vsel %vm2094, %v2178, %v2180
    %v2182 = vrot.slane %v1954, 5
    %v2183 = vsel %vm2094, %v2180, %v2182
    %v2184 = vrot.slane %v1955, 5
    %v2185 = vsel %vm2094, %v2182, %v2184
    %v2186 = vrot.slane %v1956, 5
    %v2187 = vsel %vm2094, %v2184, %v2186
    %v2188 = vrot.slane %v1957, 5
    %v2189 = vsel %vm2094, %v2186, %v2188
    %v2190 = vrot.slane %v1958, 5
    %v2191 = vsel %vm2094, %v2188, %v2190
    %v2192 = vrot.slane %v1959, 5
    %v2193 = vsel %vm2094, %v2190, %v2192
    %v2194 = vrot.slane %v1960, 5
    %v2195 = vsel %vm2094, %v2192, %v2194
    %v2196 = vrot.slane %v1961, 5
    %v2197 = vsel %vm2094, %v2194, %v2196
    %v2198 = vrot.slane %v1962, 5
    %v2199 = vsel %vm2094, %v2196, %v2198
    %v2200 = vrot.slane %v1963, 5
    %v2201 = vsel %vm2094, %v2198, %v2200
    %v2202 = vrot.slane %v1964, 5
    %v2203 = vsel %vm2094, %v2200, %v2202
    %v2204 = vrot.slane %v1965, 5
    %v2205 = vsel %vm2094, %v2202, %v2204
    %v2206 = vrot.slane %v1966, 5
    %v2207 = vsel %vm2094, %v2204, %v2206
    %v2208 = vrot.slane %v1967, 5
    %v2209 = vsel %vm2094, %v2206, %v2208
    %v2210 = vrot.slane %v1968, 5
    %v2211 = vsel %vm2094, %v2208, %v2210
    %v2212 = vrot.slane %v1969, 5
    %v2213 = vsel %vm2094, %v2210, %v2212
    %v2214 = vrot.slane %v1970, 5
    %v2215 = vsel %vm2094, %v2212, %v2214
    %v2216 = vrot.slane %v1971, 5
    %v2217 = vsel %vm2094, %v2214, %v2216
    %v2218 = vrot.slane %v1972, 5
    %v2219 = vsel %vm2094, %v2216, %v2218
    %v2220 = vrot.slane %v1973, 5
    %v2221 = vsel %vm2094, %v2218, %v2220
    %v2222 = vrot.slane %v1974, 5
    %v2223 = vsel %vm2094, %v2220, %v2222
    %v2224 = vrot.slane %v1975, 5
    %v2225 = vsel %vm2094, %v2222, %v2224
    %v2226 = vrot.slane %v1976, 5
    %v2227 = vsel %vm2094, %v2224, %v2226
    %v2228 = vrot.slane %v1977, 5
    %v2229 = vsel %vm2094, %v2226, %v2228
    %v2230 = vrot.slane %v1978, 5
    %v2231 = vsel %vm2094, %v2228, %v2230
    %v2232 = vrot.slane %v1979, 5
    %v2233 = vsel %vm2094, %v2230, %v2232
    %v2234 = vrot.slane %v1980, 5
    %v2235 = vsel %vm2094, %v2232, %v2234
    %v2236 = vrot.slane %v1981, 5
    %v2237 = vsel %vm2094, %v2234, %v2236
    %v2238 = vrot.slane %v1982, 5
    %v2239 = vsel %vm2094, %v2236, %v2238
    %v2240 = vrot.slane %v1983, 5
    %v2241 = vsel %vm2094, %v2238, %v2240
    %v2242 = vrot.slane %v1984, 5
    %v2243 = vsel %vm2094, %v2240, %v2242
    %v2244 = vrot.slane %v1985, 5
    %v2245 = vsel %vm2094, %v2242, %v2244
    %v2246 = vrot.slane %v1986, 5
    %v2247 = vsel %vm2094, %v2244, %v2246
    %v2248 = vrot.slane %v1987, 5
    %v2249 = vsel %vm2094, %v2246, %v2248
    %v2250 = vrot.slane %v1988, 5
    %v2251 = vsel %vm2094, %v2248, %v2250
    %v2252 = vrot.slane %v1989, 5
    %v2253 = vsel %vm2094, %v2250, %v2252
    %v2254 = vrot.slane %v1990, 5
    %v2255 = vsel %vm2094, %v2252, %v2254
    %v2256 = vrot.slane %v1991, 5
    %v2257 = vsel %vm2094, %v2254, %v2256
    %v2258 = vrot.slane %v1992, 5
    %v2259 = vsel %vm2094, %v2256, %v2258
    %v2260 = vrot.slane %v1993, 5
    %v2261 = vsel %vm2094, %v2258, %v2260
    %v2262 = vrot.slane %v1994, 5
    %v2263 = vsel %vm2094, %v2260, %v2262
    %v2264 = vrot.slane %v1995, 5
    %v2265 = vsel %vm2094, %v2262, %v2264
    %v2266 = vrot.slane %v1996, 5
    %v2267 = vsel %vm2094, %v2264, %v2266
    %v2268 = vrot.slane %v1997, 5
    %v2269 = vsel %vm2094, %v2266, %v2268
    %v2270 = vrot.slane %v1998, 5
    %v2271 = vsel %vm2094, %v2268, %v2270
    %v2272 = vrot.slane %v1999, 5
    %v2273 = vsel %vm2094, %v2270, %v2272
    %v2274 = vrot.slane %v2000, 5
    %v2275 = vsel %vm2094, %v2272, %v2274
    %v2276 = vrot.slane %v2001, 5
    %v2277 = vsel %vm2094, %v2274, %v2276
    %v2369 = vadd.f32 %v1818, %v2097
    %v2370 = vadd.f32 %v1819, %v2099
    %v2371 = vadd.f32 %v1820, %v2101
    %v2372 = vadd.f32 %v1821, %v2103
    %v2373 = vadd.f32 %v1822, %v2105
    %v2374 = vadd.f32 %v1823, %v2107
    %v2375 = vadd.f32 %v1824, %v2109
    %v2376 = vadd.f32 %v1825, %v2111
    %v2377 = vadd.f32 %v1826, %v2113
    %v2378 = vadd.f32 %v1827, %v2115
    %v2379 = vadd.f32 %v1828, %v2117
    %v2380 = vadd.f32 %v1829, %v2119
    %v2381 = vadd.f32 %v1830, %v2121
    %v2382 = vadd.f32 %v1831, %v2123
    %v2383 = vadd.f32 %v1832, %v2125
    %v2384 = vadd.f32 %v1833, %v2127
    %v2385 = vadd.f32 %v1834, %v2129
    %v2386 = vadd.f32 %v1835, %v2131
    %v2387 = vadd.f32 %v1836, %v2133
    %v2388 = vadd.f32 %v1837, %v2135
    %v2389 = vadd.f32 %v1838, %v2137
    %v2390 = vadd.f32 %v1839, %v2139
    %v2391 = vadd.f32 %v1840, %v2141
    %v2392 = vadd.f32 %v1841, %v2143
    %v2393 = vadd.f32 %v1842, %v2145
    %v2394 = vadd.f32 %v1843, %v2147
    %v2395 = vadd.f32 %v1844, %v2149
    %v2396 = vadd.f32 %v1845, %v2151
    %v2397 = vadd.f32 %v1846, %v2153
    %v2398 = vadd.f32 %v1847, %v2155
    %v2399 = vadd.f32 %v1848, %v2157
    %v2400 = vadd.f32 %v1849, %v2159
    %v2401 = vadd.f32 %v1850, %v2161
    %v2402 = vadd.f32 %v1851, %v2163
    %v2403 = vadd.f32 %v1852, %v2165
    %v2404 = vadd.f32 %v1853, %v2167
    %v2405 = vadd.f32 %v1854, %v2169
    %v2406 = vadd.f32 %v1855, %v2171
    %v2407 = vadd.f32 %v1856, %v2173
    %v2408 = vadd.f32 %v1857, %v2175
    %v2409 = vadd.f32 %v1858, %v2177
    %v2410 = vadd.f32 %v1859, %v2179
    %v2411 = vadd.f32 %v1860, %v2181
    %v2412 = vadd.f32 %v1861, %v2183
    %v2413 = vadd.f32 %v1862, %v2185
    %v2414 = vadd.f32 %v1863, %v2187
    %v2415 = vadd.f32 %v1864, %v2189
    %v2416 = vadd.f32 %v1865, %v2191
    %v2417 = vadd.f32 %v1866, %v2193
    %v2418 = vadd.f32 %v1867, %v2195
    %v2419 = vadd.f32 %v1868, %v2197
    %v2420 = vadd.f32 %v1869, %v2199
    %v2421 = vadd.f32 %v1870, %v2201
    %v2422 = vadd.f32 %v1871, %v2203
    %v2423 = vadd.f32 %v1872, %v2205
    %v2424 = vadd.f32 %v1873, %v2207
    %v2425 = vadd.f32 %v1874, %v2209
    %v2426 = vadd.f32 %v1875, %v2211
    %v2427 = vadd.f32 %v1876, %v2213
    %v2428 = vadd.f32 %v1877, %v2215
    %v2429 = vadd.f32 %v1878, %v2217
    %v2430 = vadd.f32 %v1879, %v2219
    %v2431 = vadd.f32 %v1880, %v2221
    %v2432 = vadd.f32 %v1881, %v2223
    %v2433 = vadd.f32 %v1882, %v2225
    %v2434 = vadd.f32 %v1883, %v2227
    %v2435 = vadd.f32 %v1884, %v2229
    %v2436 = vadd.f32 %v1885, %v2231
    %v2437 = vadd.f32 %v1886, %v2233
    %v2438 = vadd.f32 %v1887, %v2235
    %v2439 = vadd.f32 %v1888, %v2237
    %v2440 = vadd.f32 %v1889, %v2239
    %v2441 = vadd.f32 %v1890, %v2241
    %v2442 = vadd.f32 %v1891, %v2243
    %v2443 = vadd.f32 %v1892, %v2245
    %v2444 = vadd.f32 %v1893, %v2247
    %v2445 = vadd.f32 %v1894, %v2249
    %v2446 = vadd.f32 %v1895, %v2251
    %v2447 = vadd.f32 %v1896, %v2253
    %v2448 = vadd.f32 %v1897, %v2255
    %v2449 = vadd.f32 %v1898, %v2257
    %v2450 = vadd.f32 %v1899, %v2259
    %v2451 = vadd.f32 %v1900, %v2261
    %v2452 = vadd.f32 %v1901, %v2263
    %v2453 = vadd.f32 %v1902, %v2265
    %v2454 = vadd.f32 %v1903, %v2267
    %v2455 = vadd.f32 %v1904, %v2269
    %v2456 = vadd.f32 %v1905, %v2271
    %v2457 = vadd.f32 %v1906, %v2273
    %v2458 = vadd.f32 %v1907, %v2275
    %v2459 = vadd.f32 %v1908, %v2277
    %v2460 = vstv %s168
    %v2461 = vmul.f32 %v2460, %v68
    %v2462 = vmul.f32 %v2460, %v69
    %v2463 = vmul.f32 %v2460, %v70
    %v2464 = vmul.f32 %v2460, %v71
    %v2465 = vmul.f32 %v2460, %v72
    %v2466 = vmul.f32 %v2460, %v73
    %v2467 = vmul.f32 %v2460, %v74
    %v2468 = vmul.f32 %v2460, %v75
    %v2469 = vmul.f32 %v2460, %v76
    %v2470 = vmul.f32 %v2460, %v77
    %v2471 = vmul.f32 %v2460, %v78
    %v2472 = vmul.f32 %v2460, %v79
    %v2473 = vmul.f32 %v2460, %v80
    %v2474 = vmul.f32 %v2460, %v81
    %v2475 = vmul.f32 %v2460, %v82
    %v2476 = vmul.f32 %v2460, %v83
    %v2477 = vmul.f32 %v2460, %v84
    %v2478 = vmul.f32 %v2460, %v85
    %v2479 = vmul.f32 %v2460, %v86
    %v2480 = vmul.f32 %v2460, %v87
    %v2481 = vmul.f32 %v2460, %v88
    %v2482 = vmul.f32 %v2460, %v89
    %v2483 = vmul.f32 %v2460, %v90
    %v2484 = vmul.f32 %v2460, %v91
    %v2485 = vmul.f32 %v2460, %v92
    %v2486 = vmul.f32 %v2460, %v93
    %v2487 = vmul.f32 %v2460, %v94
    %v2488 = vmul.f32 %v2460, %v95
    %v2489 = vmul.f32 %v2460, %v96
    %v2490 = vmul.f32 %v2460, %v97
    %v2491 = vmul.f32 %v2460, %v98
    %v2492 = vmul.f32 %v2460, %v99
    %v2493 = vmul.f32 %v2460, %v100
    %v2494 = vmul.f32 %v2460, %v101
    %v2495 = vmul.f32 %v2460, %v102
    %v2496 = vmul.f32 %v2460, %v103
    %v2497 = vmul.f32 %v2460, %v104
    %v2498 = vmul.f32 %v2460, %v105
    %v2499 = vmul.f32 %v2460, %v106
    %v2500 = vmul.f32 %v2460, %v107
    %v2501 = vmul.f32 %v2460, %v108
    %v2502 = vmul.f32 %v2460, %v109
    %v2503 = vmul.f32 %v2460, %v110
    %v2504 = vmul.f32 %v2460, %v111
    %v2505 = vmul.f32 %v2460, %v112
    %v2506 = vmul.f32 %v2460, %v113
    %v2507 = vmul.f32 %v2460, %v114
    %v2508 = vmul.f32 %v2460, %v115
    %v2509 = vmul.f32 %v2460, %v116
    %v2510 = vmul.f32 %v2460, %v117
    %v2511 = vmul.f32 %v2460, %v118
    %v2512 = vmul.f32 %v2460, %v119
    %v2513 = vmul.f32 %v2460, %v120
    %v2514 = vmul.f32 %v2460, %v121
    %v2515 = vmul.f32 %v2460, %v122
    %v2516 = vmul.f32 %v2460, %v123
    %v2517 = vmul.f32 %v2460, %v124
    %v2518 = vmul.f32 %v2460, %v125
    %v2519 = vmul.f32 %v2460, %v126
    %v2520 = vmul.f32 %v2460, %v127
    %v2521 = vmul.f32 %v2460, %v128
    %v2522 = vmul.f32 %v2460, %v129
    %v2523 = vmul.f32 %v2460, %v130
    %v2524 = vmul.f32 %v2460, %v131
    %v2525 = vmul.f32 %v2460, %v132
    %v2526 = vmul.f32 %v2460, %v133
    %v2527 = vmul.f32 %v2460, %v134
    %v2528 = vmul.f32 %v2460, %v135
    %v2529 = vmul.f32 %v2460, %v136
    %v2530 = vmul.f32 %v2460, %v137
    %v2531 = vmul.f32 %v2460, %v138
    %v2532 = vmul.f32 %v2460, %v139
    %v2533 = vmul.f32 %v2460, %v140
    %v2534 = vmul.f32 %v2460, %v141
    %v2535 = vmul.f32 %v2460, %v142
    %v2536 = vmul.f32 %v2460, %v143
    %v2537 = vmul.f32 %v2460, %v144
    %v2538 = vmul.f32 %v2460, %v145
    %v2539 = vmul.f32 %v2460, %v146
    %v2540 = vmul.f32 %v2460, %v147
    %v2541 = vmul.f32 %v2460, %v148
    %v2542 = vmul.f32 %v2460, %v149
    %v2543 = vmul.f32 %v2460, %v150
    %v2544 = vmul.f32 %v2460, %v151
    %v2545 = vmul.f32 %v2460, %v152
    %v2546 = vmul.f32 %v2460, %v153
    %v2547 = vmul.f32 %v2460, %v154
    %v2548 = vmul.f32 %v2460, %v155
    %v2549 = vmul.f32 %v2460, %v156
    %v2550 = vmul.f32 %v2460, %v157
    %v2551 = vmul.f32 %v2460, %v158
    %v2552 = vmul.f32 %v2460, %v159
    %vm2645 = vcmask 1041408
    %v2646 = vrot.slane %v2461, 6
    %v2647 = vrot.slane %v2462, 6
    %v2648 = vsel %vm2645, %v2646, %v2647
    %v2649 = vrot.slane %v2463, 6
    %v2650 = vsel %vm2645, %v2647, %v2649
    %v2651 = vrot.slane %v2464, 6
    %v2652 = vsel %vm2645, %v2649, %v2651
    %v2653 = vrot.slane %v2465, 6
    %v2654 = vsel %vm2645, %v2651, %v2653
    %v2655 = vrot.slane %v2466, 6
    %v2656 = vsel %vm2645, %v2653, %v2655
    %v2657 = vrot.slane %v2467, 6
    %v2658 = vsel %vm2645, %v2655, %v2657
    %v2659 = vrot.slane %v2468, 6
    %v2660 = vsel %vm2645, %v2657, %v2659
    %v2661 = vrot.slane %v2469, 6
    %v2662 = vsel %vm2645, %v2659, %v2661
    %v2663 = vrot.slane %v2470, 6
    %v2664 = vsel %vm2645, %v2661, %v2663
    %v2665 = vrot.slane %v2471, 6
    %v2666 = vsel %vm2645, %v2663, %v2665
    %v2667 = vrot.slane %v2472, 6
    %v2668 = vsel %vm2645, %v2665, %v2667
    %v2669 = vrot.slane %v2473, 6
    %v2670 = vsel %vm2645, %v2667, %v2669
    %v2671 = vrot.slane %v2474, 6
    %v2672 = vsel %vm2645, %v2669, %v2671
    %v2673 = vrot.slane %v2475, 6
    %v2674 = vsel %vm2645, %v2671, %v2673
    %v2675 = vrot.slane %v2476, 6
    %v2676 = vsel %vm2645, %v2673, %v2675
    %v2677 = vrot.slane %v2477, 6
    %v2678 = vsel %vm2645, %v2675, %v2677
    %v2679 = vrot.slane %v2478, 6
    %v2680 = vsel %vm2645, %v2677, %v2679
    %v2681 = vrot.slane %v2479, 6
    %v2682 = vsel %vm2645, %v2679, %v2681
    %v2683 = vrot.slane %v2480, 6
    %v2684 = vsel %vm2645, %v2681, %v2683
    %v2685 = vrot.slane %v2481, 6
    %v2686 = vsel %vm2645, %v2683, %v2685
    %v2687 = vrot.slane %v2482, 6
    %v2688 = vsel %vm2645, %v2685, %v2687
    %v2689 = vrot.slane %v2483, 6
    %v2690 = vsel %vm2645, %v2687, %v2689
    %v2691 = vrot.slane %v2484, 6
    %v2692 = vsel %vm2645, %v2689, %v2691
    %v2693 = vrot.slane %v2485, 6
    %v2694 = vsel %vm2645, %v2691, %v2693
    %v2695 = vrot.slane %v2486, 6
    %v2696 = vsel %vm2645, %v2693, %v2695
    %v2697 = vrot.slane %v2487, 6
    %v2698 = vsel %vm2645, %v2695, %v2697
    %v2699 = vrot.slane %v2488, 6
    %v2700 = vsel %vm2645, %v2697, %v2699
    %v2701 = vrot.slane %v2489, 6
    %v2702 = vsel %vm2645, %v2699, %v2701
    %v2703 = vrot.slane %v2490, 6
    %v2704 = vsel %vm2645, %v2701, %v2703
    %v2705 = vrot.slane %v2491, 6
    %v2706 = vsel %vm2645, %v2703, %v2705
    %v2707 = vrot.slane %v2492, 6
    %v2708 = vsel %vm2645, %v2705, %v2707
    %v2709 = vrot.slane %v2493, 6
    %v2710 = vsel %vm2645, %v2707, %v2709
    %v2711 = vrot.slane %v2494, 6
    %v2712 = vsel %vm2645, %v2709, %v2711
    %v2713 = vrot.slane %v2495, 6
    %v2714 = vsel %vm2645, %v2711, %v2713
    %v2715 = vrot.slane %v2496, 6
    %v2716 = vsel %vm2645, %v2713, %v2715
    %v2717 = vrot.slane %v2497, 6
    %v2718 = vsel %vm2645, %v2715, %v2717
    %v2719 = vrot.slane %v2498, 6
    %v2720 = vsel %vm2645, %v2717, %v2719
    %v2721 = vrot.slane %v2499, 6
    %v2722 = vsel %vm2645, %v2719, %v2721
    %v2723 = vrot.slane %v2500, 6
    %v2724 = vsel %vm2645, %v2721, %v2723
    %v2725 = vrot.slane %v2501, 6
    %v2726 = vsel %vm2645, %v2723, %v2725
    %v2727 = vrot.slane %v2502, 6
    %v2728 = vsel %vm2645, %v2725, %v2727
    %v2729 = vrot.slane %v2503, 6
    %v2730 = vsel %vm2645, %v2727, %v2729
    %v2731 = vrot.slane %v2504, 6
    %v2732 = vsel %vm2645, %v2729, %v2731
    %v2733 = vrot.slane %v2505, 6
    %v2734 = vsel %vm2645, %v2731, %v2733
    %v2735 = vrot.slane %v2506, 6
    %v2736 = vsel %vm2645, %v2733, %v2735
    %v2737 = vrot.slane %v2507, 6
    %v2738 = vsel %vm2645, %v2735, %v2737
    %v2739 = vrot.slane %v2508, 6
    %v2740 = vsel %vm2645, %v2737, %v2739
    %v2741 = vrot.slane %v2509, 6
    %v2742 = vsel %vm2645, %v2739, %v2741
    %v2743 = vrot.slane %v2510, 6
    %v2744 = vsel %vm2645, %v2741, %v2743
    %v2745 = vrot.slane %v2511, 6
    %v2746 = vsel %vm2645, %v2743, %v2745
    %v2747 = vrot.slane %v2512, 6
    %v2748 = vsel %vm2645, %v2745, %v2747
    %v2749 = vrot.slane %v2513, 6
    %v2750 = vsel %vm2645, %v2747, %v2749
    %v2751 = vrot.slane %v2514, 6
    %v2752 = vsel %vm2645, %v2749, %v2751
    %v2753 = vrot.slane %v2515, 6
    %v2754 = vsel %vm2645, %v2751, %v2753
    %v2755 = vrot.slane %v2516, 6
    %v2756 = vsel %vm2645, %v2753, %v2755
    %v2757 = vrot.slane %v2517, 6
    %v2758 = vsel %vm2645, %v2755, %v2757
    %v2759 = vrot.slane %v2518, 6
    %v2760 = vsel %vm2645, %v2757, %v2759
    %v2761 = vrot.slane %v2519, 6
    %v2762 = vsel %vm2645, %v2759, %v2761
    %v2763 = vrot.slane %v2520, 6
    %v2764 = vsel %vm2645, %v2761, %v2763
    %v2765 = vrot.slane %v2521, 6
    %v2766 = vsel %vm2645, %v2763, %v2765
    %v2767 = vrot.slane %v2522, 6
    %v2768 = vsel %vm2645, %v2765, %v2767
    %v2769 = vrot.slane %v2523, 6
    %v2770 = vsel %vm2645, %v2767, %v2769
    %v2771 = vrot.slane %v2524, 6
    %v2772 = vsel %vm2645, %v2769, %v2771
    %v2773 = vrot.slane %v2525, 6
    %v2774 = vsel %vm2645, %v2771, %v2773
    %v2775 = vrot.slane %v2526, 6
    %v2776 = vsel %vm2645, %v2773, %v2775
    %v2777 = vrot.slane %v2527, 6
    %v2778 = vsel %vm2645, %v2775, %v2777
    %v2779 = vrot.slane %v2528, 6
    %v2780 = vsel %vm2645, %v2777, %v2779
    %v2781 = vrot.slane %v2529, 6
    %v2782 = vsel %vm2645, %v2779, %v2781
    %v2783 = vrot.slane %v2530, 6
    %v2784 = vsel %vm2645, %v2781, %v2783
    %v2785 = vrot.slane %v2531, 6
    %v2786 = vsel %vm2645, %v2783, %v2785
    %v2787 = vrot.slane %v2532, 6
    %v2788 = vsel %vm2645, %v2785, %v2787
    %v2789 = vrot.slane %v2533, 6
    %v2790 = vsel %vm2645, %v2787, %v2789
    %v2791 = vrot.slane %v2534, 6
    %v2792 = vsel %vm2645, %v2789, %v2791
    %v2793 = vrot.slane %v2535, 6
    %v2794 = vsel %vm2645, %v2791, %v2793
    %v2795 = vrot.slane %v2536, 6
    %v2796 = vsel %vm2645, %v2793, %v2795
    %v2797 = vrot.slane %v2537, 6
    %v2798 = vsel %vm2645, %v2795, %v2797
    %v2799 = vrot.slane %v2538, 6
    %v2800 = vsel %vm2645, %v2797, %v2799
    %v2801 = vrot.slane %v2539, 6
    %v2802 = vsel %vm2645, %v2799, %v2801
    %v2803 = vrot.slane %v2540, 6
    %v2804 = vsel %vm2645, %v2801, %v2803
    %v2805 = vrot.slane %v2541, 6
    %v2806 = vsel %vm2645, %v2803, %v2805
    %v2807 = vrot.slane %v2542, 6
    %v2808 = vsel %vm2645, %v2805, %v2807
    %v2809 = vrot.slane %v2543, 6
    %v2810 = vsel %vm2645, %v2807, %v2809
    %v2811 = vrot.slane %v2544, 6
    %v2812 = vsel %vm2645, %v2809, %v2811
    %v2813 = vrot.slane %v2545, 6
    %v2814 = vsel %vm2645, %v2811, %v2813
    %v2815 = vrot.slane %v2546, 6
    %v2816 = vsel %vm2645, %v2813, %v2815
    %v2817 = vrot.slane %v2547, 6
    %v2818 = vsel %vm2645, %v2815, %v2817
    %v2819 = vrot.slane %v2548, 6
    %v2820 = vsel %vm2645, %v2817, %v2819
    %v2821 = vrot.slane %v2549, 6
    %v2822 = vsel %vm2645, %v2819, %v2821
    %v2823 = vrot.slane %v2550, 6
    %v2824 = vsel %vm2645, %v2821, %v2823
    %v2825 = vrot.slane %v2551, 6
    %v2826 = vsel %vm2645, %v2823, %v2825
    %v2827 = vrot.slane %v2552, 6
    %v2828 = vsel %vm2645, %v2825, %v2827
    %v2920 = vadd.f32 %v2369, %v2648
    %v2921 = vadd.f32 %v2370, %v2650
    %v2922 = vadd.f32 %v2371, %v2652
    %v2923 = vadd.f32 %v2372, %v2654
    %v2924 = vadd.f32 %v2373, %v2656
    %v2925 = vadd.f32 %v2374, %v2658
    %v2926 = vadd.f32 %v2375, %v2660
    %v2927 = vadd.f32 %v2376, %v2662
    %v2928 = vadd.f32 %v2377, %v2664
    %v2929 = vadd.f32 %v2378, %v2666
    %v2930 = vadd.f32 %v2379, %v2668
    %v2931 = vadd.f32 %v2380, %v2670
    %v2932 = vadd.f32 %v2381, %v2672
    %v2933 = vadd.f32 %v2382, %v2674
    %v2934 = vadd.f32 %v2383, %v2676
    %v2935 = vadd.f32 %v2384, %v2678
    %v2936 = vadd.f32 %v2385, %v2680
    %v2937 = vadd.f32 %v2386, %v2682
    %v2938 = vadd.f32 %v2387, %v2684
    %v2939 = vadd.f32 %v2388, %v2686
    %v2940 = vadd.f32 %v2389, %v2688
    %v2941 = vadd.f32 %v2390, %v2690
    %v2942 = vadd.f32 %v2391, %v2692
    %v2943 = vadd.f32 %v2392, %v2694
    %v2944 = vadd.f32 %v2393, %v2696
    %v2945 = vadd.f32 %v2394, %v2698
    %v2946 = vadd.f32 %v2395, %v2700
    %v2947 = vadd.f32 %v2396, %v2702
    %v2948 = vadd.f32 %v2397, %v2704
    %v2949 = vadd.f32 %v2398, %v2706
    %v2950 = vadd.f32 %v2399, %v2708
    %v2951 = vadd.f32 %v2400, %v2710
    %v2952 = vadd.f32 %v2401, %v2712
    %v2953 = vadd.f32 %v2402, %v2714
    %v2954 = vadd.f32 %v2403, %v2716
    %v2955 = vadd.f32 %v2404, %v2718
    %v2956 = vadd.f32 %v2405, %v2720
    %v2957 = vadd.f32 %v2406, %v2722
    %v2958 = vadd.f32 %v2407, %v2724
    %v2959 = vadd.f32 %v2408, %v2726
    %v2960 = vadd.f32 %v2409, %v2728
    %v2961 = vadd.f32 %v2410, %v2730
    %v2962 = vadd.f32 %v2411, %v2732
    %v2963 = vadd.f32 %v2412, %v2734
    %v2964 = vadd.f32 %v2413, %v2736
    %v2965 = vadd.f32 %v2414, %v2738
    %v2966 = vadd.f32 %v2415, %v2740
    %v2967 = vadd.f32 %v2416, %v2742
    %v2968 = vadd.f32 %v2417, %v2744
    %v2969 = vadd.f32 %v2418, %v2746
    %v2970 = vadd.f32 %v2419, %v2748
    %v2971 = vadd.f32 %v2420, %v2750
    %v2972 = vadd.f32 %v2421, %v2752
    %v2973 = vadd.f32 %v2422, %v2754
    %v2974 = vadd.f32 %v2423, %v2756
    %v2975 = vadd.f32 %v2424, %v2758
    %v2976 = vadd.f32 %v2425, %v2760
    %v2977 = vadd.f32 %v2426, %v2762
    %v2978 = vadd.f32 %v2427, %v2764
    %v2979 = vadd.f32 %v2428, %v2766
    %v2980 = vadd.f32 %v2429, %v2768
    %v2981 = vadd.f32 %v2430, %v2770
    %v2982 = vadd.f32 %v2431, %v2772
    %v2983 = vadd.f32 %v2432, %v2774
    %v2984 = vadd.f32 %v2433, %v2776
    %v2985 = vadd.f32 %v2434, %v2778
    %v2986 = vadd.f32 %v2435, %v2780
    %v2987 = vadd.f32 %v2436, %v2782
    %v2988 = vadd.f32 %v2437, %v2784
    %v2989 = vadd.f32 %v2438, %v2786
    %v2990 = vadd.f32 %v2439, %v2788
    %v2991 = vadd.f32 %v2440, %v2790
    %v2992 = vadd.f32 %v2441, %v2792
    %v2993 = vadd.f32 %v2442, %v2794
    %v2994 = vadd.f32 %v2443, %v2796
    %v2995 = vadd.f32 %v2444, %v2798
    %v2996 = vadd.f32 %v2445, %v2800
    %v2997 = vadd.f32 %v2446, %v2802
    %v2998 = vadd.f32 %v2447, %v2804
    %v2999 = vadd.f32 %v2448, %v2806
    %v3000 = vadd.f32 %v2449, %v2808
    %v3001 = vadd.f32 %v2450, %v2810
    %v3002 = vadd.f32 %v2451, %v2812
    %v3003 = vadd.f32 %v2452, %v2814
    %v3004 = vadd.f32 %v2453, %v2816
    %v3005 = vadd.f32 %v2454, %v2818
    %v3006 = vadd.f32 %v2455, %v2820
    %v3007 = vadd.f32 %v2456, %v2822
    %v3008 = vadd.f32 %v2457, %v2824
    %v3009 = vadd.f32 %v2458, %v2826
    %v3010 = vadd.f32 %v2459, %v2828
    %v3011 = vstv %s169
    %v3012 = vmul.f32 %v3011, %v72
    %v3013 = vmul.f32 %v3011, %v73
    %v3014 = vmul.f32 %v3011, %v74
    %v3015 = vmul.f32 %v3011, %v75
    %v3016 = vmul.f32 %v3011, %v76
    %v3017 = vmul.f32 %v3011, %v77
    %v3018 = vmul.f32 %v3011, %v78
    %v3019 = vmul.f32 %v3011, %v79
    %v3020 = vmul.f32 %v3011, %v80
    %v3021 = vmul.f32 %v3011, %v81
    %v3022 = vmul.f32 %v3011, %v82
    %v3023 = vmul.f32 %v3011, %v83
    %v3024 = vmul.f32 %v3011, %v84
    %v3025 = vmul.f32 %v3011, %v85
    %v3026 = vmul.f32 %v3011, %v86
    %v3027 = vmul.f32 %v3011, %v87
    %v3028 = vmul.f32 %v3011, %v88
    %v3029 = vmul.f32 %v3011, %v89
    %v3030 = vmul.f32 %v3011, %v90
    %v3031 = vmul.f32 %v3011, %v91
    %v3032 = vmul.f32 %v3011, %v92
    %v3033 = vmul.f32 %v3011, %v93
    %v3034 = vmul.f32 %v3011, %v94
    %v3035 = vmul.f32 %v3011, %v95
    %v3036 = vmul.f32 %v3011, %v96
    %v3037 = vmul.f32 %v3011, %v97
    %v3038 = vmul.f32 %v3011, %v98
    %v3039 = vmul.f32 %v3011, %v99
    %v3040 = vmul.f32 %v3011, %v100
    %v3041 = vmul.f32 %v3011, %v101
    %v3042 = vmul.f32 %v3011, %v102
    %v3043 = vmul.f32 %v3011, %v103
    %v3044 = vmul.f32 %v3011, %v104
    %v3045 = vmul.f32 %v3011, %v105
    %v3046 = vmul.f32 %v3011, %v106
    %v3047 = vmul.f32 %v3011, %v107
    %v3048 = vmul.f32 %v3011, %v108
    %v3049 = vmul.f32 %v3011, %v109
    %v3050 = vmul.f32 %v3011, %v110
    %v3051 = vmul.f32 %v3011, %v111
    %v3052 = vmul.f32 %v3011, %v112
    %v3053 = vmul.f32 %v3011, %v113
    %v3054 = vmul.f32 %v3011, %v114
    %v3055 = vmul.f32 %v3011, %v115
    %v3056 = vmul.f32 %v3011, %v116
    %v3057 = vmul.f32 %v3011, %v117
    %v3058 = vmul.f32 %v3011, %v118
    %v3059 = vmul.f32 %v3011, %v119
    %v3060 = vmul.f32 %v3011, %v120
    %v3061 = vmul.f32 %v3011, %v121
    %v3062 = vmul.f32 %v3011, %v122
    %v3063 = vmul.f32 %v3011, %v123
    %v3064 = vmul.f32 %v3011, %v124
    %v3065 = vmul.f32 %v3011, %v125
    %v3066 = vmul.f32 %v3011, %v126
    %v3067 = vmul.f32 %v3011, %v127
    %v3068 = vmul.f32 %v3011, %v128
    %v3069 = vmul.f32 %v3011, %v129
    %v3070 = vmul.f32 %v3011, %v130
    %v3071 = vmul.f32 %v3011, %v131
    %v3072 = vmul.f32 %v3011, %v132
    %v3073 = vmul.f32 %v3011, %v133
    %v3074 = vmul.f32 %v3011, %v134
    %v3075 = vmul.f32 %v3011, %v135
    %v3076 = vmul.f32 %v3011, %v136
    %v3077 = vmul.f32 %v3011, %v137
    %v3078 = vmul.f32 %v3011, %v138
    %v3079 = vmul.f32 %v3011, %v139
    %v3080 = vmul.f32 %v3011, %v140
    %v3081 = vmul.f32 %v3011, %v141
    %v3082 = vmul.f32 %v3011, %v142
    %v3083 = vmul.f32 %v3011, %v143
    %v3084 = vmul.f32 %v3011, %v144
    %v3085 = vmul.f32 %v3011, %v145
    %v3086 = vmul.f32 %v3011, %v146
    %v3087 = vmul.f32 %v3011, %v147
    %v3088 = vmul.f32 %v3011, %v148
    %v3089 = vmul.f32 %v3011, %v149
    %v3090 = vmul.f32 %v3011, %v150
    %v3091 = vmul.f32 %v3011, %v151
    %v3092 = vmul.f32 %v3011, %v152
    %v3093 = vmul.f32 %v3011, %v153
    %v3094 = vmul.f32 %v3011, %v154
    %v3095 = vmul.f32 %v3011, %v155
    %v3096 = vmul.f32 %v3011, %v156
    %v3097 = vmul.f32 %v3011, %v157
    %v3098 = vmul.f32 %v3011, %v158
    %v3099 = vmul.f32 %v3011, %v159
    %v3100 = vmul.f32 %v3011, %v160
    %v3101 = vmul.f32 %v3011, %v161
    %v3102 = vmul.f32 %v3011, %v162
    %v3103 = vadd.f32 %v2920, %v3012
    %v3104 = vadd.f32 %v2921, %v3013
    %v3105 = vadd.f32 %v2922, %v3014
    %v3106 = vadd.f32 %v2923, %v3015
    %v3107 = vadd.f32 %v2924, %v3016
    %v3108 = vadd.f32 %v2925, %v3017
    %v3109 = vadd.f32 %v2926, %v3018
    %v3110 = vadd.f32 %v2927, %v3019
    %v3111 = vadd.f32 %v2928, %v3020
    %v3112 = vadd.f32 %v2929, %v3021
    %v3113 = vadd.f32 %v2930, %v3022
    %v3114 = vadd.f32 %v2931, %v3023
    %v3115 = vadd.f32 %v2932, %v3024
    %v3116 = vadd.f32 %v2933, %v3025
    %v3117 = vadd.f32 %v2934, %v3026
    %v3118 = vadd.f32 %v2935, %v3027
    %v3119 = vadd.f32 %v2936, %v3028
    %v3120 = vadd.f32 %v2937, %v3029
    %v3121 = vadd.f32 %v2938, %v3030
    %v3122 = vadd.f32 %v2939, %v3031
    %v3123 = vadd.f32 %v2940, %v3032
    %v3124 = vadd.f32 %v2941, %v3033
    %v3125 = vadd.f32 %v2942, %v3034
    %v3126 = vadd.f32 %v2943, %v3035
    %v3127 = vadd.f32 %v2944, %v3036
    %v3128 = vadd.f32 %v2945, %v3037
    %v3129 = vadd.f32 %v2946, %v3038
    %v3130 = vadd.f32 %v2947, %v3039
    %v3131 = vadd.f32 %v2948, %v3040
    %v3132 = vadd.f32 %v2949, %v3041
    %v3133 = vadd.f32 %v2950, %v3042
    %v3134 = vadd.f32 %v2951, %v3043
    %v3135 = vadd.f32 %v2952, %v3044
    %v3136 = vadd.f32 %v2953, %v3045
    %v3137 = vadd.f32 %v2954, %v3046
    %v3138 = vadd.f32 %v2955, %v3047
    %v3139 = vadd.f32 %v2956, %v3048
    %v3140 = vadd.f32 %v2957, %v3049
    %v3141 = vadd.f32 %v2958, %v3050
    %v3142 = vadd.f32 %v2959, %v3051
    %v3143 = vadd.f32 %v2960, %v3052
    %v3144 = vadd.f32 %v2961, %v3053
    %v3145 = vadd.f32 %v2962, %v3054
    %v3146 = vadd.f32 %v2963, %v3055
    %v3147 = vadd.f32 %v2964, %v3056
    %v3148 = vadd.f32 %v2965, %v3057
    %v3149 = vadd.f32 %v2966, %v3058
    %v3150 = vadd.f32 %v2967, %v3059
    %v3151 = vadd.f32 %v2968, %v3060
    %v3152 = vadd.f32 %v2969, %v3061
    %v3153 = vadd.f32 %v2970, %v3062
    %v3154 = vadd.f32 %v2971, %v3063
    %v3155 = vadd.f32 %v2972, %v3064
    %v3156 = vadd.f32 %v2973, %v3065
    %v3157 = vadd.f32 %v2974, %v3066
    %v3158 = vadd.f32 %v2975, %v3067
    %v3159 = vadd.f32 %v2976, %v3068
    %v3160 = vadd.f32 %v2977, %v3069
    %v3161 = vadd.f32 %v2978, %v3070
    %v3162 = vadd.f32 %v2979, %v3071
    %v3163 = vadd.f32 %v2980, %v3072
    %v3164 = vadd.f32 %v2981, %v3073
    %v3165 = vadd.f32 %v2982, %v3074
    %v3166 = vadd.f32 %v2983, %v3075
    %v3167 = vadd.f32 %v2984, %v3076
    %v3168 = vadd.f32 %v2985, %v3077
    %v3169 = vadd.f32 %v2986, %v3078
    %v3170 = vadd.f32 %v2987, %v3079
    %v3171 = vadd.f32 %v2988, %v3080
    %v3172 = vadd.f32 %v2989, %v3081
    %v3173 = vadd.f32 %v2990, %v3082
    %v3174 = vadd.f32 %v2991, %v3083
    %v3175 = vadd.f32 %v2992, %v3084
    %v3176 = vadd.f32 %v2993, %v3085
    %v3177 = vadd.f32 %v2994, %v3086
    %v3178 = vadd.f32 %v2995, %v3087
    %v3179 = vadd.f32 %v2996, %v3088
    %v3180 = vadd.f32 %v2997, %v3089
    %v3181 = vadd.f32 %v2998, %v3090
    %v3182 = vadd.f32 %v2999, %v3091
    %v3183 = vadd.f32 %v3000, %v3092
    %v3184 = vadd.f32 %v3001, %v3093
    %v3185 = vadd.f32 %v3002, %v3094
    %v3186 = vadd.f32 %v3003, %v3095
    %v3187 = vadd.f32 %v3004, %v3096
    %v3188 = vadd.f32 %v3005, %v3097
    %v3189 = vadd.f32 %v3006, %v3098
    %v3190 = vadd.f32 %v3007, %v3099
    %v3191 = vadd.f32 %v3008, %v3100
    %v3192 = vadd.f32 %v3009, %v3101
    %v3193 = vadd.f32 %v3010, %v3102
    %v3194 = vstv %s170
    %v3195 = vmul.f32 %v3194, %v72
    %v3196 = vmul.f32 %v3194, %v73
    %v3197 = vmul.f32 %v3194, %v74
    %v3198 = vmul.f32 %v3194, %v75
    %v3199 = vmul.f32 %v3194, %v76
    %v3200 = vmul.f32 %v3194, %v77
    %v3201 = vmul.f32 %v3194, %v78
    %v3202 = vmul.f32 %v3194, %v79
    %v3203 = vmul.f32 %v3194, %v80
    %v3204 = vmul.f32 %v3194, %v81
    %v3205 = vmul.f32 %v3194, %v82
    %v3206 = vmul.f32 %v3194, %v83
    %v3207 = vmul.f32 %v3194, %v84
    %v3208 = vmul.f32 %v3194, %v85
    %v3209 = vmul.f32 %v3194, %v86
    %v3210 = vmul.f32 %v3194, %v87
    %v3211 = vmul.f32 %v3194, %v88
    %v3212 = vmul.f32 %v3194, %v89
    %v3213 = vmul.f32 %v3194, %v90
    %v3214 = vmul.f32 %v3194, %v91
    %v3215 = vmul.f32 %v3194, %v92
    %v3216 = vmul.f32 %v3194, %v93
    %v3217 = vmul.f32 %v3194, %v94
    %v3218 = vmul.f32 %v3194, %v95
    %v3219 = vmul.f32 %v3194, %v96
    %v3220 = vmul.f32 %v3194, %v97
    %v3221 = vmul.f32 %v3194, %v98
    %v3222 = vmul.f32 %v3194, %v99
    %v3223 = vmul.f32 %v3194, %v100
    %v3224 = vmul.f32 %v3194, %v101
    %v3225 = vmul.f32 %v3194, %v102
    %v3226 = vmul.f32 %v3194, %v103
    %v3227 = vmul.f32 %v3194, %v104
    %v3228 = vmul.f32 %v3194, %v105
    %v3229 = vmul.f32 %v3194, %v106
    %v3230 = vmul.f32 %v3194, %v107
    %v3231 = vmul.f32 %v3194, %v108
    %v3232 = vmul.f32 %v3194, %v109
    %v3233 = vmul.f32 %v3194, %v110
    %v3234 = vmul.f32 %v3194, %v111
    %v3235 = vmul.f32 %v3194, %v112
    %v3236 = vmul.f32 %v3194, %v113
    %v3237 = vmul.f32 %v3194, %v114
    %v3238 = vmul.f32 %v3194, %v115
    %v3239 = vmul.f32 %v3194, %v116
    %v3240 = vmul.f32 %v3194, %v117
    %v3241 = vmul.f32 %v3194, %v118
    %v3242 = vmul.f32 %v3194, %v119
    %v3243 = vmul.f32 %v3194, %v120
    %v3244 = vmul.f32 %v3194, %v121
    %v3245 = vmul.f32 %v3194, %v122
    %v3246 = vmul.f32 %v3194, %v123
    %v3247 = vmul.f32 %v3194, %v124
    %v3248 = vmul.f32 %v3194, %v125
    %v3249 = vmul.f32 %v3194, %v126
    %v3250 = vmul.f32 %v3194, %v127
    %v3251 = vmul.f32 %v3194, %v128
    %v3252 = vmul.f32 %v3194, %v129
    %v3253 = vmul.f32 %v3194, %v130
    %v3254 = vmul.f32 %v3194, %v131
    %v3255 = vmul.f32 %v3194, %v132
    %v3256 = vmul.f32 %v3194, %v133
    %v3257 = vmul.f32 %v3194, %v134
    %v3258 = vmul.f32 %v3194, %v135
    %v3259 = vmul.f32 %v3194, %v136
    %v3260 = vmul.f32 %v3194, %v137
    %v3261 = vmul.f32 %v3194, %v138
    %v3262 = vmul.f32 %v3194, %v139
    %v3263 = vmul.f32 %v3194, %v140
    %v3264 = vmul.f32 %v3194, %v141
    %v3265 = vmul.f32 %v3194, %v142
    %v3266 = vmul.f32 %v3194, %v143
    %v3267 = vmul.f32 %v3194, %v144
    %v3268 = vmul.f32 %v3194, %v145
    %v3269 = vmul.f32 %v3194, %v146
    %v3270 = vmul.f32 %v3194, %v147
    %v3271 = vmul.f32 %v3194, %v148
    %v3272 = vmul.f32 %v3194, %v149
    %v3273 = vmul.f32 %v3194, %v150
    %v3274 = vmul.f32 %v3194, %v151
    %v3275 = vmul.f32 %v3194, %v152
    %v3276 = vmul.f32 %v3194, %v153
    %v3277 = vmul.f32 %v3194, %v154
    %v3278 = vmul.f32 %v3194, %v155
    %v3279 = vmul.f32 %v3194, %v156
    %v3280 = vmul.f32 %v3194, %v157
    %v3281 = vmul.f32 %v3194, %v158
    %v3282 = vmul.f32 %v3194, %v159
    %v3283 = vmul.f32 %v3194, %v160
    %v3284 = vmul.f32 %v3194, %v161
    %v3285 = vmul.f32 %v3194, %v162
    %v3377 = vrot.slane %v3195, 1
    %v3378 = vrot.slane %v3196, 1
    %v3379 = vsel %vm447, %v3377, %v3378
    %v3380 = vrot.slane %v3197, 1
    %v3381 = vsel %vm447, %v3378, %v3380
    %v3382 = vrot.slane %v3198, 1
    %v3383 = vsel %vm447, %v3380, %v3382
    %v3384 = vrot.slane %v3199, 1
    %v3385 = vsel %vm447, %v3382, %v3384
    %v3386 = vrot.slane %v3200, 1
    %v3387 = vsel %vm447, %v3384, %v3386
    %v3388 = vrot.slane %v3201, 1
    %v3389 = vsel %vm447, %v3386, %v3388
    %v3390 = vrot.slane %v3202, 1
    %v3391 = vsel %vm447, %v3388, %v3390
    %v3392 = vrot.slane %v3203, 1
    %v3393 = vsel %vm447, %v3390, %v3392
    %v3394 = vrot.slane %v3204, 1
    %v3395 = vsel %vm447, %v3392, %v3394
    %v3396 = vrot.slane %v3205, 1
    %v3397 = vsel %vm447, %v3394, %v3396
    %v3398 = vrot.slane %v3206, 1
    %v3399 = vsel %vm447, %v3396, %v3398
    %v3400 = vrot.slane %v3207, 1
    %v3401 = vsel %vm447, %v3398, %v3400
    %v3402 = vrot.slane %v3208, 1
    %v3403 = vsel %vm447, %v3400, %v3402
    %v3404 = vrot.slane %v3209, 1
    %v3405 = vsel %vm447, %v3402, %v3404
    %v3406 = vrot.slane %v3210, 1
    %v3407 = vsel %vm447, %v3404, %v3406
    %v3408 = vrot.slane %v3211, 1
    %v3409 = vsel %vm447, %v3406, %v3408
    %v3410 = vrot.slane %v3212, 1
    %v3411 = vsel %vm447, %v3408, %v3410
    %v3412 = vrot.slane %v3213, 1
    %v3413 = vsel %vm447, %v3410, %v3412
    %v3414 = vrot.slane %v3214, 1
    %v3415 = vsel %vm447, %v3412, %v3414
    %v3416 = vrot.slane %v3215, 1
    %v3417 = vsel %vm447, %v3414, %v3416
    %v3418 = vrot.slane %v3216, 1
    %v3419 = vsel %vm447, %v3416, %v3418
    %v3420 = vrot.slane %v3217, 1
    %v3421 = vsel %vm447, %v3418, %v3420
    %v3422 = vrot.slane %v3218, 1
    %v3423 = vsel %vm447, %v3420, %v3422
    %v3424 = vrot.slane %v3219, 1
    %v3425 = vsel %vm447, %v3422, %v3424
    %v3426 = vrot.slane %v3220, 1
    %v3427 = vsel %vm447, %v3424, %v3426
    %v3428 = vrot.slane %v3221, 1
    %v3429 = vsel %vm447, %v3426, %v3428
    %v3430 = vrot.slane %v3222, 1
    %v3431 = vsel %vm447, %v3428, %v3430
    %v3432 = vrot.slane %v3223, 1
    %v3433 = vsel %vm447, %v3430, %v3432
    %v3434 = vrot.slane %v3224, 1
    %v3435 = vsel %vm447, %v3432, %v3434
    %v3436 = vrot.slane %v3225, 1
    %v3437 = vsel %vm447, %v3434, %v3436
    %v3438 = vrot.slane %v3226, 1
    %v3439 = vsel %vm447, %v3436, %v3438
    %v3440 = vrot.slane %v3227, 1
    %v3441 = vsel %vm447, %v3438, %v3440
    %v3442 = vrot.slane %v3228, 1
    %v3443 = vsel %vm447, %v3440, %v3442
    %v3444 = vrot.slane %v3229, 1
    %v3445 = vsel %vm447, %v3442, %v3444
    %v3446 = vrot.slane %v3230, 1
    %v3447 = vsel %vm447, %v3444, %v3446
    %v3448 = vrot.slane %v3231, 1
    %v3449 = vsel %vm447, %v3446, %v3448
    %v3450 = vrot.slane %v3232, 1
    %v3451 = vsel %vm447, %v3448, %v3450
    %v3452 = vrot.slane %v3233, 1
    %v3453 = vsel %vm447, %v3450, %v3452
    %v3454 = vrot.slane %v3234, 1
    %v3455 = vsel %vm447, %v3452, %v3454
    %v3456 = vrot.slane %v3235, 1
    %v3457 = vsel %vm447, %v3454, %v3456
    %v3458 = vrot.slane %v3236, 1
    %v3459 = vsel %vm447, %v3456, %v3458
    %v3460 = vrot.slane %v3237, 1
    %v3461 = vsel %vm447, %v3458, %v3460
    %v3462 = vrot.slane %v3238, 1
    %v3463 = vsel %vm447, %v3460, %v3462
    %v3464 = vrot.slane %v3239, 1
    %v3465 = vsel %vm447, %v3462, %v3464
    %v3466 = vrot.slane %v3240, 1
    %v3467 = vsel %vm447, %v3464, %v3466
    %v3468 = vrot.slane %v3241, 1
    %v3469 = vsel %vm447, %v3466, %v3468
    %v3470 = vrot.slane %v3242, 1
    %v3471 = vsel %vm447, %v3468, %v3470
    %v3472 = vrot.slane %v3243, 1
    %v3473 = vsel %vm447, %v3470, %v3472
    %v3474 = vrot.slane %v3244, 1
    %v3475 = vsel %vm447, %v3472, %v3474
    %v3476 = vrot.slane %v3245, 1
    %v3477 = vsel %vm447, %v3474, %v3476
    %v3478 = vrot.slane %v3246, 1
    %v3479 = vsel %vm447, %v3476, %v3478
    %v3480 = vrot.slane %v3247, 1
    %v3481 = vsel %vm447, %v3478, %v3480
    %v3482 = vrot.slane %v3248, 1
    %v3483 = vsel %vm447, %v3480, %v3482
    %v3484 = vrot.slane %v3249, 1
    %v3485 = vsel %vm447, %v3482, %v3484
    %v3486 = vrot.slane %v3250, 1
    %v3487 = vsel %vm447, %v3484, %v3486
    %v3488 = vrot.slane %v3251, 1
    %v3489 = vsel %vm447, %v3486, %v3488
    %v3490 = vrot.slane %v3252, 1
    %v3491 = vsel %vm447, %v3488, %v3490
    %v3492 = vrot.slane %v3253, 1
    %v3493 = vsel %vm447, %v3490, %v3492
    %v3494 = vrot.slane %v3254, 1
    %v3495 = vsel %vm447, %v3492, %v3494
    %v3496 = vrot.slane %v3255, 1
    %v3497 = vsel %vm447, %v3494, %v3496
    %v3498 = vrot.slane %v3256, 1
    %v3499 = vsel %vm447, %v3496, %v3498
    %v3500 = vrot.slane %v3257, 1
    %v3501 = vsel %vm447, %v3498, %v3500
    %v3502 = vrot.slane %v3258, 1
    %v3503 = vsel %vm447, %v3500, %v3502
    %v3504 = vrot.slane %v3259, 1
    %v3505 = vsel %vm447, %v3502, %v3504
    %v3506 = vrot.slane %v3260, 1
    %v3507 = vsel %vm447, %v3504, %v3506
    %v3508 = vrot.slane %v3261, 1
    %v3509 = vsel %vm447, %v3506, %v3508
    %v3510 = vrot.slane %v3262, 1
    %v3511 = vsel %vm447, %v3508, %v3510
    %v3512 = vrot.slane %v3263, 1
    %v3513 = vsel %vm447, %v3510, %v3512
    %v3514 = vrot.slane %v3264, 1
    %v3515 = vsel %vm447, %v3512, %v3514
    %v3516 = vrot.slane %v3265, 1
    %v3517 = vsel %vm447, %v3514, %v3516
    %v3518 = vrot.slane %v3266, 1
    %v3519 = vsel %vm447, %v3516, %v3518
    %v3520 = vrot.slane %v3267, 1
    %v3521 = vsel %vm447, %v3518, %v3520
    %v3522 = vrot.slane %v3268, 1
    %v3523 = vsel %vm447, %v3520, %v3522
    %v3524 = vrot.slane %v3269, 1
    %v3525 = vsel %vm447, %v3522, %v3524
    %v3526 = vrot.slane %v3270, 1
    %v3527 = vsel %vm447, %v3524, %v3526
    %v3528 = vrot.slane %v3271, 1
    %v3529 = vsel %vm447, %v3526, %v3528
    %v3530 = vrot.slane %v3272, 1
    %v3531 = vsel %vm447, %v3528, %v3530
    %v3532 = vrot.slane %v3273, 1
    %v3533 = vsel %vm447, %v3530, %v3532
    %v3534 = vrot.slane %v3274, 1
    %v3535 = vsel %vm447, %v3532, %v3534
    %v3536 = vrot.slane %v3275, 1
    %v3537 = vsel %vm447, %v3534, %v3536
    %v3538 = vrot.slane %v3276, 1
    %v3539 = vsel %vm447, %v3536, %v3538
    %v3540 = vrot.slane %v3277, 1
    %v3541 = vsel %vm447, %v3538, %v3540
    %v3542 = vrot.slane %v3278, 1
    %v3543 = vsel %vm447, %v3540, %v3542
    %v3544 = vrot.slane %v3279, 1
    %v3545 = vsel %vm447, %v3542, %v3544
    %v3546 = vrot.slane %v3280, 1
    %v3547 = vsel %vm447, %v3544, %v3546
    %v3548 = vrot.slane %v3281, 1
    %v3549 = vsel %vm447, %v3546, %v3548
    %v3550 = vrot.slane %v3282, 1
    %v3551 = vsel %vm447, %v3548, %v3550
    %v3552 = vrot.slane %v3283, 1
    %v3553 = vsel %vm447, %v3550, %v3552
    %v3554 = vrot.slane %v3284, 1
    %v3555 = vsel %vm447, %v3552, %v3554
    %v3556 = vrot.slane %v3285, 1
    %v3557 = vsel %vm447, %v3554, %v3556
    %v3649 = vadd.f32 %v3103, %v3379
    %v3650 = vadd.f32 %v3104, %v3381
    %v3651 = vadd.f32 %v3105, %v3383
    %v3652 = vadd.f32 %v3106, %v3385
    %v3653 = vadd.f32 %v3107, %v3387
    %v3654 = vadd.f32 %v3108, %v3389
    %v3655 = vadd.f32 %v3109, %v3391
    %v3656 = vadd.f32 %v3110, %v3393
    %v3657 = vadd.f32 %v3111, %v3395
    %v3658 = vadd.f32 %v3112, %v3397
    %v3659 = vadd.f32 %v3113, %v3399
    %v3660 = vadd.f32 %v3114, %v3401
    %v3661 = vadd.f32 %v3115, %v3403
    %v3662 = vadd.f32 %v3116, %v3405
    %v3663 = vadd.f32 %v3117, %v3407
    %v3664 = vadd.f32 %v3118, %v3409
    %v3665 = vadd.f32 %v3119, %v3411
    %v3666 = vadd.f32 %v3120, %v3413
    %v3667 = vadd.f32 %v3121, %v3415
    %v3668 = vadd.f32 %v3122, %v3417
    %v3669 = vadd.f32 %v3123, %v3419
    %v3670 = vadd.f32 %v3124, %v3421
    %v3671 = vadd.f32 %v3125, %v3423
    %v3672 = vadd.f32 %v3126, %v3425
    %v3673 = vadd.f32 %v3127, %v3427
    %v3674 = vadd.f32 %v3128, %v3429
    %v3675 = vadd.f32 %v3129, %v3431
    %v3676 = vadd.f32 %v3130, %v3433
    %v3677 = vadd.f32 %v3131, %v3435
    %v3678 = vadd.f32 %v3132, %v3437
    %v3679 = vadd.f32 %v3133, %v3439
    %v3680 = vadd.f32 %v3134, %v3441
    %v3681 = vadd.f32 %v3135, %v3443
    %v3682 = vadd.f32 %v3136, %v3445
    %v3683 = vadd.f32 %v3137, %v3447
    %v3684 = vadd.f32 %v3138, %v3449
    %v3685 = vadd.f32 %v3139, %v3451
    %v3686 = vadd.f32 %v3140, %v3453
    %v3687 = vadd.f32 %v3141, %v3455
    %v3688 = vadd.f32 %v3142, %v3457
    %v3689 = vadd.f32 %v3143, %v3459
    %v3690 = vadd.f32 %v3144, %v3461
    %v3691 = vadd.f32 %v3145, %v3463
    %v3692 = vadd.f32 %v3146, %v3465
    %v3693 = vadd.f32 %v3147, %v3467
    %v3694 = vadd.f32 %v3148, %v3469
    %v3695 = vadd.f32 %v3149, %v3471
    %v3696 = vadd.f32 %v3150, %v3473
    %v3697 = vadd.f32 %v3151, %v3475
    %v3698 = vadd.f32 %v3152, %v3477
    %v3699 = vadd.f32 %v3153, %v3479
    %v3700 = vadd.f32 %v3154, %v3481
    %v3701 = vadd.f32 %v3155, %v3483
    %v3702 = vadd.f32 %v3156, %v3485
    %v3703 = vadd.f32 %v3157, %v3487
    %v3704 = vadd.f32 %v3158, %v3489
    %v3705 = vadd.f32 %v3159, %v3491
    %v3706 = vadd.f32 %v3160, %v3493
    %v3707 = vadd.f32 %v3161, %v3495
    %v3708 = vadd.f32 %v3162, %v3497
    %v3709 = vadd.f32 %v3163, %v3499
    %v3710 = vadd.f32 %v3164, %v3501
    %v3711 = vadd.f32 %v3165, %v3503
    %v3712 = vadd.f32 %v3166, %v3505
    %v3713 = vadd.f32 %v3167, %v3507
    %v3714 = vadd.f32 %v3168, %v3509
    %v3715 = vadd.f32 %v3169, %v3511
    %v3716 = vadd.f32 %v3170, %v3513
    %v3717 = vadd.f32 %v3171, %v3515
    %v3718 = vadd.f32 %v3172, %v3517
    %v3719 = vadd.f32 %v3173, %v3519
    %v3720 = vadd.f32 %v3174, %v3521
    %v3721 = vadd.f32 %v3175, %v3523
    %v3722 = vadd.f32 %v3176, %v3525
    %v3723 = vadd.f32 %v3177, %v3527
    %v3724 = vadd.f32 %v3178, %v3529
    %v3725 = vadd.f32 %v3179, %v3531
    %v3726 = vadd.f32 %v3180, %v3533
    %v3727 = vadd.f32 %v3181, %v3535
    %v3728 = vadd.f32 %v3182, %v3537
    %v3729 = vadd.f32 %v3183, %v3539
    %v3730 = vadd.f32 %v3184, %v3541
    %v3731 = vadd.f32 %v3185, %v3543
    %v3732 = vadd.f32 %v3186, %v3545
    %v3733 = vadd.f32 %v3187, %v3547
    %v3734 = vadd.f32 %v3188, %v3549
    %v3735 = vadd.f32 %v3189, %v3551
    %v3736 = vadd.f32 %v3190, %v3553
    %v3737 = vadd.f32 %v3191, %v3555
    %v3738 = vadd.f32 %v3192, %v3557
    %v3739 = vadd.f32 %v3193, %v3556
    %v3740 = vstv %s171
    %v3741 = vmul.f32 %v3740, %v72
    %v3742 = vmul.f32 %v3740, %v73
    %v3743 = vmul.f32 %v3740, %v74
    %v3744 = vmul.f32 %v3740, %v75
    %v3745 = vmul.f32 %v3740, %v76
    %v3746 = vmul.f32 %v3740, %v77
    %v3747 = vmul.f32 %v3740, %v78
    %v3748 = vmul.f32 %v3740, %v79
    %v3749 = vmul.f32 %v3740, %v80
    %v3750 = vmul.f32 %v3740, %v81
    %v3751 = vmul.f32 %v3740, %v82
    %v3752 = vmul.f32 %v3740, %v83
    %v3753 = vmul.f32 %v3740, %v84
    %v3754 = vmul.f32 %v3740, %v85
    %v3755 = vmul.f32 %v3740, %v86
    %v3756 = vmul.f32 %v3740, %v87
    %v3757 = vmul.f32 %v3740, %v88
    %v3758 = vmul.f32 %v3740, %v89
    %v3759 = vmul.f32 %v3740, %v90
    %v3760 = vmul.f32 %v3740, %v91
    %v3761 = vmul.f32 %v3740, %v92
    %v3762 = vmul.f32 %v3740, %v93
    %v3763 = vmul.f32 %v3740, %v94
    %v3764 = vmul.f32 %v3740, %v95
    %v3765 = vmul.f32 %v3740, %v96
    %v3766 = vmul.f32 %v3740, %v97
    %v3767 = vmul.f32 %v3740, %v98
    %v3768 = vmul.f32 %v3740, %v99
    %v3769 = vmul.f32 %v3740, %v100
    %v3770 = vmul.f32 %v3740, %v101
    %v3771 = vmul.f32 %v3740, %v102
    %v3772 = vmul.f32 %v3740, %v103
    %v3773 = vmul.f32 %v3740, %v104
    %v3774 = vmul.f32 %v3740, %v105
    %v3775 = vmul.f32 %v3740, %v106
    %v3776 = vmul.f32 %v3740, %v107
    %v3777 = vmul.f32 %v3740, %v108
    %v3778 = vmul.f32 %v3740, %v109
    %v3779 = vmul.f32 %v3740, %v110
    %v3780 = vmul.f32 %v3740, %v111
    %v3781 = vmul.f32 %v3740, %v112
    %v3782 = vmul.f32 %v3740, %v113
    %v3783 = vmul.f32 %v3740, %v114
    %v3784 = vmul.f32 %v3740, %v115
    %v3785 = vmul.f32 %v3740, %v116
    %v3786 = vmul.f32 %v3740, %v117
    %v3787 = vmul.f32 %v3740, %v118
    %v3788 = vmul.f32 %v3740, %v119
    %v3789 = vmul.f32 %v3740, %v120
    %v3790 = vmul.f32 %v3740, %v121
    %v3791 = vmul.f32 %v3740, %v122
    %v3792 = vmul.f32 %v3740, %v123
    %v3793 = vmul.f32 %v3740, %v124
    %v3794 = vmul.f32 %v3740, %v125
    %v3795 = vmul.f32 %v3740, %v126
    %v3796 = vmul.f32 %v3740, %v127
    %v3797 = vmul.f32 %v3740, %v128
    %v3798 = vmul.f32 %v3740, %v129
    %v3799 = vmul.f32 %v3740, %v130
    %v3800 = vmul.f32 %v3740, %v131
    %v3801 = vmul.f32 %v3740, %v132
    %v3802 = vmul.f32 %v3740, %v133
    %v3803 = vmul.f32 %v3740, %v134
    %v3804 = vmul.f32 %v3740, %v135
    %v3805 = vmul.f32 %v3740, %v136
    %v3806 = vmul.f32 %v3740, %v137
    %v3807 = vmul.f32 %v3740, %v138
    %v3808 = vmul.f32 %v3740, %v139
    %v3809 = vmul.f32 %v3740, %v140
    %v3810 = vmul.f32 %v3740, %v141
    %v3811 = vmul.f32 %v3740, %v142
    %v3812 = vmul.f32 %v3740, %v143
    %v3813 = vmul.f32 %v3740, %v144
    %v3814 = vmul.f32 %v3740, %v145
    %v3815 = vmul.f32 %v3740, %v146
    %v3816 = vmul.f32 %v3740, %v147
    %v3817 = vmul.f32 %v3740, %v148
    %v3818 = vmul.f32 %v3740, %v149
    %v3819 = vmul.f32 %v3740, %v150
    %v3820 = vmul.f32 %v3740, %v151
    %v3821 = vmul.f32 %v3740, %v152
    %v3822 = vmul.f32 %v3740, %v153
    %v3823 = vmul.f32 %v3740, %v154
    %v3824 = vmul.f32 %v3740, %v155
    %v3825 = vmul.f32 %v3740, %v156
    %v3826 = vmul.f32 %v3740, %v157
    %v3827 = vmul.f32 %v3740, %v158
    %v3828 = vmul.f32 %v3740, %v159
    %v3829 = vmul.f32 %v3740, %v160
    %v3830 = vmul.f32 %v3740, %v161
    %v3831 = vmul.f32 %v3740, %v162
    %v3923 = vrot.slane %v3741, 2
    %v3924 = vrot.slane %v3742, 2
    %v3925 = vsel %vm994, %v3923, %v3924
    %v3926 = vrot.slane %v3743, 2
    %v3927 = vsel %vm994, %v3924, %v3926
    %v3928 = vrot.slane %v3744, 2
    %v3929 = vsel %vm994, %v3926, %v3928
    %v3930 = vrot.slane %v3745, 2
    %v3931 = vsel %vm994, %v3928, %v3930
    %v3932 = vrot.slane %v3746, 2
    %v3933 = vsel %vm994, %v3930, %v3932
    %v3934 = vrot.slane %v3747, 2
    %v3935 = vsel %vm994, %v3932, %v3934
    %v3936 = vrot.slane %v3748, 2
    %v3937 = vsel %vm994, %v3934, %v3936
    %v3938 = vrot.slane %v3749, 2
    %v3939 = vsel %vm994, %v3936, %v3938
    %v3940 = vrot.slane %v3750, 2
    %v3941 = vsel %vm994, %v3938, %v3940
    %v3942 = vrot.slane %v3751, 2
    %v3943 = vsel %vm994, %v3940, %v3942
    %v3944 = vrot.slane %v3752, 2
    %v3945 = vsel %vm994, %v3942, %v3944
    %v3946 = vrot.slane %v3753, 2
    %v3947 = vsel %vm994, %v3944, %v3946
    %v3948 = vrot.slane %v3754, 2
    %v3949 = vsel %vm994, %v3946, %v3948
    %v3950 = vrot.slane %v3755, 2
    %v3951 = vsel %vm994, %v3948, %v3950
    %v3952 = vrot.slane %v3756, 2
    %v3953 = vsel %vm994, %v3950, %v3952
    %v3954 = vrot.slane %v3757, 2
    %v3955 = vsel %vm994, %v3952, %v3954
    %v3956 = vrot.slane %v3758, 2
    %v3957 = vsel %vm994, %v3954, %v3956
    %v3958 = vrot.slane %v3759, 2
    %v3959 = vsel %vm994, %v3956, %v3958
    %v3960 = vrot.slane %v3760, 2
    %v3961 = vsel %vm994, %v3958, %v3960
    %v3962 = vrot.slane %v3761, 2
    %v3963 = vsel %vm994, %v3960, %v3962
    %v3964 = vrot.slane %v3762, 2
    %v3965 = vsel %vm994, %v3962, %v3964
    %v3966 = vrot.slane %v3763, 2
    %v3967 = vsel %vm994, %v3964, %v3966
    %v3968 = vrot.slane %v3764, 2
    %v3969 = vsel %vm994, %v3966, %v3968
    %v3970 = vrot.slane %v3765, 2
    %v3971 = vsel %vm994, %v3968, %v3970
    %v3972 = vrot.slane %v3766, 2
    %v3973 = vsel %vm994, %v3970, %v3972
    %v3974 = vrot.slane %v3767, 2
    %v3975 = vsel %vm994, %v3972, %v3974
    %v3976 = vrot.slane %v3768, 2
    %v3977 = vsel %vm994, %v3974, %v3976
    %v3978 = vrot.slane %v3769, 2
    %v3979 = vsel %vm994, %v3976, %v3978
    %v3980 = vrot.slane %v3770, 2
    %v3981 = vsel %vm994, %v3978, %v3980
    %v3982 = vrot.slane %v3771, 2
    %v3983 = vsel %vm994, %v3980, %v3982
    %v3984 = vrot.slane %v3772, 2
    %v3985 = vsel %vm994, %v3982, %v3984
    %v3986 = vrot.slane %v3773, 2
    %v3987 = vsel %vm994, %v3984, %v3986
    %v3988 = vrot.slane %v3774, 2
    %v3989 = vsel %vm994, %v3986, %v3988
    %v3990 = vrot.slane %v3775, 2
    %v3991 = vsel %vm994, %v3988, %v3990
    %v3992 = vrot.slane %v3776, 2
    %v3993 = vsel %vm994, %v3990, %v3992
    %v3994 = vrot.slane %v3777, 2
    %v3995 = vsel %vm994, %v3992, %v3994
    %v3996 = vrot.slane %v3778, 2
    %v3997 = vsel %vm994, %v3994, %v3996
    %v3998 = vrot.slane %v3779, 2
    %v3999 = vsel %vm994, %v3996, %v3998
    %v4000 = vrot.slane %v3780, 2
    %v4001 = vsel %vm994, %v3998, %v4000
    %v4002 = vrot.slane %v3781, 2
    %v4003 = vsel %vm994, %v4000, %v4002
    %v4004 = vrot.slane %v3782, 2
    %v4005 = vsel %vm994, %v4002, %v4004
    %v4006 = vrot.slane %v3783, 2
    %v4007 = vsel %vm994, %v4004, %v4006
    %v4008 = vrot.slane %v3784, 2
    %v4009 = vsel %vm994, %v4006, %v4008
    %v4010 = vrot.slane %v3785, 2
    %v4011 = vsel %vm994, %v4008, %v4010
    %v4012 = vrot.slane %v3786, 2
    %v4013 = vsel %vm994, %v4010, %v4012
    %v4014 = vrot.slane %v3787, 2
    %v4015 = vsel %vm994, %v4012, %v4014
    %v4016 = vrot.slane %v3788, 2
    %v4017 = vsel %vm994, %v4014, %v4016
    %v4018 = vrot.slane %v3789, 2
    %v4019 = vsel %vm994, %v4016, %v4018
    %v4020 = vrot.slane %v3790, 2
    %v4021 = vsel %vm994, %v4018, %v4020
    %v4022 = vrot.slane %v3791, 2
    %v4023 = vsel %vm994, %v4020, %v4022
    %v4024 = vrot.slane %v3792, 2
    %v4025 = vsel %vm994, %v4022, %v4024
    %v4026 = vrot.slane %v3793, 2
    %v4027 = vsel %vm994, %v4024, %v4026
    %v4028 = vrot.slane %v3794, 2
    %v4029 = vsel %vm994, %v4026, %v4028
    %v4030 = vrot.slane %v3795, 2
    %v4031 = vsel %vm994, %v4028, %v4030
    %v4032 = vrot.slane %v3796, 2
    %v4033 = vsel %vm994, %v4030, %v4032
    %v4034 = vrot.slane %v3797, 2
    %v4035 = vsel %vm994, %v4032, %v4034
    %v4036 = vrot.slane %v3798, 2
    %v4037 = vsel %vm994, %v4034, %v4036
    %v4038 = vrot.slane %v3799, 2
    %v4039 = vsel %vm994, %v4036, %v4038
    %v4040 = vrot.slane %v3800, 2
    %v4041 = vsel %vm994, %v4038, %v4040
    %v4042 = vrot.slane %v3801, 2
    %v4043 = vsel %vm994, %v4040, %v4042
    %v4044 = vrot.slane %v3802, 2
    %v4045 = vsel %vm994, %v4042, %v4044
    %v4046 = vrot.slane %v3803, 2
    %v4047 = vsel %vm994, %v4044, %v4046
    %v4048 = vrot.slane %v3804, 2
    %v4049 = vsel %vm994, %v4046, %v4048
    %v4050 = vrot.slane %v3805, 2
    %v4051 = vsel %vm994, %v4048, %v4050
    %v4052 = vrot.slane %v3806, 2
    %v4053 = vsel %vm994, %v4050, %v4052
    %v4054 = vrot.slane %v3807, 2
    %v4055 = vsel %vm994, %v4052, %v4054
    %v4056 = vrot.slane %v3808, 2
    %v4057 = vsel %vm994, %v4054, %v4056
    %v4058 = vrot.slane %v3809, 2
    %v4059 = vsel %vm994, %v4056, %v4058
    %v4060 = vrot.slane %v3810, 2
    %v4061 = vsel %vm994, %v4058, %v4060
    %v4062 = vrot.slane %v3811, 2
    %v4063 = vsel %vm994, %v4060, %v4062
    %v4064 = vrot.slane %v3812, 2
    %v4065 = vsel %vm994, %v4062, %v4064
    %v4066 = vrot.slane %v3813, 2
    %v4067 = vsel %vm994, %v4064, %v4066
    %v4068 = vrot.slane %v3814, 2
    %v4069 = vsel %vm994, %v4066, %v4068
    %v4070 = vrot.slane %v3815, 2
    %v4071 = vsel %vm994, %v4068, %v4070
    %v4072 = vrot.slane %v3816, 2
    %v4073 = vsel %vm994, %v4070, %v4072
    %v4074 = vrot.slane %v3817, 2
    %v4075 = vsel %vm994, %v4072, %v4074
    %v4076 = vrot.slane %v3818, 2
    %v4077 = vsel %vm994, %v4074, %v4076
    %v4078 = vrot.slane %v3819, 2
    %v4079 = vsel %vm994, %v4076, %v4078
    %v4080 = vrot.slane %v3820, 2
    %v4081 = vsel %vm994, %v4078, %v4080
    %v4082 = vrot.slane %v3821, 2
    %v4083 = vsel %vm994, %v4080, %v4082
    %v4084 = vrot.slane %v3822, 2
    %v4085 = vsel %vm994, %v4082, %v4084
    %v4086 = vrot.slane %v3823, 2
    %v4087 = vsel %vm994, %v4084, %v4086
    %v4088 = vrot.slane %v3824, 2
    %v4089 = vsel %vm994, %v4086, %v4088
    %v4090 = vrot.slane %v3825, 2
    %v4091 = vsel %vm994, %v4088, %v4090
    %v4092 = vrot.slane %v3826, 2
    %v4093 = vsel %vm994, %v4090, %v4092
    %v4094 = vrot.slane %v3827, 2
    %v4095 = vsel %vm994, %v4092, %v4094
    %v4096 = vrot.slane %v3828, 2
    %v4097 = vsel %vm994, %v4094, %v4096
    %v4098 = vrot.slane %v3829, 2
    %v4099 = vsel %vm994, %v4096, %v4098
    %v4100 = vrot.slane %v3830, 2
    %v4101 = vsel %vm994, %v4098, %v4100
    %v4102 = vrot.slane %v3831, 2
    %v4103 = vsel %vm994, %v4100, %v4102
    %v4195 = vadd.f32 %v3649, %v3925
    %v4196 = vadd.f32 %v3650, %v3927
    %v4197 = vadd.f32 %v3651, %v3929
    %v4198 = vadd.f32 %v3652, %v3931
    %v4199 = vadd.f32 %v3653, %v3933
    %v4200 = vadd.f32 %v3654, %v3935
    %v4201 = vadd.f32 %v3655, %v3937
    %v4202 = vadd.f32 %v3656, %v3939
    %v4203 = vadd.f32 %v3657, %v3941
    %v4204 = vadd.f32 %v3658, %v3943
    %v4205 = vadd.f32 %v3659, %v3945
    %v4206 = vadd.f32 %v3660, %v3947
    %v4207 = vadd.f32 %v3661, %v3949
    %v4208 = vadd.f32 %v3662, %v3951
    %v4209 = vadd.f32 %v3663, %v3953
    %v4210 = vadd.f32 %v3664, %v3955
    %v4211 = vadd.f32 %v3665, %v3957
    %v4212 = vadd.f32 %v3666, %v3959
    %v4213 = vadd.f32 %v3667, %v3961
    %v4214 = vadd.f32 %v3668, %v3963
    %v4215 = vadd.f32 %v3669, %v3965
    %v4216 = vadd.f32 %v3670, %v3967
    %v4217 = vadd.f32 %v3671, %v3969
    %v4218 = vadd.f32 %v3672, %v3971
    %v4219 = vadd.f32 %v3673, %v3973
    %v4220 = vadd.f32 %v3674, %v3975
    %v4221 = vadd.f32 %v3675, %v3977
    %v4222 = vadd.f32 %v3676, %v3979
    %v4223 = vadd.f32 %v3677, %v3981
    %v4224 = vadd.f32 %v3678, %v3983
    %v4225 = vadd.f32 %v3679, %v3985
    %v4226 = vadd.f32 %v3680, %v3987
    %v4227 = vadd.f32 %v3681, %v3989
    %v4228 = vadd.f32 %v3682, %v3991
    %v4229 = vadd.f32 %v3683, %v3993
    %v4230 = vadd.f32 %v3684, %v3995
    %v4231 = vadd.f32 %v3685, %v3997
    %v4232 = vadd.f32 %v3686, %v3999
    %v4233 = vadd.f32 %v3687, %v4001
    %v4234 = vadd.f32 %v3688, %v4003
    %v4235 = vadd.f32 %v3689, %v4005
    %v4236 = vadd.f32 %v3690, %v4007
    %v4237 = vadd.f32 %v3691, %v4009
    %v4238 = vadd.f32 %v3692, %v4011
    %v4239 = vadd.f32 %v3693, %v4013
    %v4240 = vadd.f32 %v3694, %v4015
    %v4241 = vadd.f32 %v3695, %v4017
    %v4242 = vadd.f32 %v3696, %v4019
    %v4243 = vadd.f32 %v3697, %v4021
    %v4244 = vadd.f32 %v3698, %v4023
    %v4245 = vadd.f32 %v3699, %v4025
    %v4246 = vadd.f32 %v3700, %v4027
    %v4247 = vadd.f32 %v3701, %v4029
    %v4248 = vadd.f32 %v3702, %v4031
    %v4249 = vadd.f32 %v3703, %v4033
    %v4250 = vadd.f32 %v3704, %v4035
    %v4251 = vadd.f32 %v3705, %v4037
    %v4252 = vadd.f32 %v3706, %v4039
    %v4253 = vadd.f32 %v3707, %v4041
    %v4254 = vadd.f32 %v3708, %v4043
    %v4255 = vadd.f32 %v3709, %v4045
    %v4256 = vadd.f32 %v3710, %v4047
    %v4257 = vadd.f32 %v3711, %v4049
    %v4258 = vadd.f32 %v3712, %v4051
    %v4259 = vadd.f32 %v3713, %v4053
    %v4260 = vadd.f32 %v3714, %v4055
    %v4261 = vadd.f32 %v3715, %v4057
    %v4262 = vadd.f32 %v3716, %v4059
    %v4263 = vadd.f32 %v3717, %v4061
    %v4264 = vadd.f32 %v3718, %v4063
    %v4265 = vadd.f32 %v3719, %v4065
    %v4266 = vadd.f32 %v3720, %v4067
    %v4267 = vadd.f32 %v3721, %v4069
    %v4268 = vadd.f32 %v3722, %v4071
    %v4269 = vadd.f32 %v3723, %v4073
    %v4270 = vadd.f32 %v3724, %v4075
    %v4271 = vadd.f32 %v3725, %v4077
    %v4272 = vadd.f32 %v3726, %v4079
    %v4273 = vadd.f32 %v3727, %v4081
    %v4274 = vadd.f32 %v3728, %v4083
    %v4275 = vadd.f32 %v3729, %v4085
    %v4276 = vadd.f32 %v3730, %v4087
    %v4277 = vadd.f32 %v3731, %v4089
    %v4278 = vadd.f32 %v3732, %v4091
    %v4279 = vadd.f32 %v3733, %v4093
    %v4280 = vadd.f32 %v3734, %v4095
    %v4281 = vadd.f32 %v3735, %v4097
    %v4282 = vadd.f32 %v3736, %v4099
    %v4283 = vadd.f32 %v3737, %v4101
    %v4284 = vadd.f32 %v3738, %v4103
    %v4285 = vadd.f32 %v3739, %v4102
    %s4286 = sld [smem:[#allocation2]]
    %v4287 = vstv %s4286
    %v4288 = vadd.f32 %v4195, %v4287
    %v4289 = vadd.f32 %v4196, %v4287
    %v4290 = vadd.f32 %v4197, %v4287
    %v4291 = vadd.f32 %v4198, %v4287
    %v4292 = vadd.f32 %v4199, %v4287
    %v4293 = vadd.f32 %v4200, %v4287
    %v4294 = vadd.f32 %v4201, %v4287
    %v4295 = vadd.f32 %v4202, %v4287
    %v4296 = vadd.f32 %v4203, %v4287
    %v4297 = vadd.f32 %v4204, %v4287
    %v4298 = vadd.f32 %v4205, %v4287
    %v4299 = vadd.f32 %v4206, %v4287
    %v4300 = vadd.f32 %v4207, %v4287
    %v4301 = vadd.f32 %v4208, %v4287
    %v4302 = vadd.f32 %v4209, %v4287
    %v4303 = vadd.f32 %v4210, %v4287
    %v4304 = vadd.f32 %v4211, %v4287
    %v4305 = vadd.f32 %v4212, %v4287
    %v4306 = vadd.f32 %v4213, %v4287
    %v4307 = vadd.f32 %v4214, %v4287
    %v4308 = vadd.f32 %v4215, %v4287
    %v4309 = vadd.f32 %v4216, %v4287
    %v4310 = vadd.f32 %v4217, %v4287
    %v4311 = vadd.f32 %v4218, %v4287
    %v4312 = vadd.f32 %v4219, %v4287
    %v4313 = vadd.f32 %v4220, %v4287
    %v4314 = vadd.f32 %v4221, %v4287
    %v4315 = vadd.f32 %v4222, %v4287
    %v4316 = vadd.f32 %v4223, %v4287
    %v4317 = vadd.f32 %v4224, %v4287
    %v4318 = vadd.f32 %v4225, %v4287
    %v4319 = vadd.f32 %v4226, %v4287
    %v4320 = vadd.f32 %v4227, %v4287
    %v4321 = vadd.f32 %v4228, %v4287
    %v4322 = vadd.f32 %v4229, %v4287
    %v4323 = vadd.f32 %v4230, %v4287
    %v4324 = vadd.f32 %v4231, %v4287
    %v4325 = vadd.f32 %v4232, %v4287
    %v4326 = vadd.f32 %v4233, %v4287
    %v4327 = vadd.f32 %v4234, %v4287
    %v4328 = vadd.f32 %v4235, %v4287
    %v4329 = vadd.f32 %v4236, %v4287
    %v4330 = vadd.f32 %v4237, %v4287
    %v4331 = vadd.f32 %v4238, %v4287
    %v4332 = vadd.f32 %v4239, %v4287
    %v4333 = vadd.f32 %v4240, %v4287
    %v4334 = vadd.f32 %v4241, %v4287
    %v4335 = vadd.f32 %v4242, %v4287
    %v4336 = vadd.f32 %v4243, %v4287
    %v4337 = vadd.f32 %v4244, %v4287
    %v4338 = vadd.f32 %v4245, %v4287
    %v4339 = vadd.f32 %v4246, %v4287
    %v4340 = vadd.f32 %v4247, %v4287
    %v4341 = vadd.f32 %v4248, %v4287
    %v4342 = vadd.f32 %v4249, %v4287
    %v4343 = vadd.f32 %v4250, %v4287
    %v4344 = vadd.f32 %v4251, %v4287
    %v4345 = vadd.f32 %v4252, %v4287
    %v4346 = vadd.f32 %v4253, %v4287
    %v4347 = vadd.f32 %v4254, %v4287
    %v4348 = vadd.f32 %v4255, %v4287
    %v4349 = vadd.f32 %v4256, %v4287
    %v4350 = vadd.f32 %v4257, %v4287
    %v4351 = vadd.f32 %v4258, %v4287
    %v4352 = vadd.f32 %v4259, %v4287
    %v4353 = vadd.f32 %v4260, %v4287
    %v4354 = vadd.f32 %v4261, %v4287
    %v4355 = vadd.f32 %v4262, %v4287
    %v4356 = vadd.f32 %v4263, %v4287
    %v4357 = vadd.f32 %v4264, %v4287
    %v4358 = vadd.f32 %v4265, %v4287
    %v4359 = vadd.f32 %v4266, %v4287
    %v4360 = vadd.f32 %v4267, %v4287
    %v4361 = vadd.f32 %v4268, %v4287
    %v4362 = vadd.f32 %v4269, %v4287
    %v4363 = vadd.f32 %v4270, %v4287
    %v4364 = vadd.f32 %v4271, %v4287
    %v4365 = vadd.f32 %v4272, %v4287
    %v4366 = vadd.f32 %v4273, %v4287
    %v4367 = vadd.f32 %v4274, %v4287
    %v4368 = vadd.f32 %v4275, %v4287
    %v4369 = vadd.f32 %v4276, %v4287
    %v4370 = vadd.f32 %v4277, %v4287
    %v4371 = vadd.f32 %v4278, %v4287
    %v4372 = vadd.f32 %v4279, %v4287
    %v4373 = vadd.f32 %v4280, %v4287
    %v4374 = vadd.f32 %v4281, %v4287
    %v4375 = vadd.f32 %v4282, %v4287
    %v4376 = vadd.f32 %v4283, %v4287
    %v4377 = vadd.f32 %v4284, %v4287
    %v4378 = vadd.f32 %v4285, %v4287
    %v4467 = vrot.slane %v4288, 1
    %v4468 = vrot.slane %v4289, 1
    %v4469 = vsel %vm447, %v4467, %v4468
    %v4470 = vrot.slane %v4290, 1
    %v4471 = vsel %vm447, %v4468, %v4470
    %v4472 = vrot.slane %v4291, 1
    %v4473 = vsel %vm447, %v4470, %v4472
    %v4474 = vrot.slane %v4292, 1
    %v4475 = vsel %vm447, %v4472, %v4474
    %v4476 = vrot.slane %v4293, 1
    %v4477 = vsel %vm447, %v4474, %v4476
    %v4478 = vrot.slane %v4294, 1
    %v4479 = vsel %vm447, %v4476, %v4478
    %v4480 = vrot.slane %v4295, 1
    %v4481 = vsel %vm447, %v4478, %v4480
    %v4482 = vrot.slane %v4296, 1
    %v4483 = vsel %vm447, %v4480, %v4482
    %v4484 = vrot.slane %v4297, 1
    %v4485 = vsel %vm447, %v4482, %v4484
    %v4486 = vrot.slane %v4298, 1
    %v4487 = vsel %vm447, %v4484, %v4486
    %v4488 = vrot.slane %v4299, 1
    %v4489 = vsel %vm447, %v4486, %v4488
    %v4490 = vrot.slane %v4300, 1
    %v4491 = vsel %vm447, %v4488, %v4490
    %v4492 = vrot.slane %v4301, 1
    %v4493 = vsel %vm447, %v4490, %v4492
    %v4494 = vrot.slane %v4302, 1
    %v4495 = vsel %vm447, %v4492, %v4494
    %v4496 = vrot.slane %v4303, 1
    %v4497 = vsel %vm447, %v4494, %v4496
    %v4498 = vrot.slane %v4304, 1
    %v4499 = vsel %vm447, %v4496, %v4498
    %v4500 = vrot.slane %v4305, 1
    %v4501 = vsel %vm447, %v4498, %v4500
    %v4502 = vrot.slane %v4306, 1
    %v4503 = vsel %vm447, %v4500, %v4502
    %v4504 = vrot.slane %v4307, 1
    %v4505 = vsel %vm447, %v4502, %v4504
    %v4506 = vrot.slane %v4308, 1
    %v4507 = vsel %vm447, %v4504, %v4506
    %v4508 = vrot.slane %v4309, 1
    %v4509 = vsel %vm447, %v4506, %v4508
    %v4510 = vrot.slane %v4310, 1
    %v4511 = vsel %vm447, %v4508, %v4510
    %v4512 = vrot.slane %v4311, 1
    %v4513 = vsel %vm447, %v4510, %v4512
    %v4514 = vrot.slane %v4312, 1
    %v4515 = vsel %vm447, %v4512, %v4514
    %v4516 = vrot.slane %v4313, 1
    %v4517 = vsel %vm447, %v4514, %v4516
    %v4518 = vrot.slane %v4314, 1
    %v4519 = vsel %vm447, %v4516, %v4518
    %v4520 = vrot.slane %v4315, 1
    %v4521 = vsel %vm447, %v4518, %v4520
    %v4522 = vrot.slane %v4316, 1
    %v4523 = vsel %vm447, %v4520, %v4522
    %v4524 = vrot.slane %v4317, 1
    %v4525 = vsel %vm447, %v4522, %v4524
    %v4526 = vrot.slane %v4318, 1
    %v4527 = vsel %vm447, %v4524, %v4526
    %v4528 = vrot.slane %v4319, 1
    %v4529 = vsel %vm447, %v4526, %v4528
    %v4530 = vrot.slane %v4320, 1
    %v4531 = vsel %vm447, %v4528, %v4530
    %v4532 = vrot.slane %v4321, 1
    %v4533 = vsel %vm447, %v4530, %v4532
    %v4534 = vrot.slane %v4322, 1
    %v4535 = vsel %vm447, %v4532, %v4534
    %v4536 = vrot.slane %v4323, 1
    %v4537 = vsel %vm447, %v4534, %v4536
    %v4538 = vrot.slane %v4324, 1
    %v4539 = vsel %vm447, %v4536, %v4538
    %v4540 = vrot.slane %v4325, 1
    %v4541 = vsel %vm447, %v4538, %v4540
    %v4542 = vrot.slane %v4326, 1
    %v4543 = vsel %vm447, %v4540, %v4542
    %v4544 = vrot.slane %v4327, 1
    %v4545 = vsel %vm447, %v4542, %v4544
    %v4546 = vrot.slane %v4328, 1
    %v4547 = vsel %vm447, %v4544, %v4546
    %v4548 = vrot.slane %v4329, 1
    %v4549 = vsel %vm447, %v4546, %v4548
    %v4550 = vrot.slane %v4330, 1
    %v4551 = vsel %vm447, %v4548, %v4550
    %v4552 = vrot.slane %v4331, 1
    %v4553 = vsel %vm447, %v4550, %v4552
    %v4554 = vrot.slane %v4332, 1
    %v4555 = vsel %vm447, %v4552, %v4554
    %v4556 = vrot.slane %v4333, 1
    %v4557 = vsel %vm447, %v4554, %v4556
    %v4558 = vrot.slane %v4334, 1
    %v4559 = vsel %vm447, %v4556, %v4558
    %v4560 = vrot.slane %v4335, 1
    %v4561 = vsel %vm447, %v4558, %v4560
    %v4562 = vrot.slane %v4336, 1
    %v4563 = vsel %vm447, %v4560, %v4562
    %v4564 = vrot.slane %v4337, 1
    %v4565 = vsel %vm447, %v4562, %v4564
    %v4566 = vrot.slane %v4338, 1
    %v4567 = vsel %vm447, %v4564, %v4566
    %v4568 = vrot.slane %v4339, 1
    %v4569 = vsel %vm447, %v4566, %v4568
    %v4570 = vrot.slane %v4340, 1
    %v4571 = vsel %vm447, %v4568, %v4570
    %v4572 = vrot.slane %v4341, 1
    %v4573 = vsel %vm447, %v4570, %v4572
    %v4574 = vrot.slane %v4342, 1
    %v4575 = vsel %vm447, %v4572, %v4574
    %v4576 = vrot.slane %v4343, 1
    %v4577 = vsel %vm447, %v4574, %v4576
    %v4578 = vrot.slane %v4344, 1
    %v4579 = vsel %vm447, %v4576, %v4578
    %v4580 = vrot.slane %v4345, 1
    %v4581 = vsel %vm447, %v4578, %v4580
    %v4582 = vrot.slane %v4346, 1
    %v4583 = vsel %vm447, %v4580, %v4582
    %v4584 = vrot.slane %v4347, 1
    %v4585 = vsel %vm447, %v4582, %v4584
    %v4586 = vrot.slane %v4348, 1
    %v4587 = vsel %vm447, %v4584, %v4586
    %v4588 = vrot.slane %v4349, 1
    %v4589 = vsel %vm447, %v4586, %v4588
    %v4590 = vrot.slane %v4350, 1
    %v4591 = vsel %vm447, %v4588, %v4590
    %v4592 = vrot.slane %v4351, 1
    %v4593 = vsel %vm447, %v4590, %v4592
    %v4594 = vrot.slane %v4352, 1
    %v4595 = vsel %vm447, %v4592, %v4594
    %v4596 = vrot.slane %v4353, 1
    %v4597 = vsel %vm447, %v4594, %v4596
    %v4598 = vrot.slane %v4354, 1
    %v4599 = vsel %vm447, %v4596, %v4598
    %v4600 = vrot.slane %v4355, 1
    %v4601 = vsel %vm447, %v4598, %v4600
    %v4602 = vrot.slane %v4356, 1
    %v4603 = vsel %vm447, %v4600, %v4602
    %v4604 = vrot.slane %v4357, 1
    %v4605 = vsel %vm447, %v4602, %v4604
    %v4606 = vrot.slane %v4358, 1
    %v4607 = vsel %vm447, %v4604, %v4606
    %v4608 = vrot.slane %v4359, 1
    %v4609 = vsel %vm447, %v4606, %v4608
    %v4610 = vrot.slane %v4360, 1
    %v4611 = vsel %vm447, %v4608, %v4610
    %v4612 = vrot.slane %v4361, 1
    %v4613 = vsel %vm447, %v4610, %v4612
    %v4614 = vrot.slane %v4362, 1
    %v4615 = vsel %vm447, %v4612, %v4614
    %v4616 = vrot.slane %v4363, 1
    %v4617 = vsel %vm447, %v4614, %v4616
    %v4618 = vrot.slane %v4364, 1
    %v4619 = vsel %vm447, %v4616, %v4618
    %v4620 = vrot.slane %v4365, 1
    %v4621 = vsel %vm447, %v4618, %v4620
    %v4622 = vrot.slane %v4366, 1
    %v4623 = vsel %vm447, %v4620, %v4622
    %v4624 = vrot.slane %v4367, 1
    %v4625 = vsel %vm447, %v4622, %v4624
    %v4626 = vrot.slane %v4368, 1
    %v4627 = vsel %vm447, %v4624, %v4626
    %v4628 = vrot.slane %v4369, 1
    %v4629 = vsel %vm447, %v4626, %v4628
    %v4630 = vrot.slane %v4370, 1
    %v4631 = vsel %vm447, %v4628, %v4630
    %v4632 = vrot.slane %v4371, 1
    %v4633 = vsel %vm447, %v4630, %v4632
    %v4634 = vrot.slane %v4372, 1
    %v4635 = vsel %vm447, %v4632, %v4634
    %v4636 = vrot.slane %v4373, 1
    %v4637 = vsel %vm447, %v4634, %v4636
    %v4638 = vrot.slane %v4374, 1
    %v4639 = vsel %vm447, %v4636, %v4638
    %v4640 = vrot.slane %v4375, 1
    %v4641 = vsel %vm447, %v4638, %v4640
    %v4730 = vmax.f32 %v4288, %v4469
    %v4731 = vmax.f32 %v4289, %v4471
    %v4732 = vmax.f32 %v4290, %v4473
    %v4733 = vmax.f32 %v4291, %v4475
    %v4734 = vmax.f32 %v4292, %v4477
    %v4735 = vmax.f32 %v4293, %v4479
    %v4736 = vmax.f32 %v4294, %v4481
    %v4737 = vmax.f32 %v4295, %v4483
    %v4738 = vmax.f32 %v4296, %v4485
    %v4739 = vmax.f32 %v4297, %v4487
    %v4740 = vmax.f32 %v4298, %v4489
    %v4741 = vmax.f32 %v4299, %v4491
    %v4742 = vmax.f32 %v4300, %v4493
    %v4743 = vmax.f32 %v4301, %v4495
    %v4744 = vmax.f32 %v4302, %v4497
    %v4745 = vmax.f32 %v4303, %v4499
    %v4746 = vmax.f32 %v4304, %v4501
    %v4747 = vmax.f32 %v4305, %v4503
    %v4748 = vmax.f32 %v4306, %v4505
    %v4749 = vmax.f32 %v4307, %v4507
    %v4750 = vmax.f32 %v4308, %v4509
    %v4751 = vmax.f32 %v4309, %v4511
    %v4752 = vmax.f32 %v4310, %v4513
    %v4753 = vmax.f32 %v4311, %v4515
    %v4754 = vmax.f32 %v4312, %v4517
    %v4755 = vmax.f32 %v4313, %v4519
    %v4756 = vmax.f32 %v4314, %v4521
    %v4757 = vmax.f32 %v4315, %v4523
    %v4758 = vmax.f32 %v4316, %v4525
    %v4759 = vmax.f32 %v4317, %v4527
    %v4760 = vmax.f32 %v4318, %v4529
    %v4761 = vmax.f32 %v4319, %v4531
    %v4762 = vmax.f32 %v4320, %v4533
    %v4763 = vmax.f32 %v4321, %v4535
    %v4764 = vmax.f32 %v4322, %v4537
    %v4765 = vmax.f32 %v4323, %v4539
    %v4766 = vmax.f32 %v4324, %v4541
    %v4767 = vmax.f32 %v4325, %v4543
    %v4768 = vmax.f32 %v4326, %v4545
    %v4769 = vmax.f32 %v4327, %v4547
    %v4770 = vmax.f32 %v4328, %v4549
    %v4771 = vmax.f32 %v4329, %v4551
    %v4772 = vmax.f32 %v4330, %v4553
    %v4773 = vmax.f32 %v4331, %v4555
    %v4774 = vmax.f32 %v4332, %v4557
    %v4775 = vmax.f32 %v4333, %v4559
    %v4776 = vmax.f32 %v4334, %v4561
    %v4777 = vmax.f32 %v4335, %v4563
    %v4778 = vmax.f32 %v4336, %v4565
    %v4779 = vmax.f32 %v4337, %v4567
    %v4780 = vmax.f32 %v4338, %v4569
    %v4781 = vmax.f32 %v4339, %v4571
    %v4782 = vmax.f32 %v4340, %v4573
    %v4783 = vmax.f32 %v4341, %v4575
    %v4784 = vmax.f32 %v4342, %v4577
    %v4785 = vmax.f32 %v4343, %v4579
    %v4786 = vmax.f32 %v4344, %v4581
    %v4787 = vmax.f32 %v4345, %v4583
    %v4788 = vmax.f32 %v4346, %v4585
    %v4789 = vmax.f32 %v4347, %v4587
    %v4790 = vmax.f32 %v4348, %v4589
    %v4791 = vmax.f32 %v4349, %v4591
    %v4792 = vmax.f32 %v4350, %v4593
    %v4793 = vmax.f32 %v4351, %v4595
    %v4794 = vmax.f32 %v4352, %v4597
    %v4795 = vmax.f32 %v4353, %v4599
    %v4796 = vmax.f32 %v4354, %v4601
    %v4797 = vmax.f32 %v4355, %v4603
    %v4798 = vmax.f32 %v4356, %v4605
    %v4799 = vmax.f32 %v4357, %v4607
    %v4800 = vmax.f32 %v4358, %v4609
    %v4801 = vmax.f32 %v4359, %v4611
    %v4802 = vmax.f32 %v4360, %v4613
    %v4803 = vmax.f32 %v4361, %v4615
    %v4804 = vmax.f32 %v4362, %v4617
    %v4805 = vmax.f32 %v4363, %v4619
    %v4806 = vmax.f32 %v4364, %v4621
    %v4807 = vmax.f32 %v4365, %v4623
    %v4808 = vmax.f32 %v4366, %v4625
    %v4809 = vmax.f32 %v4367, %v4627
    %v4810 = vmax.f32 %v4368, %v4629
    %v4811 = vmax.f32 %v4369, %v4631
    %v4812 = vmax.f32 %v4370, %v4633
    %v4813 = vmax.f32 %v4371, %v4635
    %v4814 = vmax.f32 %v4372, %v4637
    %v4815 = vmax.f32 %v4373, %v4639
    %v4816 = vmax.f32 %v4374, %v4641
    %v4817 = vmax.f32 %v4375, %v4640
    %v4821 = vrot.slane %v4376, 1
    %v4822 = vsel %vm447, %v4640, %v4821
    %v4823 = vrot.slane %v4377, 1
    %v4824 = vsel %vm447, %v4821, %v4823
    %v4825 = vrot.slane %v4378, 1
    %v4826 = vsel %vm447, %v4823, %v4825
    %v4831 = vmax.f32 %v4375, %v4822
    %v4832 = vmax.f32 %v4376, %v4824
    %v4833 = vmax.f32 %v4377, %v4826
    %v4834 = vmax.f32 %v4378, %v4825
    %v4923 = vrot.slane %v4733, 4
    %v4924 = vrot.slane %v4734, 4
    %v4925 = vsel %vm1543, %v4923, %v4924
    %v4926 = vrot.slane %v4735, 4
    %v4927 = vsel %vm1543, %v4924, %v4926
    %v4928 = vrot.slane %v4736, 4
    %v4929 = vsel %vm1543, %v4926, %v4928
    %v4930 = vrot.slane %v4737, 4
    %v4931 = vsel %vm1543, %v4928, %v4930
    %v4932 = vrot.slane %v4738, 4
    %v4933 = vsel %vm1543, %v4930, %v4932
    %v4934 = vrot.slane %v4739, 4
    %v4935 = vsel %vm1543, %v4932, %v4934
    %v4936 = vrot.slane %v4740, 4
    %v4937 = vsel %vm1543, %v4934, %v4936
    %v4938 = vrot.slane %v4741, 4
    %v4939 = vsel %vm1543, %v4936, %v4938
    %v4940 = vrot.slane %v4742, 4
    %v4941 = vsel %vm1543, %v4938, %v4940
    %v4942 = vrot.slane %v4743, 4
    %v4943 = vsel %vm1543, %v4940, %v4942
    %v4944 = vrot.slane %v4744, 4
    %v4945 = vsel %vm1543, %v4942, %v4944
    %v4946 = vrot.slane %v4745, 4
    %v4947 = vsel %vm1543, %v4944, %v4946
    %v4948 = vrot.slane %v4746, 4
    %v4949 = vsel %vm1543, %v4946, %v4948
    %v4950 = vrot.slane %v4747, 4
    %v4951 = vsel %vm1543, %v4948, %v4950
    %v4952 = vrot.slane %v4748, 4
    %v4953 = vsel %vm1543, %v4950, %v4952
    %v4954 = vrot.slane %v4749, 4
    %v4955 = vsel %vm1543, %v4952, %v4954
    %v4956 = vrot.slane %v4750, 4
    %v4957 = vsel %vm1543, %v4954, %v4956
    %v4958 = vrot.slane %v4751, 4
    %v4959 = vsel %vm1543, %v4956, %v4958
    %v4960 = vrot.slane %v4752, 4
    %v4961 = vsel %vm1543, %v4958, %v4960
    %v4962 = vrot.slane %v4753, 4
    %v4963 = vsel %vm1543, %v4960, %v4962
    %v4964 = vrot.slane %v4754, 4
    %v4965 = vsel %vm1543, %v4962, %v4964
    %v4966 = vrot.slane %v4755, 4
    %v4967 = vsel %vm1543, %v4964, %v4966
    %v4968 = vrot.slane %v4756, 4
    %v4969 = vsel %vm1543, %v4966, %v4968
    %v4970 = vrot.slane %v4757, 4
    %v4971 = vsel %vm1543, %v4968, %v4970
    %v4972 = vrot.slane %v4758, 4
    %v4973 = vsel %vm1543, %v4970, %v4972
    %v4974 = vrot.slane %v4759, 4
    %v4975 = vsel %vm1543, %v4972, %v4974
    %v4976 = vrot.slane %v4760, 4
    %v4977 = vsel %vm1543, %v4974, %v4976
    %v4978 = vrot.slane %v4761, 4
    %v4979 = vsel %vm1543, %v4976, %v4978
    %v4980 = vrot.slane %v4762, 4
    %v4981 = vsel %vm1543, %v4978, %v4980
    %v4982 = vrot.slane %v4763, 4
    %v4983 = vsel %vm1543, %v4980, %v4982
    %v4984 = vrot.slane %v4764, 4
    %v4985 = vsel %vm1543, %v4982, %v4984
    %v4986 = vrot.slane %v4765, 4
    %v4987 = vsel %vm1543, %v4984, %v4986
    %v4988 = vrot.slane %v4766, 4
    %v4989 = vsel %vm1543, %v4986, %v4988
    %v4990 = vrot.slane %v4767, 4
    %v4991 = vsel %vm1543, %v4988, %v4990
    %v4992 = vrot.slane %v4768, 4
    %v4993 = vsel %vm1543, %v4990, %v4992
    %v4994 = vrot.slane %v4769, 4
    %v4995 = vsel %vm1543, %v4992, %v4994
    %v4996 = vrot.slane %v4770, 4
    %v4997 = vsel %vm1543, %v4994, %v4996
    %v4998 = vrot.slane %v4771, 4
    %v4999 = vsel %vm1543, %v4996, %v4998
    %v5000 = vrot.slane %v4772, 4
    %v5001 = vsel %vm1543, %v4998, %v5000
    %v5002 = vrot.slane %v4773, 4
    %v5003 = vsel %vm1543, %v5000, %v5002
    %v5004 = vrot.slane %v4774, 4
    %v5005 = vsel %vm1543, %v5002, %v5004
    %v5006 = vrot.slane %v4775, 4
    %v5007 = vsel %vm1543, %v5004, %v5006
    %v5008 = vrot.slane %v4776, 4
    %v5009 = vsel %vm1543, %v5006, %v5008
    %v5010 = vrot.slane %v4777, 4
    %v5011 = vsel %vm1543, %v5008, %v5010
    %v5012 = vrot.slane %v4778, 4
    %v5013 = vsel %vm1543, %v5010, %v5012
    %v5014 = vrot.slane %v4779, 4
    %v5015 = vsel %vm1543, %v5012, %v5014
    %v5016 = vrot.slane %v4780, 4
    %v5017 = vsel %vm1543, %v5014, %v5016
    %v5018 = vrot.slane %v4781, 4
    %v5019 = vsel %vm1543, %v5016, %v5018
    %v5020 = vrot.slane %v4782, 4
    %v5021 = vsel %vm1543, %v5018, %v5020
    %v5022 = vrot.slane %v4783, 4
    %v5023 = vsel %vm1543, %v5020, %v5022
    %v5024 = vrot.slane %v4784, 4
    %v5025 = vsel %vm1543, %v5022, %v5024
    %v5026 = vrot.slane %v4785, 4
    %v5027 = vsel %vm1543, %v5024, %v5026
    %v5028 = vrot.slane %v4786, 4
    %v5029 = vsel %vm1543, %v5026, %v5028
    %v5030 = vrot.slane %v4787, 4
    %v5031 = vsel %vm1543, %v5028, %v5030
    %v5032 = vrot.slane %v4788, 4
    %v5033 = vsel %vm1543, %v5030, %v5032
    %v5034 = vrot.slane %v4789, 4
    %v5035 = vsel %vm1543, %v5032, %v5034
    %v5036 = vrot.slane %v4790, 4
    %v5037 = vsel %vm1543, %v5034, %v5036
    %v5038 = vrot.slane %v4791, 4
    %v5039 = vsel %vm1543, %v5036, %v5038
    %v5040 = vrot.slane %v4792, 4
    %v5041 = vsel %vm1543, %v5038, %v5040
    %v5042 = vrot.slane %v4793, 4
    %v5043 = vsel %vm1543, %v5040, %v5042
    %v5044 = vrot.slane %v4794, 4
    %v5045 = vsel %vm1543, %v5042, %v5044
    %v5046 = vrot.slane %v4795, 4
    %v5047 = vsel %vm1543, %v5044, %v5046
    %v5048 = vrot.slane %v4796, 4
    %v5049 = vsel %vm1543, %v5046, %v5048
    %v5050 = vrot.slane %v4797, 4
    %v5051 = vsel %vm1543, %v5048, %v5050
    %v5052 = vrot.slane %v4798, 4
    %v5053 = vsel %vm1543, %v5050, %v5052
    %v5054 = vrot.slane %v4799, 4
    %v5055 = vsel %vm1543, %v5052, %v5054
    %v5056 = vrot.slane %v4800, 4
    %v5057 = vsel %vm1543, %v5054, %v5056
    %v5058 = vrot.slane %v4801, 4
    %v5059 = vsel %vm1543, %v5056, %v5058
    %v5060 = vrot.slane %v4802, 4
    %v5061 = vsel %vm1543, %v5058, %v5060
    %v5062 = vrot.slane %v4803, 4
    %v5063 = vsel %vm1543, %v5060, %v5062
    %v5064 = vrot.slane %v4804, 4
    %v5065 = vsel %vm1543, %v5062, %v5064
    %v5066 = vrot.slane %v4805, 4
    %v5067 = vsel %vm1543, %v5064, %v5066
    %v5068 = vrot.slane %v4806, 4
    %v5069 = vsel %vm1543, %v5066, %v5068
    %v5070 = vrot.slane %v4807, 4
    %v5071 = vsel %vm1543, %v5068, %v5070
    %v5072 = vrot.slane %v4808, 4
    %v5073 = vsel %vm1543, %v5070, %v5072
    %v5074 = vrot.slane %v4809, 4
    %v5075 = vsel %vm1543, %v5072, %v5074
    %v5076 = vrot.slane %v4810, 4
    %v5077 = vsel %vm1543, %v5074, %v5076
    %v5078 = vrot.slane %v4811, 4
    %v5079 = vsel %vm1543, %v5076, %v5078
    %v5080 = vrot.slane %v4812, 4
    %v5081 = vsel %vm1543, %v5078, %v5080
    %v5082 = vrot.slane %v4813, 4
    %v5083 = vsel %vm1543, %v5080, %v5082
    %v5084 = vrot.slane %v4814, 4
    %v5085 = vsel %vm1543, %v5082, %v5084
    %v5086 = vrot.slane %v4815, 4
    %v5087 = vsel %vm1543, %v5084, %v5086
    %v5088 = vrot.slane %v4816, 4
    %v5089 = vsel %vm1543, %v5086, %v5088
    %v5090 = vrot.slane %v4831, 4
    %v5091 = vsel %vm1543, %v5088, %v5090
    %v5092 = vrot.slane %v4832, 4
    %v5093 = vsel %vm1543, %v5090, %v5092
    %v5094 = vrot.slane %v4833, 4
    %v5095 = vsel %vm1543, %v5092, %v5094
    %v5096 = vrot.slane %v4834, 4
    %v5097 = vsel %vm1543, %v5094, %v5096
    %v5186 = vmax.f32 %v4730, %v4925
    %v5187 = vmax.f32 %v4731, %v4927
    %v5188 = vmax.f32 %v4732, %v4929
    %v5189 = vmax.f32 %v4733, %v4931
    %v5190 = vmax.f32 %v4734, %v4933
    %v5191 = vmax.f32 %v4735, %v4935
    %v5192 = vmax.f32 %v4736, %v4937
    %v5193 = vmax.f32 %v4737, %v4939
    %v5194 = vmax.f32 %v4738, %v4941
    %v5195 = vmax.f32 %v4739, %v4943
    %v5196 = vmax.f32 %v4740, %v4945
    %v5197 = vmax.f32 %v4741, %v4947
    %v5198 = vmax.f32 %v4742, %v4949
    %v5199 = vmax.f32 %v4743, %v4951
    %v5200 = vmax.f32 %v4744, %v4953
    %v5201 = vmax.f32 %v4745, %v4955
    %v5202 = vmax.f32 %v4746, %v4957
    %v5203 = vmax.f32 %v4747, %v4959
    %v5204 = vmax.f32 %v4748, %v4961
    %v5205 = vmax.f32 %v4749, %v4963
    %v5206 = vmax.f32 %v4750, %v4965
    %v5207 = vmax.f32 %v4751, %v4967
    %v5208 = vmax.f32 %v4752, %v4969
    %v5209 = vmax.f32 %v4753, %v4971
    %v5210 = vmax.f32 %v4754, %v4973
    %v5211 = vmax.f32 %v4755, %v4975
    %v5212 = vmax.f32 %v4756, %v4977
    %v5213 = vmax.f32 %v4757, %v4979
    %v5214 = vmax.f32 %v4758, %v4981
    %v5215 = vmax.f32 %v4759, %v4983
    %v5216 = vmax.f32 %v4760, %v4985
    %v5217 = vmax.f32 %v4761, %v4987
    %v5218 = vmax.f32 %v4762, %v4989
    %v5219 = vmax.f32 %v4763, %v4991
    %v5220 = vmax.f32 %v4764, %v4993
    %v5221 = vmax.f32 %v4765, %v4995
    %v5222 = vmax.f32 %v4766, %v4997
    %v5223 = vmax.f32 %v4767, %v4999
    %v5224 = vmax.f32 %v4768, %v5001
    %v5225 = vmax.f32 %v4769, %v5003
    %v5226 = vmax.f32 %v4770, %v5005
    %v5227 = vmax.f32 %v4771, %v5007
    %v5228 = vmax.f32 %v4772, %v5009
    %v5229 = vmax.f32 %v4773, %v5011
    %v5230 = vmax.f32 %v4774, %v5013
    %v5231 = vmax.f32 %v4775, %v5015
    %v5232 = vmax.f32 %v4776, %v5017
    %v5233 = vmax.f32 %v4777, %v5019
    %v5234 = vmax.f32 %v4778, %v5021
    %v5235 = vmax.f32 %v4779, %v5023
    %v5236 = vmax.f32 %v4780, %v5025
    %v5237 = vmax.f32 %v4781, %v5027
    %v5238 = vmax.f32 %v4782, %v5029
    %v5239 = vmax.f32 %v4783, %v5031
    %v5240 = vmax.f32 %v4784, %v5033
    %v5241 = vmax.f32 %v4785, %v5035
    %v5242 = vmax.f32 %v4786, %v5037
    %v5243 = vmax.f32 %v4787, %v5039
    %v5244 = vmax.f32 %v4788, %v5041
    %v5245 = vmax.f32 %v4789, %v5043
    %v5246 = vmax.f32 %v4790, %v5045
    %v5247 = vmax.f32 %v4791, %v5047
    %v5248 = vmax.f32 %v4792, %v5049
    %v5249 = vmax.f32 %v4793, %v5051
    %v5250 = vmax.f32 %v4794, %v5053
    %v5251 = vmax.f32 %v4795, %v5055
    %v5252 = vmax.f32 %v4796, %v5057
    %v5253 = vmax.f32 %v4797, %v5059
    %v5254 = vmax.f32 %v4798, %v5061
    %v5255 = vmax.f32 %v4799, %v5063
    %v5256 = vmax.f32 %v4800, %v5065
    %v5257 = vmax.f32 %v4801, %v5067
    %v5258 = vmax.f32 %v4802, %v5069
    %v5259 = vmax.f32 %v4803, %v5071
    %v5260 = vmax.f32 %v4804, %v5073
    %v5261 = vmax.f32 %v4805, %v5075
    %v5262 = vmax.f32 %v4806, %v5077
    %v5263 = vmax.f32 %v4807, %v5079
    %v5264 = vmax.f32 %v4808, %v5081
    %v5265 = vmax.f32 %v4809, %v5083
    %v5266 = vmax.f32 %v4810, %v5085
    %v5267 = vmax.f32 %v4811, %v5087
    %v5268 = vmax.f32 %v4812, %v5089
    %v5269 = vmax.f32 %v4813, %v5091
    %v5270 = vmax.f32 %v4814, %v5093
    %v5271 = vmax.f32 %v4815, %v5095
    %v5272 = vmax.f32 %v4816, %v5097
    %v5273 = vmax.f32 %v4817, %v5096
    %v5274 = vld [vmem:[%s1] sm:$0xff]
    %v5275 = vld [vmem:[%s1 + $0x8] sm:$0xff]
    %v5276 = vld [vmem:[%s1 + $0x10] sm:$0xff]
    %v5277 = vld [vmem:[%s1 + $0x18] sm:$0xff]
    %v5278 = vld [vmem:[%s1 + $0x20] sm:$0xff]
    %v5279 = vld [vmem:[%s1 + $0x28] sm:$0xff]
    %v5280 = vld [vmem:[%s1 + $0x30] sm:$0xff]
    %v5281 = vld [vmem:[%s1 + $0x38] sm:$0xff]
    %v5282 = vld [vmem:[%s1 + $0x40] sm:$0xff]
    %v5283 = vld [vmem:[%s1 + $0x48] sm:$0xff]
    %v5284 = vld [vmem:[%s1 + $0x50] sm:$0xff]
    %v5285 = vld [vmem:[%s1 + $0x58] sm:$0xff]
    %v5286 = vld [vmem:[%s1 + $0x60] sm:$0xff]
    %v5287 = vld [vmem:[%s1 + $0x68] sm:$0xff]
    %v5288 = vld [vmem:[%s1 + $0x70] sm:$0xff]
    %v5289 = vld [vmem:[%s1 + $0x78] sm:$0xff]
    %v5290 = vld [vmem:[%s1 + $0x80] sm:$0xff]
    %v5291 = vld [vmem:[%s1 + $0x88] sm:$0xff]
    %v5292 = vld [vmem:[%s1 + $0x90] sm:$0xff]
    %v5293 = vld [vmem:[%s1 + $0x98] sm:$0xff]
    %v5294 = vld [vmem:[%s1 + $0xa0] sm:$0xff]
    %v5295 = vld [vmem:[%s1 + $0xa8] sm:$0xff]
    %v5296 = vld [vmem:[%s1 + $0xb0] sm:$0xff]
    %v5297 = vld [vmem:[%s1 + $0xb8] sm:$0xff]
    %v5298 = vld [vmem:[%s1 + $0xc0] sm:$0xff]
    %v5299 = vld [vmem:[%s1 + $0xc8] sm:$0xff]
    %v5300 = vld [vmem:[%s1 + $0xd0] sm:$0xff]
    %v5301 = vld [vmem:[%s1 + $0xd8] sm:$0xff]
    %v5302 = vld [vmem:[%s1 + $0xe0] sm:$0xff]
    %v5303 = vld [vmem:[%s1 + $0xe8] sm:$0xff]
    %v5304 = vld [vmem:[%s1 + $0xf0] sm:$0xff]
    %v5305 = vld [vmem:[%s1 + $0xf8] sm:$0xff]
    %v5306 = vld [vmem:[%s1 + $0x100] sm:$0xff]
    %v5307 = vld [vmem:[%s1 + $0x108] sm:$0xff]
    %v5308 = vld [vmem:[%s1 + $0x110] sm:$0xff]
    %v5309 = vld [vmem:[%s1 + $0x118] sm:$0xff]
    %v5310 = vld [vmem:[%s1 + $0x120] sm:$0xff]
    %v5311 = vld [vmem:[%s1 + $0x128] sm:$0xff]
    %v5312 = vld [vmem:[%s1 + $0x130] sm:$0xff]
    %v5313 = vld [vmem:[%s1 + $0x138] sm:$0xff]
    %v5314 = vld [vmem:[%s1 + $0x140] sm:$0xff]
    %v5315 = vld [vmem:[%s1 + $0x148] sm:$0xff]
    %v5316 = vld [vmem:[%s1 + $0x150] sm:$0xff]
    %v5317 = vld [vmem:[%s1 + $0x158] sm:$0xff]
    %v5318 = vld [vmem:[%s1 + $0x160] sm:$0xff]
    %v5319 = vld [vmem:[%s1 + $0x168] sm:$0xff]
    %v5320 = vld [vmem:[%s1 + $0x170] sm:$0xff]
    %v5321 = vld [vmem:[%s1 + $0x178] sm:$0xff]
    %v5322 = vld [vmem:[%s1 + $0x180] sm:$0xff]
    %v5323 = vld [vmem:[%s1 + $0x188] sm:$0xff]
    %v5324 = vld [vmem:[%s1 + $0x190] sm:$0xff]
    %v5325 = vld [vmem:[%s1 + $0x198] sm:$0xff]
    %v5326 = vld [vmem:[%s1 + $0x1a0] sm:$0xff]
    %v5327 = vld [vmem:[%s1 + $0x1a8] sm:$0xff]
    %v5328 = vld [vmem:[%s1 + $0x1b0] sm:$0xff]
    %v5329 = vld [vmem:[%s1 + $0x1b8] sm:$0xff]
    %v5330 = vld [vmem:[%s1 + $0x1c0] sm:$0xff]
    %v5331 = vld [vmem:[%s1 + $0x1c8] sm:$0xff]
    %v5332 = vld [vmem:[%s1 + $0x1d0] sm:$0xff]
    %v5333 = vld [vmem:[%s1 + $0x1d8] sm:$0xff]
    %v5334 = vld [vmem:[%s1 + $0x1e0] sm:$0xff]
    %v5335 = vld [vmem:[%s1 + $0x1e8] sm:$0xff]
    %v5336 = vld [vmem:[%s1 + $0x1f0] sm:$0xff]
    %v5337 = vld [vmem:[%s1 + $0x1f8] sm:$0xff]
    %v5338 = vld [vmem:[%s1 + $0x200] sm:$0xff]
    %v5339 = vld [vmem:[%s1 + $0x208] sm:$0xff]
    %v5340 = vld [vmem:[%s1 + $0x210] sm:$0xff]
    %v5341 = vld [vmem:[%s1 + $0x218] sm:$0xff]
    %v5342 = vld [vmem:[%s1 + $0x220] sm:$0xff]
    %v5343 = vld [vmem:[%s1 + $0x228] sm:$0xff]
    %v5344 = vld [vmem:[%s1 + $0x230] sm:$0xff]
    %v5345 = vld [vmem:[%s1 + $0x238] sm:$0xff]
    %v5346 = vld [vmem:[%s1 + $0x240] sm:$0xff]
    %v5347 = vld [vmem:[%s1 + $0x248] sm:$0xff]
    %v5348 = vld [vmem:[%s1 + $0x250] sm:$0xff]
    %v5349 = vld [vmem:[%s1 + $0x258] sm:$0xff]
    %v5350 = vld [vmem:[%s1 + $0x260] sm:$0xff]
    %v5351 = vld [vmem:[%s1 + $0x268] sm:$0xff]
    %v5352 = vld [vmem:[%s1 + $0x270] sm:$0xff]
    %v5353 = vld [vmem:[%s1 + $0x278] sm:$0xff]
    %v5354 = vld [vmem:[%s1 + $0x280] sm:$0xff]
    %v5355 = vld [vmem:[%s1 + $0x288] sm:$0xff]
    %v5356 = vld [vmem:[%s1 + $0x290] sm:$0xff]
    %v5357 = vld [vmem:[%s1 + $0x298] sm:$0xff]
    %v5358 = vld [vmem:[%s1 + $0x2a0] sm:$0xff]
    %v5359 = vld [vmem:[%s1 + $0x2a8] sm:$0xff]
    %v5360 = vld [vmem:[%s1 + $0x2b0] sm:$0xff]
    %v5361 = vld [vmem:[%s1 + $0x2b8] sm:$0xff]
    %v5362 = vld [vmem:[%s1 + $0x2c0] sm:$0xff]
    %v5363 = vld [vmem:[%s1 + $0x2c8] sm:$0xff]
    %v5364 = vld [vmem:[%s1 + $0x2d0] sm:$0xff]
    %v5365 = vld [vmem:[%s1 + $0x2d8] sm:$0xff]
    %v5366 = vld [vmem:[%s1 + $0x2e0] sm:$0xff]
    %v5367 = vld [vmem:[%s1 + $0x2e8] sm:$0xff]
    %v5368 = vld [vmem:[%s1 + $0x2f0] sm:$0xff]
    %v5369 = vld [vmem:[%s1 + $0x2f8] sm:$0xff]
    %v5370 = vld [vmem:[%s1 + $0x300] sm:$0xff]
    %v5371 = vld [vmem:[%s1 + $0x308] sm:$0xff]
    %v5372 = vld [vmem:[%s1 + $0x310] sm:$0xff]
    %v5373 = vld [vmem:[%s1 + $0x318] sm:$0xff]
    %v5374 = vld [vmem:[%s1 + $0x320] sm:$0xff]
    %v5375 = vld [vmem:[%s1 + $0x328] sm:$0xff]
    %v5376 = vld [vmem:[%s1 + $0x330] sm:$0xff]
    %v5377 = vld [vmem:[%s1 + $0x338] sm:$0xff]
    %v5378 = vld [vmem:[%s1 + $0x340] sm:$0xff]
    %v5379 = vld [vmem:[%s1 + $0x348] sm:$0xff]
    %v5380 = vld [vmem:[%s1 + $0x350] sm:$0xff]
    %v5381 = vld [vmem:[%s1 + $0x358] sm:$0xff]
    %v5382 = vld [vmem:[%s1 + $0x360] sm:$0xff]
    %v5383 = vld [vmem:[%s1 + $0x368] sm:$0xff]
    %v5384 = vld [vmem:[%s1 + $0x370] sm:$0xff]
    %v5385 = vld [vmem:[%s1 + $0x378] sm:$0xff]
    %v5386 = vld [vmem:[%s1 + $0x380] sm:$0xff]
    %v5387 = vld [vmem:[%s1 + $0x388] sm:$0xff]
    %v5388 = vld [vmem:[%s1 + $0x390] sm:$0xff]
    %v5389 = vld [vmem:[%s1 + $0x398] sm:$0xff]
    %v5390 = vld [vmem:[%s1 + $0x3a0] sm:$0xff]
    %v5391 = vld [vmem:[%s1 + $0x3a8] sm:$0xff]
    %v5392 = vld [vmem:[%s1 + $0x3b0] sm:$0xff]
    %v5393 = vld [vmem:[%s1 + $0x3b8] sm:$0xff]
    %v5394 = vld [vmem:[%s1 + $0x3c0] sm:$0xff]
    %v5395 = vld [vmem:[%s1 + $0x3c8] sm:$0xff]
    %v5396 = vld [vmem:[%s1 + $0x3d0] sm:$0xff]
    %v5397 = vld [vmem:[%s1 + $0x3d8] sm:$0xff]
    %v5398 = vld [vmem:[%s1 + $0x3e0] sm:$0xff]
    %v5399 = vld [vmem:[%s1 + $0x3e8] sm:$0xff]
    %v5400 = vld [vmem:[%s1 + $0x3f0] sm:$0x1]
    %v5401 = vld [vmem:[%s1 + $0x3f8] sm:$0x1]
    %v5402 = vld [vmem:[%s1 + $0x400] sm:$0x1]
    %v5403 = vld [vmem:[%s1 + $0x408] sm:$0x1]
    %v5404 = vld [vmem:[%s1 + $0x410] sm:$0x1]
    %v5405 = vld [vmem:[%s1 + $0x418] sm:$0x1]
    %vm5406 = vcmask 465920
    %v5408 = vsel %vm5406, %v5279, 0
    %v5411 = vsel %vm5406, %v5285, 0
    %v5414 = vsel %vm5406, %v5291, 0
    %v5417 = vsel %vm5406, %v5297, 0
    %v5420 = vsel %vm5406, %v5303, 0
    %v5423 = vsel %vm5406, %v5309, 0
    %v5426 = vsel %vm5406, %v5315, 0
    %v5429 = vsel %vm5406, %v5321, 0
    %v5432 = vsel %vm5406, %v5327, 0
    %v5435 = vsel %vm5406, %v5333, 0
    %v5438 = vsel %vm5406, %v5339, 0
    %v5441 = vsel %vm5406, %v5345, 0
    %v5444 = vsel %vm5406, %v5351, 0
    %v5447 = vsel %vm5406, %v5357, 0
    %v5450 = vsel %vm5406, %v5363, 0
    %v5453 = vsel %vm5406, %v5369, 0
    %v5456 = vsel %vm5406, %v5375, 0
    %v5459 = vsel %vm5406, %v5381, 0
    %v5462 = vsel %vm5406, %v5387, 0
    %v5465 = vsel %vm5406, %v5393, 0
    %v5468 = vsel %vm5406, %v5399, 0
    %v5471 = vsel %vm5406, %v5405, 0
    %vm5473 = vcmask 1040384
    %v5475 = vsel %vm5473, %v5273, 0
    %5477 = vmatprep.subr.mxu0 0.0
    %5478 = vmatpush1.msra.mxu0 %v5186
    %5479 = vmatprep.subr.mxu0 0.0
    %5480 = vmatpush1.msra.mxu0 %v5187
    %5481 = vmatprep.subr.mxu0 0.0
    %5482 = vmatpush1.msra.mxu0 %v5188
    %5483 = vmatprep.subr.mxu0 0.0
    %5484 = vmatpush1.msra.mxu0 %v5189
    %5485 = vmatprep.subr.mxu0 0.0
    %5486 = vmatpush1.msra.mxu0 %v5190
    %5487 = vmatprep.subr.mxu0 0.0
    %5488 = vmatpush1.msra.mxu0 %v5191
    %5489 = vmatprep.subr.mxu0 0.0
    %5490 = vmatpush1.msra.mxu0 %v5192
    %5491 = vmatprep.subr.mxu0 0.0
    %5492 = vmatpush1.msra.mxu0 %v5193
    %5493 = vmatprep.subr.mxu0 0.0
    %5494 = vmatpush1.msra.mxu0 %v5194
    %5495 = vmatprep.subr.mxu0 0.0
    %5496 = vmatpush1.msra.mxu0 %v5195
    %5497 = vmatprep.subr.mxu0 0.0
    %5498 = vmatpush1.msra.mxu0 %v5196
    %5499 = vmatprep.subr.mxu0 0.0
    %5500 = vmatpush1.msra.mxu0 %v5197
    %5501 = vmatprep.subr.mxu0 0.0
    %5502 = vmatpush1.msra.mxu0 %v5198
    %5503 = vmatprep.subr.mxu0 0.0
    %5504 = vmatpush1.msra.mxu0 %v5199
    %5505 = vmatprep.subr.mxu0 0.0
    %5506 = vmatpush1.msra.mxu0 %v5200
    %5507 = vmatprep.subr.mxu0 0.0
    %5508 = vmatpush1.msra.mxu0 %v5201
    %5509 = vmatprep.subr.mxu0 0.0
    %5510 = vmatpush1.msra.mxu0 %v5202
    %5511 = vmatprep.subr.mxu0 0.0
    %5512 = vmatpush1.msra.mxu0 %v5203
    %5513 = vmatprep.subr.mxu0 0.0
    %5514 = vmatpush1.msra.mxu0 %v5204
    %5515 = vmatprep.subr.mxu0 0.0
    %5516 = vmatpush1.msra.mxu0 %v5205
    %5517 = vmatprep.subr.mxu0 0.0
    %5518 = vmatpush1.msra.mxu0 %v5206
    %5519 = vmatprep.subr.mxu0 0.0
    %5520 = vmatpush1.msra.mxu0 %v5207
    %5521 = vmatprep.subr.mxu0 0.0
    %5522 = vmatpush1.msra.mxu0 %v5208
    %5523 = vmatprep.subr.mxu0 0.0
    %5524 = vmatpush1.msra.mxu0 %v5209
    %5525 = vmatprep.subr.mxu0 0.0
    %5526 = vmatpush1.msra.mxu0 %v5210
    %5527 = vmatprep.subr.mxu0 0.0
    %5528 = vmatpush1.msra.mxu0 %v5211
    %5529 = vmatprep.subr.mxu0 0.0
    %5530 = vmatpush1.msra.mxu0 %v5212
    %5531 = vmatprep.subr.mxu0 0.0
    %5532 = vmatpush1.msra.mxu0 %v5213
    %5533 = vmatprep.subr.mxu0 0.0
    %5534 = vmatpush1.msra.mxu0 %v5214
    %5535 = vmatprep.subr.mxu0 0.0
    %5536 = vmatpush1.msra.mxu0 %v5215
    %5537 = vmatprep.subr.mxu0 0.0
    %5538 = vmatpush1.msra.mxu0 %v5216
    %5539 = vmatprep.subr.mxu0 0.0
    %5540 = vmatpush1.msra.mxu0 %v5217
    %5541 = vmatprep.mubr.f32.mxu0 %v5275
    %5542 = vmatmul.mubr.f32.gmra.mrb[0].mxu0 %v5274
    %v5543 = vpop.f32.mrb[0].mxu0
    %v5544 = vadd.f32 0.0, %v5543
    %v5545 = vpop.f32.mrb[0].mxu0
    %5546 = vmatprep.mubr.f32.mxu0 %v5281
    %5547 = vmatmul.mubr.f32.gmra.mrb[0].mxu0 %v5280
    %v5548 = vpop.f32.mrb[0].mxu0
    %v5549 = vadd.f32 0.0, %v5548
    %v5550 = vpop.f32.mrb[0].mxu0
    %5551 = vmatprep.mubr.f32.mxu0 %v5287
    %5552 = vmatmul.mubr.f32.gmra.mrb[0].mxu0 %v5286
    %v5553 = vpop.f32.mrb[0].mxu0
    %v5554 = vadd.f32 0.0, %v5553
    %v5555 = vpop.f32.mrb[0].mxu0
    %5556 = vmatprep.mubr.f32.mxu0 %v5293
    %5557 = vmatmul.mubr.f32.gmra.mrb[0].mxu0 %v5292
    %v5558 = vpop.f32.mrb[0].mxu0
    %v5559 = vadd.f32 0.0, %v5558
    %v5560 = vpop.f32.mrb[0].mxu0
    %5561 = vmatprep.mubr.f32.mxu0 %v5299
    %5562 = vmatmul.mubr.f32.gmra.mrb[0].mxu0 %v5298
    %v5563 = vpop.f32.mrb[0].mxu0
    %v5564 = vadd.f32 0.0, %v5563
    %v5565 = vpop.f32.mrb[0].mxu0
    %5566 = vmatprep.mubr.f32.mxu0 %v5305
    %5567 = vmatmul.mubr.f32.gmra.mrb[0].mxu0 %v5304
    %v5568 = vpop.f32.mrb[0].mxu0
    %v5569 = vadd.f32 0.0, %v5568
    %v5570 = vpop.f32.mrb[0].mxu0
    %5571 = vmatprep.mubr.f32.mxu0 %v5311
    %5572 = vmatmul.mubr.f32.gmra.mrb[0].mxu0 %v5310
    %v5573 = vpop.f32.mrb[0].mxu0
    %v5574 = vadd.f32 0.0, %v5573
    %v5575 = vpop.f32.mrb[0].mxu0
    %5576 = vmatprep.mubr.f32.mxu0 %v5317
    %5577 = vmatmul.mubr.f32.gmra.mrb[0].mxu0 %v5316
    %v5578 = vpop.f32.mrb[0].mxu0
    %v5579 = vadd.f32 0.0, %v5578
    %v5580 = vpop.f32.mrb[0].mxu0
    %5581 = vmatprep.mubr.f32.mxu0 %v5323
    %5582 = vmatmul.mubr.f32.gmra.mrb[0].mxu0 %v5322
    %v5583 = vpop.f32.mrb[0].mxu0
    %v5584 = vadd.f32 0.0, %v5583
    %v5585 = vpop.f32.mrb[0].mxu0
    %5586 = vmatprep.mubr.f32.mxu0 %v5329
    %5587 = vmatmul.mubr.f32.gmra.mrb[0].mxu0 %v5328
    %v5588 = vpop.f32.mrb[0].mxu0
    %v5589 = vadd.f32 0.0, %v5588
    %v5590 = vpop.f32.mrb[0].mxu0
    %5591 = vmatprep.mubr.f32.mxu0 %v5335
    %5592 = vmatmul.mubr.f32.gmra.mrb[0].mxu0 %v5334
    %v5593 = vpop.f32.mrb[0].mxu0
    %v5594 = vadd.f32 0.0, %v5593
    %v5595 = vpop.f32.mrb[0].mxu0
    %5596 = vmatprep.mubr.f32.mxu0 %v5341
    %5597 = vmatmul.mubr.f32.gmra.mrb[0].mxu0 %v5340
    %v5598 = vpop.f32.mrb[0].mxu0
    %v5599 = vadd.f32 0.0, %v5598
    %v5600 = vpop.f32.mrb[0].mxu0
    %5601 = vmatprep.mubr.f32.mxu0 %v5347
    %5602 = vmatmul.mubr.f32.gmra.mrb[0].mxu0 %v5346
    %v5603 = vpop.f32.mrb[0].mxu0
    %v5604 = vadd.f32 0.0, %v5603
    %v5605 = vpop.f32.mrb[0].mxu0
    %5606 = vmatprep.mubr.f32.mxu0 %v5353
    %5607 = vmatmul.mubr.f32.gmra.mrb[0].mxu0 %v5352
    %v5608 = vpop.f32.mrb[0].mxu0
    %v5609 = vadd.f32 0.0, %v5608
    %v5610 = vpop.f32.mrb[0].mxu0
    %5611 = vmatprep.mubr.f32.mxu0 %v5359
    %5612 = vmatmul.mubr.f32.gmra.mrb[0].mxu0 %v5358
    %v5613 = vpop.f32.mrb[0].mxu0
    %v5614 = vadd.f32 0.0, %v5613
    %v5615 = vpop.f32.mrb[0].mxu0
    %5616 = vmatprep.mubr.f32.mxu0 %v5365
    %5617 = vmatmul.mubr.f32.gmra.mrb[0].mxu0 %v5364
    %v5618 = vpop.f32.mrb[0].mxu0
    %v5619 = vadd.f32 0.0, %v5618
    %v5620 = vpop.f32.mrb[0].mxu0
    %5621 = vmatprep.mubr.f32.mxu0 %v5371
    %5622 = vmatmul.mubr.f32.gmra.mrb[0].mxu0 %v5370
    %v5623 = vpop.f32.mrb[0].mxu0
    %v5624 = vadd.f32 0.0, %v5623
    %v5625 = vpop.f32.mrb[0].mxu0
    %5626 = vmatprep.mubr.f32.mxu0 %v5377
    %5627 = vmatmul.mubr.f32.gmra.mrb[0].mxu0 %v5376
    %v5628 = vpop.f32.mrb[0].mxu0
    %v5629 = vadd.f32 0.0, %v5628
    %v5630 = vpop.f32.mrb[0].mxu0
    %5631 = vmatprep.mubr.f32.mxu0 %v5383
    %5632 = vmatmul.mubr.f32.gmra.mrb[0].mxu0 %v5382
    %v5633 = vpop.f32.mrb[0].mxu0
    %v5634 = vadd.f32 0.0, %v5633
    %v5635 = vpop.f32.mrb[0].mxu0
    %5636 = vmatprep.mubr.f32.mxu0 %v5389
    %5637 = vmatmul.mubr.f32.gmra.mrb[0].mxu0 %v5388
    %v5638 = vpop.f32.mrb[0].mxu0
    %v5639 = vadd.f32 0.0, %v5638
    %v5640 = vpop.f32.mrb[0].mxu0
    %5641 = vmatprep.mubr.f32.mxu0 %v5395
    %5642 = vmatmul.mubr.f32.gmra.mrb[0].mxu0 %v5394
    %v5643 = vpop.f32.mrb[0].mxu0
    %v5644 = vpop.f32.mrb[0].mxu0
    %5645 = vmatprep.mubr.f32.mxu0 %v5401
    %5646 = vmatmul.mubr.f32.gmra.mrb[0].mxu0 %v5400
    %v5647 = vpop.f32.mrb[0].mxu0
    %v5648 = vpop.f32.mrb[0].mxu0
    %5649 = vdwg.mxu0
    %5650 = vmatprep.subr.mxu0 0.0
    %5651 = vmatpush1.msra.mxu0 %v5218
    %5652 = vmatprep.subr.mxu0 0.0
    %5653 = vmatpush1.msra.mxu0 %v5219
    %5654 = vmatprep.subr.mxu0 0.0
    %5655 = vmatpush1.msra.mxu0 %v5220
    %5656 = vmatprep.subr.mxu0 0.0
    %5657 = vmatpush1.msra.mxu0 %v5221
    %5658 = vmatprep.subr.mxu0 0.0
    %5659 = vmatpush1.msra.mxu0 %v5222
    %5660 = vmatprep.subr.mxu0 0.0
    %5661 = vmatpush1.msra.mxu0 %v5223
    %5662 = vmatprep.subr.mxu0 0.0
    %5663 = vmatpush1.msra.mxu0 %v5224
    %5664 = vmatprep.subr.mxu0 0.0
    %5665 = vmatpush1.msra.mxu0 %v5225
    %5666 = vmatprep.subr.mxu0 0.0
    %5667 = vmatpush1.msra.mxu0 %v5226
    %5668 = vmatprep.subr.mxu0 0.0
    %5669 = vmatpush1.msra.mxu0 %v5227
    %5670 = vmatprep.subr.mxu0 0.0
    %5671 = vmatpush1.msra.mxu0 %v5228
    %5672 = vmatprep.subr.mxu0 0.0
    %5673 = vmatpush1.msra.mxu0 %v5229
    %5674 = vmatprep.subr.mxu0 0.0
    %5675 = vmatpush1.msra.mxu0 %v5230
    %5676 = vmatprep.subr.mxu0 0.0
    %5677 = vmatpush1.msra.mxu0 %v5231
    %5678 = vmatprep.subr.mxu0 0.0
    %5679 = vmatpush1.msra.mxu0 %v5232
    %5680 = vmatprep.subr.mxu0 0.0
    %5681 = vmatpush1.msra.mxu0 %v5233
    %5682 = vmatprep.subr.mxu0 0.0
    %5683 = vmatpush1.msra.mxu0 %v5234
    %5684 = vmatprep.subr.mxu0 0.0
    %5685 = vmatpush1.msra.mxu0 %v5235
    %5686 = vmatprep.subr.mxu0 0.0
    %5687 = vmatpush1.msra.mxu0 %v5236
    %5688 = vmatprep.subr.mxu0 0.0
    %5689 = vmatpush1.msra.mxu0 %v5237
    %5690 = vmatprep.subr.mxu0 0.0
    %5691 = vmatpush1.msra.mxu0 %v5238
    %5692 = vmatprep.subr.mxu0 0.0
    %5693 = vmatpush1.msra.mxu0 %v5239
    %5694 = vmatprep.subr.mxu0 0.0
    %5695 = vmatpush1.msra.mxu0 %v5240
    %5696 = vmatprep.subr.mxu0 0.0
    %5697 = vmatpush1.msra.mxu0 %v5241
    %5698 = vmatprep.subr.mxu0 0.0
    %5699 = vmatpush1.msra.mxu0 %v5242
    %5700 = vmatprep.subr.mxu0 0.0
    %5701 = vmatpush1.msra.mxu0 %v5243
    %5702 = vmatprep.subr.mxu0 0.0
    %5703 = vmatpush1.msra.mxu0 %v5244
    %5704 = vmatprep.subr.mxu0 0.0
    %5705 = vmatpush1.msra.mxu0 %v5245
    %5706 = vmatprep.subr.mxu0 0.0
    %5707 = vmatpush1.msra.mxu0 %v5246
    %5708 = vmatprep.subr.mxu0 0.0
    %5709 = vmatpush1.msra.mxu0 %v5247
    %5710 = vmatprep.subr.mxu0 0.0
    %5711 = vmatpush1.msra.mxu0 %v5248
    %5712 = vmatprep.subr.mxu0 0.0
    %5713 = vmatpush1.msra.mxu0 %v5249
    %5714 = vmatprep.mubr.f32.mxu0 %v5277
    %5715 = vmatmul.mubr.f32.gmra.mrb[0].mxu0 %v5276
    %v5716 = vpop.f32.mrb[0].mxu0
    %v5717 = vadd.f32 %v5544, %v5716
    %v5718 = vpop.f32.mrb[0].mxu0
    %5719 = vmatprep.mubr.f32.mxu0 %v5283
    %5720 = vmatmul.mubr.f32.gmra.mrb[0].mxu0 %v5282
    %v5721 = vpop.f32.mrb[0].mxu0
    %v5722 = vadd.f32 %v5549, %v5721
    %v5723 = vpop.f32.mrb[0].mxu0
    %5724 = vmatprep.mubr.f32.mxu0 %v5289
    %5725 = vmatmul.mubr.f32.gmra.mrb[0].mxu0 %v5288
    %v5726 = vpop.f32.mrb[0].mxu0
    %v5727 = vadd.f32 %v5554, %v5726
    %v5728 = vpop.f32.mrb[0].mxu0
    %5729 = vmatprep.mubr.f32.mxu0 %v5295
    %5730 = vmatmul.mubr.f32.gmra.mrb[0].mxu0 %v5294
    %v5731 = vpop.f32.mrb[0].mxu0
    %v5732 = vadd.f32 %v5559, %v5731
    %v5733 = vpop.f32.mrb[0].mxu0
    %5734 = vmatprep.mubr.f32.mxu0 %v5301
    %5735 = vmatmul.mubr.f32.gmra.mrb[0].mxu0 %v5300
    %v5736 = vpop.f32.mrb[0].mxu0
    %v5737 = vadd.f32 %v5564, %v5736
    %v5738 = vpop.f32.mrb[0].mxu0
    %5739 = vmatprep.mubr.f32.mxu0 %v5307
    %5740 = vmatmul.mubr.f32.gmra.mrb[0].mxu0 %v5306
    %v5741 = vpop.f32.mrb[0].mxu0
    %v5742 = vadd.f32 %v5569, %v5741
    %v5743 = vpop.f32.mrb[0].mxu0
    %5744 = vmatprep.mubr.f32.mxu0 %v5313
    %5745 = vmatmul.mubr.f32.gmra.mrb[0].mxu0 %v5312
    %v5746 = vpop.f32.mrb[0].mxu0
    %v5747 = vadd.f32 %v5574, %v5746
    %v5748 = vpop.f32.mrb[0].mxu0
    %5749 = vmatprep.mubr.f32.mxu0 %v5319
    %5750 = vmatmul.mubr.f32.gmra.mrb[0].mxu0 %v5318
    %v5751 = vpop.f32.mrb[0].mxu0
    %v5752 = vadd.f32 %v5579, %v5751
    %v5753 = vpop.f32.mrb[0].mxu0
    %5754 = vmatprep.mubr.f32.mxu0 %v5325
    %5755 = vmatmul.mubr.f32.gmra.mrb[0].mxu0 %v5324
    %v5756 = vpop.f32.mrb[0].mxu0
    %v5757 = vadd.f32 %v5584, %v5756
    %v5758 = vpop.f32.mrb[0].mxu0
    %5759 = vmatprep.mubr.f32.mxu0 %v5331
    %5760 = vmatmul.mubr.f32.gmra.mrb[0].mxu0 %v5330
    %v5761 = vpop.f32.mrb[0].mxu0
    %v5762 = vadd.f32 %v5589, %v5761
    %v5763 = vpop.f32.mrb[0].mxu0
    %5764 = vmatprep.mubr.f32.mxu0 %v5337
    %5765 = vmatmul.mubr.f32.gmra.mrb[0].mxu0 %v5336
    %v5766 = vpop.f32.mrb[0].mxu0
    %v5767 = vadd.f32 %v5594, %v5766
    %v5768 = vpop.f32.mrb[0].mxu0
    %5769 = vmatprep.mubr.f32.mxu0 %v5343
    %5770 = vmatmul.mubr.f32.gmra.mrb[0].mxu0 %v5342
    %v5771 = vpop.f32.mrb[0].mxu0
    %v5772 = vadd.f32 %v5599, %v5771
    %v5773 = vpop.f32.mrb[0].mxu0
    %5774 = vmatprep.mubr.f32.mxu0 %v5349
    %5775 = vmatmul.mubr.f32.gmra.mrb[0].mxu0 %v5348
    %v5776 = vpop.f32.mrb[0].mxu0
    %v5777 = vadd.f32 %v5604, %v5776
    %v5778 = vpop.f32.mrb[0].mxu0
    %5779 = vmatprep.mubr.f32.mxu0 %v5355
    %5780 = vmatmul.mubr.f32.gmra.mrb[0].mxu0 %v5354
    %v5781 = vpop.f32.mrb[0].mxu0
    %v5782 = vadd.f32 %v5609, %v5781
    %v5783 = vpop.f32.mrb[0].mxu0
    %5784 = vmatprep.mubr.f32.mxu0 %v5361
    %5785 = vmatmul.mubr.f32.gmra.mrb[0].mxu0 %v5360
    %v5786 = vpop.f32.mrb[0].mxu0
    %v5787 = vadd.f32 %v5614, %v5786
    %v5788 = vpop.f32.mrb[0].mxu0
    %5789 = vmatprep.mubr.f32.mxu0 %v5367
    %5790 = vmatmul.mubr.f32.gmra.mrb[0].mxu0 %v5366
    %v5791 = vpop.f32.mrb[0].mxu0
    %v5792 = vadd.f32 %v5619, %v5791
    %v5793 = vpop.f32.mrb[0].mxu0
    %5794 = vmatprep.mubr.f32.mxu0 %v5373
    %5795 = vmatmul.mubr.f32.gmra.mrb[0].mxu0 %v5372
    %v5796 = vpop.f32.mrb[0].mxu0
    %v5797 = vadd.f32 %v5624, %v5796
    %v5798 = vpop.f32.mrb[0].mxu0
    %5799 = vmatprep.mubr.f32.mxu0 %v5379
    %5800 = vmatmul.mubr.f32.gmra.mrb[0].mxu0 %v5378
    %v5801 = vpop.f32.mrb[0].mxu0
    %v5802 = vadd.f32 %v5629, %v5801
    %v5803 = vpop.f32.mrb[0].mxu0
    %5804 = vmatprep.mubr.f32.mxu0 %v5385
    %5805 = vmatmul.mubr.f32.gmra.mrb[0].mxu0 %v5384
    %v5806 = vpop.f32.mrb[0].mxu0
    %v5807 = vadd.f32 %v5634, %v5806
    %v5808 = vpop.f32.mrb[0].mxu0
    %5809 = vmatprep.mubr.f32.mxu0 %v5391
    %5810 = vmatmul.mubr.f32.gmra.mrb[0].mxu0 %v5390
    %v5811 = vpop.f32.mrb[0].mxu0
    %v5812 = vadd.f32 %v5639, %v5811
    %v5813 = vpop.f32.mrb[0].mxu0
    %5814 = vmatprep.mubr.f32.mxu0 %v5397
    %5815 = vmatmul.mubr.f32.gmra.mrb[0].mxu0 %v5396
    %v5816 = vpop.f32.mrb[0].mxu0
    %v5817 = vpop.f32.mrb[0].mxu0
    %5818 = vmatprep.mubr.f32.mxu0 %v5403
    %5819 = vmatmul.mubr.f32.gmra.mrb[0].mxu0 %v5402
    %v5820 = vpop.f32.mrb[0].mxu0
    %v5821 = vpop.f32.mrb[0].mxu0
    %5822 = vdwg.mxu0
    %5823 = vmatprep.subr.mxu0 0.0
    %5824 = vmatpush1.msra.mxu0 %v5250
    %5825 = vmatprep.subr.mxu0 0.0
    %5826 = vmatpush1.msra.mxu0 %v5251
    %5827 = vmatprep.subr.mxu0 0.0
    %5828 = vmatpush1.msra.mxu0 %v5252
    %5829 = vmatprep.subr.mxu0 0.0
    %5830 = vmatpush1.msra.mxu0 %v5253
    %5831 = vmatprep.subr.mxu0 0.0
    %5832 = vmatpush1.msra.mxu0 %v5254
    %5833 = vmatprep.subr.mxu0 0.0
    %5834 = vmatpush1.msra.mxu0 %v5255
    %5835 = vmatprep.subr.mxu0 0.0
    %5836 = vmatpush1.msra.mxu0 %v5256
    %5837 = vmatprep.subr.mxu0 0.0
    %5838 = vmatpush1.msra.mxu0 %v5257
    %5839 = vmatprep.subr.mxu0 0.0
    %5840 = vmatpush1.msra.mxu0 %v5258
    %5841 = vmatprep.subr.mxu0 0.0
    %5842 = vmatpush1.msra.mxu0 %v5259
    %5843 = vmatprep.subr.mxu0 0.0
    %5844 = vmatpush1.msra.mxu0 %v5260
    %5845 = vmatprep.subr.mxu0 0.0
    %5846 = vmatpush1.msra.mxu0 %v5261
    %5847 = vmatprep.subr.mxu0 0.0
    %5848 = vmatpush1.msra.mxu0 %v5262
    %5849 = vmatprep.subr.mxu0 0.0
    %5850 = vmatpush1.msra.mxu0 %v5263
    %5851 = vmatprep.subr.mxu0 0.0
    %5852 = vmatpush1.msra.mxu0 %v5264
    %5853 = vmatprep.subr.mxu0 0.0
    %5854 = vmatpush1.msra.mxu0 %v5265
    %5855 = vmatprep.subr.mxu0 0.0
    %5856 = vmatpush1.msra.mxu0 %v5266
    %5857 = vmatprep.subr.mxu0 0.0
    %5858 = vmatpush1.msra.mxu0 %v5267
    %5859 = vmatprep.subr.mxu0 0.0
    %5860 = vmatpush1.msra.mxu0 %v5268
    %5861 = vmatprep.subr.mxu0 0.0
    %5862 = vmatpush1.msra.mxu0 %v5269
    %5863 = vmatprep.subr.mxu0 0.0
    %5864 = vmatpush1.msra.mxu0 %v5270
    %5865 = vmatprep.subr.mxu0 0.0
    %5866 = vmatpush1.msra.mxu0 %v5271
    %5867 = vmatprep.subr.mxu0 0.0
    %5868 = vmatpush1.msra.mxu0 %v5272
    %5869 = vmatprep.subr.mxu0 0.0
    %5870 = vmatpush1.msra.mxu0 %v5475
    %5871 = vmatprep.subr.mxu0 0.0
    %5872 = vmatpush1.msra.mxu0 0.0
    %5873 = vmatprep.subr.mxu0 0.0
    %5874 = vmatpush1.msra.mxu0 0.0
    %5875 = vmatprep.subr.mxu0 0.0
    %5876 = vmatpush1.msra.mxu0 0.0
    %5877 = vmatprep.subr.mxu0 0.0
    %5878 = vmatpush1.msra.mxu0 0.0
    %5879 = vmatprep.subr.mxu0 0.0
    %5880 = vmatpush1.msra.mxu0 0.0
    %5881 = vmatprep.subr.mxu0 0.0
    %5882 = vmatpush1.msra.mxu0 0.0
    %5883 = vmatprep.subr.mxu0 0.0
    %5884 = vmatpush1.msra.mxu0 0.0
    %5885 = vmatprep.subr.mxu0 0.0
    %5886 = vmatpush1.msra.mxu0 0.0
    %5887 = vmatprep.mubr.f32.mxu0 %v5408
    %5888 = vmatmul.mubr.f32.gmra.mrb[0].mxu0 %v5278
    %v5889 = vpop.f32.mrb[0].mxu0
    %v5890 = vadd.f32 %v5717, %v5889
    %v5891 = vpop.f32.mrb[0].mxu0
    %5892 = vmatprep.mubr.f32.mxu0 %v5411
    %5893 = vmatmul.mubr.f32.gmra.mrb[0].mxu0 %v5284
    %v5894 = vpop.f32.mrb[0].mxu0
    %v5895 = vadd.f32 %v5722, %v5894
    %v5896 = vpop.f32.mrb[0].mxu0
    %5897 = vmatprep.mubr.f32.mxu0 %v5414
    %5898 = vmatmul.mubr.f32.gmra.mrb[0].mxu0 %v5290
    %v5899 = vpop.f32.mrb[0].mxu0
    %v5900 = vadd.f32 %v5727, %v5899
    %v5901 = vpop.f32.mrb[0].mxu0
    %5902 = vmatprep.mubr.f32.mxu0 %v5417
    %5903 = vmatmul.mubr.f32.gmra.mrb[0].mxu0 %v5296
    %v5904 = vpop.f32.mrb[0].mxu0
    %v5905 = vadd.f32 %v5732, %v5904
    %v5906 = vpop.f32.mrb[0].mxu0
    %5907 = vmatprep.mubr.f32.mxu0 %v5420
    %5908 = vmatmul.mubr.f32.gmra.mrb[0].mxu0 %v5302
    %v5909 = vpop.f32.mrb[0].mxu0
    %v5910 = vadd.f32 %v5737, %v5909
    %v5911 = vpop.f32.mrb[0].mxu0
    %5912 = vmatprep.mubr.f32.mxu0 %v5423
    %5913 = vmatmul.mubr.f32.gmra.mrb[0].mxu0 %v5308
    %v5914 = vpop.f32.mrb[0].mxu0
    %v5915 = vadd.f32 %v5742, %v5914
    %v5916 = vpop.f32.mrb[0].mxu0
    %5917 = vmatprep.mubr.f32.mxu0 %v5426
    %5918 = vmatmul.mubr.f32.gmra.mrb[0].mxu0 %v5314
    %v5919 = vpop.f32.mrb[0].mxu0
    %v5920 = vadd.f32 %v5747, %v5919
    %v5921 = vpop.f32.mrb[0].mxu0
    %5922 = vmatprep.mubr.f32.mxu0 %v5429
    %5923 = vmatmul.mubr.f32.gmra.mrb[0].mxu0 %v5320
    %v5924 = vpop.f32.mrb[0].mxu0
    %v5925 = vadd.f32 %v5752, %v5924
    %v5926 = vpop.f32.mrb[0].mxu0
    %5927 = vmatprep.mubr.f32.mxu0 %v5432
    %5928 = vmatmul.mubr.f32.gmra.mrb[0].mxu0 %v5326
    %v5929 = vpop.f32.mrb[0].mxu0
    %v5930 = vadd.f32 %v5757, %v5929
    %v5931 = vpop.f32.mrb[0].mxu0
    %5932 = vmatprep.mubr.f32.mxu0 %v5435
    %5933 = vmatmul.mubr.f32.gmra.mrb[0].mxu0 %v5332
    %v5934 = vpop.f32.mrb[0].mxu0
    %v5935 = vadd.f32 %v5762, %v5934
    %v5936 = vpop.f32.mrb[0].mxu0
    %5937 = vmatprep.mubr.f32.mxu0 %v5438
    %5938 = vmatmul.mubr.f32.gmra.mrb[0].mxu0 %v5338
    %v5939 = vpop.f32.mrb[0].mxu0
    %v5940 = vadd.f32 %v5767, %v5939
    %v5941 = vpop.f32.mrb[0].mxu0
    %5942 = vmatprep.mubr.f32.mxu0 %v5441
    %5943 = vmatmul.mubr.f32.gmra.mrb[0].mxu0 %v5344
    %v5944 = vpop.f32.mrb[0].mxu0
    %v5945 = vadd.f32 %v5772, %v5944
    %v5946 = vpop.f32.mrb[0].mxu0
    %5947 = vmatprep.mubr.f32.mxu0 %v5444
    %5948 = vmatmul.mubr.f32.gmra.mrb[0].mxu0 %v5350
    %v5949 = vpop.f32.mrb[0].mxu0
    %v5950 = vadd.f32 %v5777, %v5949
    %v5951 = vpop.f32.mrb[0].mxu0
    %5952 = vmatprep.mubr.f32.mxu0 %v5447
    %5953 = vmatmul.mubr.f32.gmra.mrb[0].mxu0 %v5356
    %v5954 = vpop.f32.mrb[0].mxu0
    %v5955 = vadd.f32 %v5782, %v5954
    %v5956 = vpop.f32.mrb[0].mxu0
    %5957 = vmatprep.mubr.f32.mxu0 %v5450
    %5958 = vmatmul.mubr.f32.gmra.mrb[0].mxu0 %v5362
    %v5959 = vpop.f32.mrb[0].mxu0
    %v5960 = vadd.f32 %v5787, %v5959
    %v5961 = vpop.f32.mrb[0].mxu0
    %5962 = vmatprep.mubr.f32.mxu0 %v5453
    %5963 = vmatmul.mubr.f32.gmra.mrb[0].mxu0 %v5368
    %v5964 = vpop.f32.mrb[0].mxu0
    %v5965 = vadd.f32 %v5792, %v5964
    %v5966 = vpop.f32.mrb[0].mxu0
    %5967 = vmatprep.mubr.f32.mxu0 %v5456
    %5968 = vmatmul.mubr.f32.gmra.mrb[0].mxu0 %v5374
    %v5969 = vpop.f32.mrb[0].mxu0
    %v5970 = vadd.f32 %v5797, %v5969
    %v5971 = vpop.f32.mrb[0].mxu0
    %5972 = vmatprep.mubr.f32.mxu0 %v5459
    %5973 = vmatmul.mubr.f32.gmra.mrb[0].mxu0 %v5380
    %v5974 = vpop.f32.mrb[0].mxu0
    %v5975 = vadd.f32 %v5802, %v5974
    %v5976 = vpop.f32.mrb[0].mxu0
    %5977 = vmatprep.mubr.f32.mxu0 %v5462
    %5978 = vmatmul.mubr.f32.gmra.mrb[0].mxu0 %v5386
    %v5979 = vpop.f32.mrb[0].mxu0
    %v5980 = vadd.f32 %v5807, %v5979
    %v5981 = vpop.f32.mrb[0].mxu0
    %5982 = vmatprep.mubr.f32.mxu0 %v5465
    %5983 = vmatmul.mubr.f32.gmra.mrb[0].mxu0 %v5392
    %v5984 = vpop.f32.mrb[0].mxu0
    %v5985 = vadd.f32 %v5812, %v5984
    %v5986 = vpop.f32.mrb[0].mxu0
    %5987 = vmatprep.mubr.f32.mxu0 %v5468
    %5988 = vmatmul.mubr.f32.gmra.mrb[0].mxu0 %v5398
    %v5989 = vpop.f32.mrb[0].mxu0
    %v5990 = vpop.f32.mrb[0].mxu0
    %5991 = vmatprep.mubr.f32.mxu0 %v5471
    %5992 = vmatmul.mubr.f32.gmra.mrb[0].mxu0 %v5404
    %v5993 = vpop.f32.mrb[0].mxu0
    %v5994 = vpop.f32.mrb[0].mxu0
    %5995 = vdwg.mxu0
    %v5996 = vmax.f32 %v5890, 0.0
    %v5997 = vmax.f32 %v5895, 0.0
    %v5998 = vmax.f32 %v5900, 0.0
    %v5999 = vmax.f32 %v5905, 0.0
    %v6000 = vmax.f32 %v5910, 0.0
    %v6001 = vmax.f32 %v5915, 0.0
    %v6002 = vmax.f32 %v5920, 0.0
    %v6003 = vmax.f32 %v5925, 0.0
    %v6004 = vmax.f32 %v5930, 0.0
    %v6005 = vmax.f32 %v5935, 0.0
    %v6006 = vmax.f32 %v5940, 0.0
    %v6007 = vmax.f32 %v5945, 0.0
    %v6008 = vmax.f32 %v5950, 0.0
    %v6009 = vmax.f32 %v5955, 0.0
    %v6010 = vmax.f32 %v5960, 0.0
    %v6011 = vmax.f32 %v5965, 0.0
    %v6012 = vmax.f32 %v5970, 0.0
    %v6013 = vmax.f32 %v5975, 0.0
    %v6014 = vmax.f32 %v5980, 0.0
    %v6015 = vmax.f32 %v5985, 0.0
    %s6016 = sld [smem:[#allocation6]]
    %s6017 = sld [smem:[#allocation6 + $0x1]]
    %s6018 = sld [smem:[#allocation6 + $0x2]]
    %s6019 = sld [smem:[#allocation6 + $0x80]]
    %s6020 = sld [smem:[#allocation6 + $0x81]]
    %s6021 = sld [smem:[#allocation6 + $0x82]]
    %s6022 = sld [smem:[#allocation6 + $0x100]]
    %s6023 = sld [smem:[#allocation6 + $0x101]]
    %s6024 = sld [smem:[#allocation6 + $0x102]]
    %v6025 = vstv %s6016
    %v6026 = vmul.f32 %v6025, %v5996
    %v6027 = vmul.f32 %v6025, %v5997
    %v6028 = vmul.f32 %v6025, %v5998
    %v6029 = vmul.f32 %v6025, %v5999
    %v6030 = vmul.f32 %v6025, %v6000
    %v6031 = vmul.f32 %v6025, %v6001
    %v6032 = vmul.f32 %v6025, %v6002
    %v6033 = vmul.f32 %v6025, %v6003
    %v6034 = vmul.f32 %v6025, %v6004
    %v6035 = vmul.f32 %v6025, %v6005
    %v6036 = vmul.f32 %v6025, %v6006
    %v6037 = vmul.f32 %v6025, %v6007
    %v6038 = vmul.f32 %v6025, %v6008
    %v6039 = vmul.f32 %v6025, %v6009
    %v6040 = vmul.f32 %v6025, %v6010
    %v6041 = vmul.f32 %v6025, %v6011
    %v6042 = vstv %s6017
    %v6043 = vmul.f32 %v6042, %v5996
    %v6044 = vmul.f32 %v6042, %v5997
    %v6045 = vmul.f32 %v6042, %v5998
    %v6046 = vmul.f32 %v6042, %v5999
    %v6047 = vmul.f32 %v6042, %v6000
    %v6048 = vmul.f32 %v6042, %v6001
    %v6049 = vmul.f32 %v6042, %v6002
    %v6050 = vmul.f32 %v6042, %v6003
    %v6051 = vmul.f32 %v6042, %v6004
    %v6052 = vmul.f32 %v6042, %v6005
    %v6053 = vmul.f32 %v6042, %v6006
    %v6054 = vmul.f32 %v6042, %v6007
    %v6055 = vmul.f32 %v6042, %v6008
    %v6056 = vmul.f32 %v6042, %v6009
    %v6057 = vmul.f32 %v6042, %v6010
    %v6058 = vmul.f32 %v6042, %v6011
    %v6059 = vmul.f32 %v6042, %v6012
    %v6077 = vrot.slane %v6043, 1
    %v6078 = vrot.slane %v6044, 1
    %v6079 = vsel %vm447, %v6077, %v6078
    %v6080 = vrot.slane %v6045, 1
    %v6081 = vsel %vm447, %v6078, %v6080
    %v6082 = vrot.slane %v6046, 1
    %v6083 = vsel %vm447, %v6080, %v6082
    %v6084 = vrot.slane %v6047, 1
    %v6085 = vsel %vm447, %v6082, %v6084
    %v6086 = vrot.slane %v6048, 1
    %v6087 = vsel %vm447, %v6084, %v6086
    %v6088 = vrot.slane %v6049, 1
    %v6089 = vsel %vm447, %v6086, %v6088
    %v6090 = vrot.slane %v6050, 1
    %v6091 = vsel %vm447, %v6088, %v6090
    %v6092 = vrot.slane %v6051, 1
    %v6093 = vsel %vm447, %v6090, %v6092
    %v6094 = vrot.slane %v6052, 1
    %v6095 = vsel %vm447, %v6092, %v6094
    %v6096 = vrot.slane %v6053, 1
    %v6097 = vsel %vm447, %v6094, %v6096
    %v6098 = vrot.slane %v6054, 1
    %v6099 = vsel %vm447, %v6096, %v6098
    %v6100 = vrot.slane %v6055, 1
    %v6101 = vsel %vm447, %v6098, %v6100
    %v6102 = vrot.slane %v6056, 1
    %v6103 = vsel %vm447, %v6100, %v6102
    %v6104 = vrot.slane %v6057, 1
    %v6105 = vsel %vm447, %v6102, %v6104
    %v6106 = vrot.slane %v6058, 1
    %v6107 = vsel %vm447, %v6104, %v6106
    %v6108 = vrot.slane %v6059, 1
    %v6109 = vsel %vm447, %v6106, %v6108
    %v6126 = vadd.f32 %v6026, %v6079
    %v6127 = vadd.f32 %v6027, %v6081
    %v6128 = vadd.f32 %v6028, %v6083
    %v6129 = vadd.f32 %v6029, %v6085
    %v6130 = vadd.f32 %v6030, %v6087
    %v6131 = vadd.f32 %v6031, %v6089
    %v6132 = vadd.f32 %v6032, %v6091
    %v6133 = vadd.f32 %v6033, %v6093
    %v6134 = vadd.f32 %v6034, %v6095
    %v6135 = vadd.f32 %v6035, %v6097
    %v6136 = vadd.f32 %v6036, %v6099
    %v6137 = vadd.f32 %v6037, %v6101
    %v6138 = vadd.f32 %v6038, %v6103
    %v6139 = vadd.f32 %v6039, %v6105
    %v6140 = vadd.f32 %v6040, %v6107
    %v6141 = vadd.f32 %v6041, %v6109
    %v6142 = vstv %s6018
    %v6143 = vmul.f32 %v6142, %v5996
    %v6144 = vmul.f32 %v6142, %v5997
    %v6145 = vmul.f32 %v6142, %v5998
    %v6146 = vmul.f32 %v6142, %v5999
    %v6147 = vmul.f32 %v6142, %v6000
    %v6148 = vmul.f32 %v6142, %v6001
    %v6149 = vmul.f32 %v6142, %v6002
    %v6150 = vmul.f32 %v6142, %v6003
    %v6151 = vmul.f32 %v6142, %v6004
    %v6152 = vmul.f32 %v6142, %v6005
    %v6153 = vmul.f32 %v6142, %v6006
    %v6154 = vmul.f32 %v6142, %v6007
    %v6155 = vmul.f32 %v6142, %v6008
    %v6156 = vmul.f32 %v6142, %v6009
    %v6157 = vmul.f32 %v6142, %v6010
    %v6158 = vmul.f32 %v6142, %v6011
    %v6159 = vmul.f32 %v6142, %v6012
    %v6177 = vrot.slane %v6143, 2
    %v6178 = vrot.slane %v6144, 2
    %v6179 = vsel %vm994, %v6177, %v6178
    %v6180 = vrot.slane %v6145, 2
    %v6181 = vsel %vm994, %v6178, %v6180
    %v6182 = vrot.slane %v6146, 2
    %v6183 = vsel %vm994, %v6180, %v6182
    %v6184 = vrot.slane %v6147, 2
    %v6185 = vsel %vm994, %v6182, %v6184
    %v6186 = vrot.slane %v6148, 2
    %v6187 = vsel %vm994, %v6184, %v6186
    %v6188 = vrot.slane %v6149, 2
    %v6189 = vsel %vm994, %v6186, %v6188
    %v6190 = vrot.slane %v6150, 2
    %v6191 = vsel %vm994, %v6188, %v6190
    %v6192 = vrot.slane %v6151, 2
    %v6193 = vsel %vm994, %v6190, %v6192
    %v6194 = vrot.slane %v6152, 2
    %v6195 = vsel %vm994, %v6192, %v6194
    %v6196 = vrot.slane %v6153, 2
    %v6197 = vsel %vm994, %v6194, %v6196
    %v6198 = vrot.slane %v6154, 2
    %v6199 = vsel %vm994, %v6196, %v6198
    %v6200 = vrot.slane %v6155, 2
    %v6201 = vsel %vm994, %v6198, %v6200
    %v6202 = vrot.slane %v6156, 2
    %v6203 = vsel %vm994, %v6200, %v6202
    %v6204 = vrot.slane %v6157, 2
    %v6205 = vsel %vm994, %v6202, %v6204
    %v6206 = vrot.slane %v6158, 2
    %v6207 = vsel %vm994, %v6204, %v6206
    %v6208 = vrot.slane %v6159, 2
    %v6209 = vsel %vm994, %v6206, %v6208
    %v6226 = vadd.f32 %v6126, %v6179
    %v6227 = vadd.f32 %v6127, %v6181
    %v6228 = vadd.f32 %v6128, %v6183
    %v6229 = vadd.f32 %v6129, %v6185
    %v6230 = vadd.f32 %v6130, %v6187
    %v6231 = vadd.f32 %v6131, %v6189
    %v6232 = vadd.f32 %v6132, %v6191
    %v6233 = vadd.f32 %v6133, %v6193
    %v6234 = vadd.f32 %v6134, %v6195
    %v6235 = vadd.f32 %v6135, %v6197
    %v6236 = vadd.f32 %v6136, %v6199
    %v6237 = vadd.f32 %v6137, %v6201
    %v6238 = vadd.f32 %v6138, %v6203
    %v6239 = vadd.f32 %v6139, %v6205
    %v6240 = vadd.f32 %v6140, %v6207
    %v6241 = vadd.f32 %v6141, %v6209
    %v6242 = vstv %s6019
    %v6243 = vmul.f32 %v6242, %v5997
    %v6244 = vmul.f32 %v6242, %v5998
    %v6245 = vmul.f32 %v6242, %v5999
    %v6246 = vmul.f32 %v6242, %v6000
    %v6247 = vmul.f32 %v6242, %v6001
    %v6248 = vmul.f32 %v6242, %v6002
    %v6249 = vmul.f32 %v6242, %v6003
    %v6250 = vmul.f32 %v6242, %v6004
    %v6251 = vmul.f32 %v6242, %v6005
    %v6252 = vmul.f32 %v6242, %v6006
    %v6253 = vmul.f32 %v6242, %v6007
    %v6254 = vmul.f32 %v6242, %v6008
    %v6255 = vmul.f32 %v6242, %v6009
    %v6256 = vmul.f32 %v6242, %v6010
    %v6257 = vmul.f32 %v6242, %v6011
    %v6258 = vmul.f32 %v6242, %v6012
    %v6259 = vmul.f32 %v6242, %v6013
    %v6277 = vrot.slane %v6243, 5
    %v6278 = vrot.slane %v6244, 5
    %v6279 = vsel %vm2094, %v6277, %v6278
    %v6280 = vrot.slane %v6245, 5
    %v6281 = vsel %vm2094, %v6278, %v6280
    %v6282 = vrot.slane %v6246, 5
    %v6283 = vsel %vm2094, %v6280, %v6282
    %v6284 = vrot.slane %v6247, 5
    %v6285 = vsel %vm2094, %v6282, %v6284
    %v6286 = vrot.slane %v6248, 5
    %v6287 = vsel %vm2094, %v6284, %v6286
    %v6288 = vrot.slane %v6249, 5
    %v6289 = vsel %vm2094, %v6286, %v6288
    %v6290 = vrot.slane %v6250, 5
    %v6291 = vsel %vm2094, %v6288, %v6290
    %v6292 = vrot.slane %v6251, 5
    %v6293 = vsel %vm2094, %v6290, %v6292
    %v6294 = vrot.slane %v6252, 5
    %v6295 = vsel %vm2094, %v6292, %v6294
    %v6296 = vrot.slane %v6253, 5
    %v6297 = vsel %vm2094, %v6294, %v6296
    %v6298 = vrot.slane %v6254, 5
    %v6299 = vsel %vm2094, %v6296, %v6298
    %v6300 = vrot.slane %v6255, 5
    %v6301 = vsel %vm2094, %v6298, %v6300
    %v6302 = vrot.slane %v6256, 5
    %v6303 = vsel %vm2094, %v6300, %v6302
    %v6304 = vrot.slane %v6257, 5
    %v6305 = vsel %vm2094, %v6302, %v6304
    %v6306 = vrot.slane %v6258, 5
    %v6307 = vsel %vm2094, %v6304, %v6306
    %v6308 = vrot.slane %v6259, 5
    %v6309 = vsel %vm2094, %v6306, %v6308
    %v6326 = vadd.f32 %v6226, %v6279
    %v6327 = vadd.f32 %v6227, %v6281
    %v6328 = vadd.f32 %v6228, %v6283
    %v6329 = vadd.f32 %v6229, %v6285
    %v6330 = vadd.f32 %v6230, %v6287
    %v6331 = vadd.f32 %v6231, %v6289
    %v6332 = vadd.f32 %v6232, %v6291
    %v6333 = vadd.f32 %v6233, %v6293
    %v6334 = vadd.f32 %v6234, %v6295
    %v6335 = vadd.f32 %v6235, %v6297
    %v6336 = vadd.f32 %v6236, %v6299
    %v6337 = vadd.f32 %v6237, %v6301
    %v6338 = vadd.f32 %v6238, %v6303
    %v6339 = vadd.f32 %v6239, %v6305
    %v6340 = vadd.f32 %v6240, %v6307
    %v6341 = vadd.f32 %v6241, %v6309
    %v6342 = vstv %s6020
    %v6343 = vmul.f32 %v6342, %v5997
    %v6344 = vmul.f32 %v6342, %v5998
    %v6345 = vmul.f32 %v6342, %v5999
    %v6346 = vmul.f32 %v6342, %v6000
    %v6347 = vmul.f32 %v6342, %v6001
    %v6348 = vmul.f32 %v6342, %v6002
    %v6349 = vmul.f32 %v6342, %v6003
    %v6350 = vmul.f32 %v6342, %v6004
    %v6351 = vmul.f32 %v6342, %v6005
    %v6352 = vmul.f32 %v6342, %v6006
    %v6353 = vmul.f32 %v6342, %v6007
    %v6354 = vmul.f32 %v6342, %v6008
    %v6355 = vmul.f32 %v6342, %v6009
    %v6356 = vmul.f32 %v6342, %v6010
    %v6357 = vmul.f32 %v6342, %v6011
    %v6358 = vmul.f32 %v6342, %v6012
    %v6359 = vmul.f32 %v6342, %v6013
    %v6377 = vrot.slane %v6343, 6
    %v6378 = vrot.slane %v6344, 6
    %v6379 = vsel %vm2645, %v6377, %v6378
    %v6380 = vrot.slane %v6345, 6
    %v6381 = vsel %vm2645, %v6378, %v6380
    %v6382 = vrot.slane %v6346, 6
    %v6383 = vsel %vm2645, %v6380, %v6382
    %v6384 = vrot.slane %v6347, 6
    %v6385 = vsel %vm2645, %v6382, %v6384
    %v6386 = vrot.slane %v6348, 6
    %v6387 = vsel %vm2645, %v6384, %v6386
    %v6388 = vrot.slane %v6349, 6
    %v6389 = vsel %vm2645, %v6386, %v6388
    %v6390 = vrot.slane %v6350, 6
    %v6391 = vsel %vm2645, %v6388, %v6390
    %v6392 = vrot.slane %v6351, 6
    %v6393 = vsel %vm2645, %v6390, %v6392
    %v6394 = vrot.slane %v6352, 6
    %v6395 = vsel %vm2645, %v6392, %v6394
    %v6396 = vrot.slane %v6353, 6
    %v6397 = vsel %vm2645, %v6394, %v6396
    %v6398 = vrot.slane %v6354, 6
    %v6399 = vsel %vm2645, %v6396, %v6398
    %v6400 = vrot.slane %v6355, 6
    %v6401 = vsel %vm2645, %v6398, %v6400
    %v6402 = vrot.slane %v6356, 6
    %v6403 = vsel %vm2645, %v6400, %v6402
    %v6404 = vrot.slane %v6357, 6
    %v6405 = vsel %vm2645, %v6402, %v6404
    %v6406 = vrot.slane %v6358, 6
    %v6407 = vsel %vm2645, %v6404, %v6406
    %v6408 = vrot.slane %v6359, 6
    %v6409 = vsel %vm2645, %v6406, %v6408
    %v6426 = vadd.f32 %v6326, %v6379
    %v6427 = vadd.f32 %v6327, %v6381
    %v6428 = vadd.f32 %v6328, %v6383
    %v6429 = vadd.f32 %v6329, %v6385
    %v6430 = vadd.f32 %v6330, %v6387
    %v6431 = vadd.f32 %v6331, %v6389
    %v6432 = vadd.f32 %v6332, %v6391
    %v6433 = vadd.f32 %v6333, %v6393
    %v6434 = vadd.f32 %v6334, %v6395
    %v6435 = vadd.f32 %v6335, %v6397
    %v6436 = vadd.f32 %v6336, %v6399
    %v6437 = vadd.f32 %v6337, %v6401
    %v6438 = vadd.f32 %v6338, %v6403
    %v6439 = vadd.f32 %v6339, %v6405
    %v6440 = vadd.f32 %v6340, %v6407
    %v6441 = vadd.f32 %v6341, %v6409
    %v6442 = vstv %s6021
    %v6443 = vmul.f32 %v6442, %v5997
    %v6444 = vmul.f32 %v6442, %v5998
    %v6445 = vmul.f32 %v6442, %v5999
    %v6446 = vmul.f32 %v6442, %v6000
    %v6447 = vmul.f32 %v6442, %v6001
    %v6448 = vmul.f32 %v6442, %v6002
    %v6449 = vmul.f32 %v6442, %v6003
    %v6450 = vmul.f32 %v6442, %v6004
    %v6451 = vmul.f32 %v6442, %v6005
    %v6452 = vmul.f32 %v6442, %v6006
    %v6453 = vmul.f32 %v6442, %v6007
    %v6454 = vmul.f32 %v6442, %v6008
    %v6455 = vmul.f32 %v6442, %v6009
    %v6456 = vmul.f32 %v6442, %v6010
    %v6457 = vmul.f32 %v6442, %v6011
    %v6458 = vmul.f32 %v6442, %v6012
    %v6459 = vmul.f32 %v6442, %v6013
    %v6477 = vrot.slane %v6443, 7
    %v6478 = vrot.slane %v6444, 7
    %v6479 = vsel %vm5473, %v6477, %v6478
    %v6480 = vrot.slane %v6445, 7
    %v6481 = vsel %vm5473, %v6478, %v6480
    %v6482 = vrot.slane %v6446, 7
    %v6483 = vsel %vm5473, %v6480, %v6482
    %v6484 = vrot.slane %v6447, 7
    %v6485 = vsel %vm5473, %v6482, %v6484
    %v6486 = vrot.slane %v6448, 7
    %v6487 = vsel %vm5473, %v6484, %v6486
    %v6488 = vrot.slane %v6449, 7
    %v6489 = vsel %vm5473, %v6486, %v6488
    %v6490 = vrot.slane %v6450, 7
    %v6491 = vsel %vm5473, %v6488, %v6490
    %v6492 = vrot.slane %v6451, 7
    %v6493 = vsel %vm5473, %v6490, %v6492
    %v6494 = vrot.slane %v6452, 7
    %v6495 = vsel %vm5473, %v6492, %v6494
    %v6496 = vrot.slane %v6453, 7
    %v6497 = vsel %vm5473, %v6494, %v6496
    %v6498 = vrot.slane %v6454, 7
    %v6499 = vsel %vm5473, %v6496, %v6498
    %v6500 = vrot.slane %v6455, 7
    %v6501 = vsel %vm5473, %v6498, %v6500
    %v6502 = vrot.slane %v6456, 7
    %v6503 = vsel %vm5473, %v6500, %v6502
    %v6504 = vrot.slane %v6457, 7
    %v6505 = vsel %vm5473, %v6502, %v6504
    %v6506 = vrot.slane %v6458, 7
    %v6507 = vsel %vm5473, %v6504, %v6506
    %v6508 = vrot.slane %v6459, 7
    %v6509 = vsel %vm5473, %v6506, %v6508
    %v6526 = vadd.f32 %v6426, %v6479
    %v6527 = vadd.f32 %v6427, %v6481
    %v6528 = vadd.f32 %v6428, %v6483
    %v6529 = vadd.f32 %v6429, %v6485
    %v6530 = vadd.f32 %v6430, %v6487
    %v6531 = vadd.f32 %v6431, %v6489
    %v6532 = vadd.f32 %v6432, %v6491
    %v6533 = vadd.f32 %v6433, %v6493
    %v6534 = vadd.f32 %v6434, %v6495
    %v6535 = vadd.f32 %v6435, %v6497
    %v6536 = vadd.f32 %v6436, %v6499
    %v6537 = vadd.f32 %v6437, %v6501
    %v6538 = vadd.f32 %v6438, %v6503
    %v6539 = vadd.f32 %v6439, %v6505
    %v6540 = vadd.f32 %v6440, %v6507
    %v6541 = vadd.f32 %v6441, %v6509
    %v6542 = vstv %s6022
    %v6543 = vmul.f32 %v6542, %v5999
    %v6544 = vmul.f32 %v6542, %v6000
    %v6545 = vmul.f32 %v6542, %v6001
    %v6546 = vmul.f32 %v6542, %v6002
    %v6547 = vmul.f32 %v6542, %v6003
    %v6548 = vmul.f32 %v6542, %v6004
    %v6549 = vmul.f32 %v6542, %v6005
    %v6550 = vmul.f32 %v6542, %v6006
    %v6551 = vmul.f32 %v6542, %v6007
    %v6552 = vmul.f32 %v6542, %v6008
    %v6553 = vmul.f32 %v6542, %v6009
    %v6554 = vmul.f32 %v6542, %v6010
    %v6555 = vmul.f32 %v6542, %v6011
    %v6556 = vmul.f32 %v6542, %v6012
    %v6557 = vmul.f32 %v6542, %v6013
    %v6558 = vmul.f32 %v6542, %v6014
    %v6559 = vmul.f32 %v6542, %v6015
    %v6577 = vrot.slane %v6543, 2
    %v6578 = vrot.slane %v6544, 2
    %v6579 = vsel %vm994, %v6577, %v6578
    %v6580 = vrot.slane %v6545, 2
    %v6581 = vsel %vm994, %v6578, %v6580
    %v6582 = vrot.slane %v6546, 2
    %v6583 = vsel %vm994, %v6580, %v6582
    %v6584 = vrot.slane %v6547, 2
    %v6585 = vsel %vm994, %v6582, %v6584
    %v6586 = vrot.slane %v6548, 2
    %v6587 = vsel %vm994, %v6584, %v6586
    %v6588 = vrot.slane %v6549, 2
    %v6589 = vsel %vm994, %v6586, %v6588
    %v6590 = vrot.slane %v6550, 2
    %v6591 = vsel %vm994, %v6588, %v6590
    %v6592 = vrot.slane %v6551, 2
    %v6593 = vsel %vm994, %v6590, %v6592
    %v6594 = vrot.slane %v6552, 2
    %v6595 = vsel %vm994, %v6592, %v6594
    %v6596 = vrot.slane %v6553, 2
    %v6597 = vsel %vm994, %v6594, %v6596
    %v6598 = vrot.slane %v6554, 2
    %v6599 = vsel %vm994, %v6596, %v6598
    %v6600 = vrot.slane %v6555, 2
    %v6601 = vsel %vm994, %v6598, %v6600
    %v6602 = vrot.slane %v6556, 2
    %v6603 = vsel %vm994, %v6600, %v6602
    %v6604 = vrot.slane %v6557, 2
    %v6605 = vsel %vm994, %v6602, %v6604
    %v6606 = vrot.slane %v6558, 2
    %v6607 = vsel %vm994, %v6604, %v6606
    %v6608 = vrot.slane %v6559, 2
    %v6609 = vsel %vm994, %v6606, %v6608
    %v6626 = vadd.f32 %v6526, %v6579
    %v6627 = vadd.f32 %v6527, %v6581
    %v6628 = vadd.f32 %v6528, %v6583
    %v6629 = vadd.f32 %v6529, %v6585
    %v6630 = vadd.f32 %v6530, %v6587
    %v6631 = vadd.f32 %v6531, %v6589
    %v6632 = vadd.f32 %v6532, %v6591
    %v6633 = vadd.f32 %v6533, %v6593
    %v6634 = vadd.f32 %v6534, %v6595
    %v6635 = vadd.f32 %v6535, %v6597
    %v6636 = vadd.f32 %v6536, %v6599
    %v6637 = vadd.f32 %v6537, %v6601
    %v6638 = vadd.f32 %v6538, %v6603
    %v6639 = vadd.f32 %v6539, %v6605
    %v6640 = vadd.f32 %v6540, %v6607
    %v6641 = vadd.f32 %v6541, %v6609
    %v6642 = vstv %s6023
    %v6643 = vmul.f32 %v6642, %v5999
    %v6644 = vmul.f32 %v6642, %v6000
    %v6645 = vmul.f32 %v6642, %v6001
    %v6646 = vmul.f32 %v6642, %v6002
    %v6647 = vmul.f32 %v6642, %v6003
    %v6648 = vmul.f32 %v6642, %v6004
    %v6649 = vmul.f32 %v6642, %v6005
    %v6650 = vmul.f32 %v6642, %v6006
    %v6651 = vmul.f32 %v6642, %v6007
    %v6652 = vmul.f32 %v6642, %v6008
    %v6653 = vmul.f32 %v6642, %v6009
    %v6654 = vmul.f32 %v6642, %v6010
    %v6655 = vmul.f32 %v6642, %v6011
    %v6656 = vmul.f32 %v6642, %v6012
    %v6657 = vmul.f32 %v6642, %v6013
    %v6658 = vmul.f32 %v6642, %v6014
    %v6659 = vmul.f32 %v6642, %v6015
    %vm6677 = vcmask 1044480
    %v6678 = vrot.slane %v6643, 3
    %v6679 = vrot.slane %v6644, 3
    %v6680 = vsel %vm6677, %v6678, %v6679
    %v6681 = vrot.slane %v6645, 3
    %v6682 = vsel %vm6677, %v6679, %v6681
    %v6683 = vrot.slane %v6646, 3
    %v6684 = vsel %vm6677, %v6681, %v6683
    %v6685 = vrot.slane %v6647, 3
    %v6686 = vsel %vm6677, %v6683, %v6685
    %v6687 = vrot.slane %v6648, 3
    %v6688 = vsel %vm6677, %v6685, %v6687
    %v6689 = vrot.slane %v6649, 3
    %v6690 = vsel %vm6677, %v6687, %v6689
    %v6691 = vrot.slane %v6650, 3
    %v6692 = vsel %vm6677, %v6689, %v6691
    %v6693 = vrot.slane %v6651, 3
    %v6694 = vsel %vm6677, %v6691, %v6693
    %v6695 = vrot.slane %v6652, 3
    %v6696 = vsel %vm6677, %v6693, %v6695
    %v6697 = vrot.slane %v6653, 3
    %v6698 = vsel %vm6677, %v6695, %v6697
    %v6699 = vrot.slane %v6654, 3
    %v6700 = vsel %vm6677, %v6697, %v6699
    %v6701 = vrot.slane %v6655, 3
    %v6702 = vsel %vm6677, %v6699, %v6701
    %v6703 = vrot.slane %v6656, 3
    %v6704 = vsel %vm6677, %v6701, %v6703
    %v6705 = vrot.slane %v6657, 3
    %v6706 = vsel %vm6677, %v6703, %v6705
    %v6707 = vrot.slane %v6658, 3
    %v6708 = vsel %vm6677, %v6705, %v6707
    %v6709 = vrot.slane %v6659, 3
    %v6710 = vsel %vm6677, %v6707, %v6709
    %v6727 = vadd.f32 %v6626, %v6680
    %v6728 = vadd.f32 %v6627, %v6682
    %v6729 = vadd.f32 %v6628, %v6684
    %v6730 = vadd.f32 %v6629, %v6686
    %v6731 = vadd.f32 %v6630, %v6688
    %v6732 = vadd.f32 %v6631, %v6690
    %v6733 = vadd.f32 %v6632, %v6692
    %v6734 = vadd.f32 %v6633, %v6694
    %v6735 = vadd.f32 %v6634, %v6696
    %v6736 = vadd.f32 %v6635, %v6698
    %v6737 = vadd.f32 %v6636, %v6700
    %v6738 = vadd.f32 %v6637, %v6702
    %v6739 = vadd.f32 %v6638, %v6704
    %v6740 = vadd.f32 %v6639, %v6706
    %v6741 = vadd.f32 %v6640, %v6708
    %v6742 = vadd.f32 %v6641, %v6710
    %v6743 = vstv %s6024
    %v6744 = vmul.f32 %v6743, %v5999
    %v6745 = vmul.f32 %v6743, %v6000
    %v6746 = vmul.f32 %v6743, %v6001
    %v6747 = vmul.f32 %v6743, %v6002
    %v6748 = vmul.f32 %v6743, %v6003
    %v6749 = vmul.f32 %v6743, %v6004
    %v6750 = vmul.f32 %v6743, %v6005
    %v6751 = vmul.f32 %v6743, %v6006
    %v6752 = vmul.f32 %v6743, %v6007
    %v6753 = vmul.f32 %v6743, %v6008
    %v6754 = vmul.f32 %v6743, %v6009
    %v6755 = vmul.f32 %v6743, %v6010
    %v6756 = vmul.f32 %v6743, %v6011
    %v6757 = vmul.f32 %v6743, %v6012
    %v6758 = vmul.f32 %v6743, %v6013
    %v6759 = vmul.f32 %v6743, %v6014
    %v6760 = vmul.f32 %v6743, %v6015
    %v6778 = vrot.slane %v6744, 4
    %v6779 = vrot.slane %v6745, 4
    %v6780 = vsel %vm1543, %v6778, %v6779
    %v6781 = vrot.slane %v6746, 4
    %v6782 = vsel %vm1543, %v6779, %v6781
    %v6783 = vrot.slane %v6747, 4
    %v6784 = vsel %vm1543, %v6781, %v6783
    %v6785 = vrot.slane %v6748, 4
    %v6786 = vsel %vm1543, %v6783, %v6785
    %v6787 = vrot.slane %v6749, 4
    %v6788 = vsel %vm1543, %v6785, %v6787
    %v6789 = vrot.slane %v6750, 4
    %v6790 = vsel %vm1543, %v6787, %v6789
    %v6791 = vrot.slane %v6751, 4
    %v6792 = vsel %vm1543, %v6789, %v6791
    %v6793 = vrot.slane %v6752, 4
    %v6794 = vsel %vm1543, %v6791, %v6793
    %v6795 = vrot.slane %v6753, 4
    %v6796 = vsel %vm1543, %v6793, %v6795
    %v6797 = vrot.slane %v6754, 4
    %v6798 = vsel %vm1543, %v6795, %v6797
    %v6799 = vrot.slane %v6755, 4
    %v6800 = vsel %vm1543, %v6797, %v6799
    %v6801 = vrot.slane %v6756, 4
    %v6802 = vsel %vm1543, %v6799, %v6801
    %v6803 = vrot.slane %v6757, 4
    %v6804 = vsel %vm1543, %v6801, %v6803
    %v6805 = vrot.slane %v6758, 4
    %v6806 = vsel %vm1543, %v6803, %v6805
    %v6807 = vrot.slane %v6759, 4
    %v6808 = vsel %vm1543, %v6805, %v6807
    %v6809 = vrot.slane %v6760, 4
    %v6810 = vsel %vm1543, %v6807, %v6809
    %v6827 = vadd.f32 %v6727, %v6780
    %v6828 = vadd.f32 %v6728, %v6782
    %v6829 = vadd.f32 %v6729, %v6784
    %v6830 = vadd.f32 %v6730, %v6786
    %v6831 = vadd.f32 %v6731, %v6788
    %v6832 = vadd.f32 %v6732, %v6790
    %v6833 = vadd.f32 %v6733, %v6792
    %v6834 = vadd.f32 %v6734, %v6794
    %v6835 = vadd.f32 %v6735, %v6796
    %v6836 = vadd.f32 %v6736, %v6798
    %v6837 = vadd.f32 %v6737, %v6800
    %v6838 = vadd.f32 %v6738, %v6802
    %v6839 = vadd.f32 %v6739, %v6804
    %v6840 = vadd.f32 %v6740, %v6806
    %v6841 = vadd.f32 %v6741, %v6808
    %v6842 = vadd.f32 %v6742, %v6810
    %s6843 = sld [smem:[#allocation3]]
    %v6844 = vstv %s6843
    %v6845 = vadd.f32 %v6827, %v6844
    %v6846 = vadd.f32 %v6828, %v6844
    %v6847 = vadd.f32 %v6829, %v6844
    %v6848 = vadd.f32 %v6830, %v6844
    %v6849 = vadd.f32 %v6831, %v6844
    %v6850 = vadd.f32 %v6832, %v6844
    %v6851 = vadd.f32 %v6833, %v6844
    %v6852 = vadd.f32 %v6834, %v6844
    %v6853 = vadd.f32 %v6835, %v6844
    %v6854 = vadd.f32 %v6836, %v6844
    %v6855 = vadd.f32 %v6837, %v6844
    %v6856 = vadd.f32 %v6838, %v6844
    %v6857 = vadd.f32 %v6839, %v6844
    %v6858 = vadd.f32 %v6840, %v6844
    %v6859 = vadd.f32 %v6841, %v6844
    %v6860 = vadd.f32 %v6842, %v6844
    %v6876 = vrot.slane %v6845, 1
    %v6877 = vrot.slane %v6846, 1
    %v6878 = vsel %vm447, %v6876, %v6877
    %v6879 = vrot.slane %v6847, 1
    %v6880 = vsel %vm447, %v6877, %v6879
    %v6881 = vrot.slane %v6848, 1
    %v6882 = vsel %vm447, %v6879, %v6881
    %v6883 = vrot.slane %v6849, 1
    %v6884 = vsel %vm447, %v6881, %v6883
    %v6885 = vrot.slane %v6850, 1
    %v6886 = vsel %vm447, %v6883, %v6885
    %v6887 = vrot.slane %v6851, 1
    %v6888 = vsel %vm447, %v6885, %v6887
    %v6889 = vrot.slane %v6852, 1
    %v6890 = vsel %vm447, %v6887, %v6889
    %v6891 = vrot.slane %v6853, 1
    %v6892 = vsel %vm447, %v6889, %v6891
    %v6893 = vrot.slane %v6854, 1
    %v6894 = vsel %vm447, %v6891, %v6893
    %v6895 = vrot.slane %v6855, 1
    %v6896 = vsel %vm447, %v6893, %v6895
    %v6897 = vrot.slane %v6856, 1
    %v6898 = vsel %vm447, %v6895, %v6897
    %v6899 = vrot.slane %v6857, 1
    %v6900 = vsel %vm447, %v6897, %v6899
    %v6901 = vrot.slane %v6858, 1
    %v6902 = vsel %vm447, %v6899, %v6901
    %v6903 = vrot.slane %v6859, 1
    %v6904 = vsel %vm447, %v6901, %v6903
    %v6920 = vmax.f32 %v6845, %v6878
    %v6921 = vmax.f32 %v6846, %v6880
    %v6922 = vmax.f32 %v6847, %v6882
    %v6923 = vmax.f32 %v6848, %v6884
    %v6924 = vmax.f32 %v6849, %v6886
    %v6925 = vmax.f32 %v6850, %v6888
    %v6926 = vmax.f32 %v6851, %v6890
    %v6927 = vmax.f32 %v6852, %v6892
    %v6928 = vmax.f32 %v6853, %v6894
    %v6929 = vmax.f32 %v6854, %v6896
    %v6930 = vmax.f32 %v6855, %v6898
    %v6931 = vmax.f32 %v6856, %v6900
    %v6932 = vmax.f32 %v6857, %v6902
    %v6933 = vmax.f32 %v6858, %v6904
    %v6934 = vmax.f32 %v6859, %v6903
    %v6936 = vrot.slane %v6860, 1
    %v6937 = vsel %vm447, %v6903, %v6936
    %v6940 = vmax.f32 %v6859, %v6937
    %v6941 = vmax.f32 %v6860, %v6936
    %v6957 = vrot.slane %v6921, 5
    %v6958 = vrot.slane %v6922, 5
    %v6959 = vsel %vm2094, %v6957, %v6958
    %v6960 = vrot.slane %v6923, 5
    %v6961 = vsel %vm2094, %v6958, %v6960
    %v6962 = vrot.slane %v6924, 5
    %v6963 = vsel %vm2094, %v6960, %v6962
    %v6964 = vrot.slane %v6925, 5
    %v6965 = vsel %vm2094, %v6962, %v6964
    %v6966 = vrot.slane %v6926, 5
    %v6967 = vsel %vm2094, %v6964, %v6966
    %v6968 = vrot.slane %v6927, 5
    %v6969 = vsel %vm2094, %v6966, %v6968
    %v6970 = vrot.slane %v6928, 5
    %v6971 = vsel %vm2094, %v6968, %v6970
    %v6972 = vrot.slane %v6929, 5
    %v6973 = vsel %vm2094, %v6970, %v6972
    %v6974 = vrot.slane %v6930, 5
    %v6975 = vsel %vm2094, %v6972, %v6974
    %v6976 = vrot.slane %v6931, 5
    %v6977 = vsel %vm2094, %v6974, %v6976
    %v6978 = vrot.slane %v6932, 5
    %v6979 = vsel %vm2094, %v6976, %v6978
    %v6980 = vrot.slane %v6933, 5
    %v6981 = vsel %vm2094, %v6978, %v6980
    %v6982 = vrot.slane %v6940, 5
    %v6983 = vsel %vm2094, %v6980, %v6982
    %v6984 = vrot.slane %v6941, 5
    %v6985 = vsel %vm2094, %v6982, %v6984
    %v7001 = vmax.f32 %v6920, %v6959
    %v7002 = vmax.f32 %v6921, %v6961
    %v7003 = vmax.f32 %v6922, %v6963
    %v7004 = vmax.f32 %v6923, %v6965
    %v7005 = vmax.f32 %v6924, %v6967
    %v7006 = vmax.f32 %v6925, %v6969
    %v7007 = vmax.f32 %v6926, %v6971
    %v7008 = vmax.f32 %v6927, %v6973
    %v7009 = vmax.f32 %v6928, %v6975
    %v7010 = vmax.f32 %v6929, %v6977
    %v7011 = vmax.f32 %v6930, %v6979
    %v7012 = vmax.f32 %v6931, %v6981
    %v7013 = vmax.f32 %v6932, %v6983
    %v7014 = vmax.f32 %v6933, %v6985
    %v7015 = vmax.f32 %v6934, %v6984
    %v7016 = vld [vmem:[%s2] sm:$0xff]
    %v7017 = vld [vmem:[%s2 + $0x8] sm:$0xff]
    %v7018 = vld [vmem:[%s2 + $0x10] sm:$0xff]
    %v7019 = vld [vmem:[%s2 + $0x18] sm:$0x1]
    %vm7020 = vcmask 924672
    %v7022 = vsel %vm7020, %v7016, 0
    %v7025 = vsel %vm7020, %v7017, 0
    %v7028 = vsel %vm7020, %v7018, 0
    %v7031 = vsel %vm7020, %v7019, 0
    %v7034 = vsel %vm5473, %v7015, 0
    %7036 = vmatprep.subr.mxu0 0.0
    %7037 = vmatpush1.msra.mxu0 %v7001
    %7038 = vmatprep.subr.mxu0 0.0
    %7039 = vmatpush1.msra.mxu0 %v7002
    %7040 = vmatprep.subr.mxu0 0.0
    %7041 = vmatpush1.msra.mxu0 %v7003
    %7042 = vmatprep.subr.mxu0 0.0
    %7043 = vmatpush1.msra.mxu0 %v7004
    %7044 = vmatprep.subr.mxu0 0.0
    %7045 = vmatpush1.msra.mxu0 %v7005
    %7046 = vmatprep.subr.mxu0 0.0
    %7047 = vmatpush1.msra.mxu0 %v7006
    %7048 = vmatprep.subr.mxu0 0.0
    %7049 = vmatpush1.msra.mxu0 %v7007
    %7050 = vmatprep.subr.mxu0 0.0
    %7051 = vmatpush1.msra.mxu0 %v7008
    %7052 = vmatprep.subr.mxu0 0.0
    %7053 = vmatpush1.msra.mxu0 %v7009
    %7054 = vmatprep.subr.mxu0 0.0
    %7055 = vmatpush1.msra.mxu0 %v7010
    %7056 = vmatprep.subr.mxu0 0.0
    %7057 = vmatpush1.msra.mxu0 %v7011
    %7058 = vmatprep.subr.mxu0 0.0
    %7059 = vmatpush1.msra.mxu0 %v7012
    %7060 = vmatprep.subr.mxu0 0.0
    %7061 = vmatpush1.msra.mxu0 %v7013
    %7062 = vmatprep.subr.mxu0 0.0
    %7063 = vmatpush1.msra.mxu0 %v7014
    %7064 = vmatprep.subr.mxu0 0.0
    %7065 = vmatpush1.msra.mxu0 %v7034
    %7066 = vmatprep.subr.mxu0 0.0
    %7067 = vmatpush1.msra.mxu0 0.0
    %7068 = vmatprep.subr.mxu0 0.0
    %7069 = vmatpush1.msra.mxu0 0.0
    %7070 = vmatprep.subr.mxu0 0.0
    %7071 = vmatpush1.msra.mxu0 0.0
    %7072 = vmatprep.subr.mxu0 0.0
    %7073 = vmatpush1.msra.mxu0 0.0
    %7074 = vmatprep.subr.mxu0 0.0
    %7075 = vmatpush1.msra.mxu0 0.0
    %7076 = vmatprep.subr.mxu0 0.0
    %7077 = vmatpush1.msra.mxu0 0.0
    %7078 = vmatprep.subr.mxu0 0.0
    %7079 = vmatpush1.msra.mxu0 0.0
    %7080 = vmatprep.subr.mxu0 0.0
    %7081 = vmatpush1.msra.mxu0 0.0
    %7082 = vmatprep.subr.mxu0 0.0
    %7083 = vmatpush1.msra.mxu0 0.0
    %7084 = vmatprep.subr.mxu0 0.0
    %7085 = vmatpush1.msra.mxu0 0.0
    %7086 = vmatprep.subr.mxu0 0.0
    %7087 = vmatpush1.msra.mxu0 0.0
    %7088 = vmatprep.subr.mxu0 0.0
    %7089 = vmatpush1.msra.mxu0 0.0
    %7090 = vmatprep.subr.mxu0 0.0
    %7091 = vmatpush1.msra.mxu0 0.0
    %7092 = vmatprep.subr.mxu0 0.0
    %7093 = vmatpush1.msra.mxu0 0.0
    %7094 = vmatprep.subr.mxu0 0.0
    %7095 = vmatpush1.msra.mxu0 0.0
    %7096 = vmatprep.subr.mxu0 0.0
    %7097 = vmatpush1.msra.mxu0 0.0
    %7098 = vmatprep.subr.mxu0 0.0
    %7099 = vmatpush1.msra.mxu0 0.0
    %7100 = vmatprep.mubr.f32.mxu0 0.0
    %7101 = vmatmul.mubr.f32.gmra.mrb[0].mxu0 %v7022
    %v7102 = vpop.f32.mrb[0].mxu0
    %v7103 = vadd.f32 0.0, %v7102
    %v7104 = vpop.f32.mrb[0].mxu0
    %7105 = vmatprep.mubr.f32.mxu0 0.0
    %7106 = vmatmul.mubr.f32.gmra.mrb[0].mxu0 %v7025
    %v7107 = vpop.f32.mrb[0].mxu0
    %v7108 = vadd.f32 0.0, %v7107
    %v7109 = vpop.f32.mrb[0].mxu0
    %7110 = vmatprep.mubr.f32.mxu0 0.0
    %7111 = vmatmul.mubr.f32.gmra.mrb[0].mxu0 %v7028
    %v7112 = vpop.f32.mrb[0].mxu0
    %v7113 = vadd.f32 0.0, %v7112
    %v7114 = vpop.f32.mrb[0].mxu0
    %7115 = vmatprep.mubr.f32.mxu0 0.0
    %7116 = vmatmul.mubr.f32.gmra.mrb[0].mxu0 %v7031
    %v7117 = vpop.f32.mrb[0].mxu0
    %v7118 = vadd.f32 0.0, %v7117
    %v7119 = vpop.f32.mrb[0].mxu0
    %7120 = vdwg.mxu0
    %v7121 = vmax.f32 %v7103, 0.0
    %v7122 = vmax.f32 %v7108, 0.0
    %v7123 = vmax.f32 %v7113, 0.0
    %v7124 = vmax.f32 %v7118, 0.0
    %v7125 = vld [vmem:[%s7] sm:$0x1f]
    %v7126 = vld [vmem:[%s8] sm:$0x1f]
    %7128 = vset.pattern.permute.xlu0 0
    %7129 = vperm.xlu0 %7128, %v7126
    %v7130 = vpop.permute.xlu0 %7129
    %vm7132 = vcmask 203776
    %v7134 = vsel %vm7132, %v7125, 0
    %v7137 = vsel %vm5473, %v7124, 0
    %7139 = vmatprep.subr.mxu0 0.0
    %7140 = vmatpush1.msra.mxu0 %v7121
    %7141 = vmatprep.subr.mxu0 0.0
    %7142 = vmatpush1.msra.mxu0 %v7122
    %7143 = vmatprep.subr.mxu0 0.0
    %7144 = vmatpush1.msra.mxu0 %v7123
    %7145 = vmatprep.subr.mxu0 0.0
    %7146 = vmatpush1.msra.mxu0 %v7137
    %7147 = vmatprep.subr.mxu0 0.0
    %7148 = vmatpush1.msra.mxu0 0.0
    %7149 = vmatprep.subr.mxu0 0.0
    %7150 = vmatpush1.msra.mxu0 0.0
    %7151 = vmatprep.subr.mxu0 0.0
    %7152 = vmatpush1.msra.mxu0 0.0
    %7153 = vmatprep.subr.mxu0 0.0
    %7154 = vmatpush1.msra.mxu0 0.0
    %7155 = vmatprep.subr.mxu0 0.0
    %7156 = vmatpush1.msra.mxu0 0.0
    %7157 = vmatprep.subr.mxu0 0.0
    %7158 = vmatpush1.msra.mxu0 0.0
    %7159 = vmatprep.subr.mxu0 0.0
    %7160 = vmatpush1.msra.mxu0 0.0
    %7161 = vmatprep.subr.mxu0 0.0
    %7162 = vmatpush1.msra.mxu0 0.0
    %7163 = vmatprep.subr.mxu0 0.0
    %7164 = vmatpush1.msra.mxu0 0.0
    %7165 = vmatprep.subr.mxu0 0.0
    %7166 = vmatpush1.msra.mxu0 0.0
    %7167 = vmatprep.subr.mxu0 0.0
    %7168 = vmatpush1.msra.mxu0 0.0
    %7169 = vmatprep.subr.mxu0 0.0
    %7170 = vmatpush1.msra.mxu0 0.0
    %7171 = vmatprep.subr.mxu0 0.0
    %7172 = vmatpush1.msra.mxu0 0.0
    %7173 = vmatprep.subr.mxu0 0.0
    %7174 = vmatpush1.msra.mxu0 0.0
    %7175 = vmatprep.subr.mxu0 0.0
    %7176 = vmatpush1.msra.mxu0 0.0
    %7177 = vmatprep.subr.mxu0 0.0
    %7178 = vmatpush1.msra.mxu0 0.0
    %7179 = vmatprep.subr.mxu0 0.0
    %7180 = vmatpush1.msra.mxu0 0.0
    %7181 = vmatprep.subr.mxu0 0.0
    %7182 = vmatpush1.msra.mxu0 0.0
    %7183 = vmatprep.subr.mxu0 0.0
    %7184 = vmatpush1.msra.mxu0 0.0
    %7185 = vmatprep.subr.mxu0 0.0
    %7186 = vmatpush1.msra.mxu0 0.0
    %7187 = vmatprep.subr.mxu0 0.0
    %7188 = vmatpush1.msra.mxu0 0.0
    %7189 = vmatprep.subr.mxu0 0.0
    %7190 = vmatpush1.msra.mxu0 0.0
    %7191 = vmatprep.subr.mxu0 0.0
    %7192 = vmatpush1.msra.mxu0 0.0
    %7193 = vmatprep.subr.mxu0 0.0
    %7194 = vmatpush1.msra.mxu0 0.0
    %7195 = vmatprep.subr.mxu0 0.0
    %7196 = vmatpush1.msra.mxu0 0.0
    %7197 = vmatprep.subr.mxu0 0.0
    %7198 = vmatpush1.msra.mxu0 0.0
    %7199 = vmatprep.subr.mxu0 0.0
    %7200 = vmatpush1.msra.mxu0 0.0
    %7201 = vmatprep.subr.mxu0 0.0
    %7202 = vmatpush1.msra.mxu0 0.0
    %7203 = vmatprep.mubr.f32.mxu0 0.0
    %7204 = vmatmul.mubr.f32.gmra.mrb[0].mxu0 %v7134
    %v7205 = vpop.f32.mrb[0].mxu0
    %v7206 = vadd.f32 %v7130, %v7205
    %v7207 = vpop.f32.mrb[0].mxu0
    %7208 = vdwg.mxu0
    %v7209 = vmax.f32 %v7206, 0.0
    %v7210 = vld [vmem:[%s9] sm:$0xff]
    %v7211 = vld [vmem:[%s9 + $0x8] sm:$0x3]
    %v7212 = vld [vmem:[%s10] sm:$0xff]
    %v7213 = vld [vmem:[%s10 + $0x8] sm:$0x3]
    %7215 = vset.pattern.permute.xlu0 0
    %7216 = vperm.xlu0 %7215, %v7212
    %v7217 = vpop.permute.xlu0 %7216
    %7220 = vset.pattern.permute.xlu0 0
    %7221 = vperm.xlu0 %7220, %v7213
    %v7222 = vpop.permute.xlu0 %7221
    %vm7224 = vcmask 39936
    %v7226 = vsel %vm7224, %v7210, 0
    %v7229 = vsel %vm7224, %v7211, 0
    %v7232 = vsel %vm6677, %v7209, 0
    %7234 = vmatprep.subr.mxu0 0.0
    %7235 = vmatpush1.msra.mxu0 %v7232
    %7236 = vmatprep.subr.mxu0 0.0
    %7237 = vmatpush1.msra.mxu0 0.0
    %7238 = vmatprep.subr.mxu0 0.0
    %7239 = vmatpush1.msra.mxu0 0.0
    %7240 = vmatprep.subr.mxu0 0.0
    %7241 = vmatpush1.msra.mxu0 0.0
    %7242 = vmatprep.subr.mxu0 0.0
    %7243 = vmatpush1.msra.mxu0 0.0
    %7244 = vmatprep.subr.mxu0 0.0
    %7245 = vmatpush1.msra.mxu0 0.0
    %7246 = vmatprep.subr.mxu0 0.0
    %7247 = vmatpush1.msra.mxu0 0.0
    %7248 = vmatprep.subr.mxu0 0.0
    %7249 = vmatpush1.msra.mxu0 0.0
    %7250 = vmatprep.subr.mxu0 0.0
    %7251 = vmatpush1.msra.mxu0 0.0
    %7252 = vmatprep.subr.mxu0 0.0
    %7253 = vmatpush1.msra.mxu0 0.0
    %7254 = vmatprep.subr.mxu0 0.0
    %7255 = vmatpush1.msra.mxu0 0.0
    %7256 = vmatprep.subr.mxu0 0.0
    %7257 = vmatpush1.msra.mxu0 0.0
    %7258 = vmatprep.subr.mxu0 0.0
    %7259 = vmatpush1.msra.mxu0 0.0
    %7260 = vmatprep.subr.mxu0 0.0
    %7261 = vmatpush1.msra.mxu0 0.0
    %7262 = vmatprep.subr.mxu0 0.0
    %7263 = vmatpush1.msra.mxu0 0.0
    %7264 = vmatprep.subr.mxu0 0.0
    %7265 = vmatpush1.msra.mxu0 0.0
    %7266 = vmatprep.subr.mxu0 0.0
    %7267 = vmatpush1.msra.mxu0 0.0
    %7268 = vmatprep.subr.mxu0 0.0
    %7269 = vmatpush1.msra.mxu0 0.0
    %7270 = vmatprep.subr.mxu0 0.0
    %7271 = vmatpush1.msra.mxu0 0.0
    %7272 = vmatprep.subr.mxu0 0.0
    %7273 = vmatpush1.msra.mxu0 0.0
    %7274 = vmatprep.subr.mxu0 0.0
    %7275 = vmatpush1.msra.mxu0 0.0
    %7276 = vmatprep.subr.mxu0 0.0
    %7277 = vmatpush1.msra.mxu0 0.0
    %7278 = vmatprep.subr.mxu0 0.0
    %7279 = vmatpush1.msra.mxu0 0.0
    %7280 = vmatprep.subr.mxu0 0.0
    %7281 = vmatpush1.msra.mxu0 0.0
    %7282 = vmatprep.subr.mxu0 0.0
    %7283 = vmatpush1.msra.mxu0 0.0
    %7284 = vmatprep.subr.mxu0 0.0
    %7285 = vmatpush1.msra.mxu0 0.0
    %7286 = vmatprep.subr.mxu0 0.0
    %7287 = vmatpush1.msra.mxu0 0.0
    %7288 = vmatprep.subr.mxu0 0.0
    %7289 = vmatpush1.msra.mxu0 0.0
    %7290 = vmatprep.subr.mxu0 0.0
    %7291 = vmatpush1.msra.mxu0 0.0
    %7292 = vmatprep.subr.mxu0 0.0
    %7293 = vmatpush1.msra.mxu0 0.0
    %7294 = vmatprep.subr.mxu0 0.0
    %7295 = vmatpush1.msra.mxu0 0.0
    %7296 = vmatprep.subr.mxu0 0.0
    %7297 = vmatpush1.msra.mxu0 0.0
    %7298 = vmatprep.mubr.f32.mxu0 0.0
    %7299 = vmatmul.mubr.f32.gmra.mrb[0].mxu0 %v7226
    %v7300 = vpop.f32.mrb[0].mxu0
    %v7301 = vadd.f32 %v7217, %v7300
    %v7302 = vpop.f32.mrb[0].mxu0
    %7303 = vmatprep.mubr.f32.mxu0 0.0
    %7304 = vmatmul.mubr.f32.gmra.mrb[0].mxu0 %v7229
    %v7305 = vpop.f32.mrb[0].mxu0
    %v7306 = vadd.f32 %v7222, %v7305
    %v7307 = vpop.f32.mrb[0].mxu0
    %7308 = vdwg.mxu0
    %v7309 = vsel %vm2645, %v7306, -inf
    %v7310 = vmax.f32 %v7301, %v7309
    %v7311 = vrot.slane %v7310, 4
    %v7312 = vmax.f32 %v7310, %v7311
    %v7313 = vrot.slane %v7312, 2
    %v7314 = vmax.f32 %v7312, %v7313
    %v7315 = vrot.slane %v7314, 1
    %v7316 = vmax.f32 %v7314, %v7315
    %v7317 = vsub.f32 %v7301, %v7316
    %v7318 = vsub.f32 %v7306, %v7316
    %v7319 = vmul.f32 %v7317, 1.442695
    %v7320 = vpow.pop %v7319
    %v7321 = vmul.f32 %v7318, 1.442695
    %v7322 = vpow.pop %v7321
    %v7323 = vsel %vm2645, %v7322, 0.0
    %v7324 = vadd.f32 %v7320, %v7323
    %v7325 = vrot.slane %v7324, 4
    %v7326 = vadd.f32 %v7324, %v7325
    %v7327 = vrot.slane %v7326, 2
    %v7328 = vadd.f32 %v7326, %v7327
    %v7329 = vrot.slane %v7328, 1
    %v7330 = vadd.f32 %v7328, %v7329
    %v7331 = vlog2.pop %v7330
    %v7332 = vmul.f32 %v7331, 0.6931472
    %v7333 = vadd.f32 %v7332, %v7316
    %v7334 = vsub.f32 %v7301, %v7333
    %v7335 = vsub.f32 %v7306, %v7333
    %7336 = vst [vmem:[%s11] sm:$0xff] %v7334
    %7337 = vst [vmem:[%s11 + $0x8] sm:$0x3] %v7335
    // Predicated region
    $region54: #{_net_forward_impl.1} parent=1 // pred_check
      _
    $region55: #{_net_forward_impl.1} parent=1 // pred_check_branch
      %7339 = sbr.rel (0) target = $region57
    $region56: #{_net_forward_impl.1} parent=1 // pred_region
      _
    $region57: #{_net_forward_impl.1} parent=1 // pred_fallthru
      _
    // Predicated region
    $region58: #{_net_forward_impl.1} parent=1 // pred_check
      _
    $region59: #{_net_forward_impl.1} parent=1 // pred_check_branch
      %7341 = sbr.rel (0) target = $region61
    $region60: #{_net_forward_impl.1} parent=1 // pred_region
      _
    $region61: #{_net_forward_impl.1} parent=1 // pred_fallthru
      _
    %7342 = vsyncpa [#allocation5], 1
    %7343 = vsyncpa [#allocation7], 1

</llo_original>
